<compile_context>
chip_gen: v7x
topology: tpu7x:2x2x1
jax: 0.10.0
libtpu: 0.0.40
codegen_flags: <defaults>
</compile_context>

<pallas_src>
import functools

import jax
import jax.numpy as jnp
from jax.experimental import pallas as pl
from jax.experimental.pallas import tpu as pltpu


# ----------------------------------------------------------------------------
# Fused whole-model kernel (one batch tile per grid step).
# ----------------------------------------------------------------------------
def _hmcnf_kernel(x_ref, *refs, num_levels, beta):
    L = num_levels
    if L > 1:
        (gwx_ref, gwg_ref, gb_ref, sw_ref, sb_ref,
         lw1_ref, lb1_ref, lw2_ref, lb2_ref, out_ref, h_sc) = refs
    else:
        (gwx_ref, gb_ref, sw_ref, sb_ref,
         lw1_ref, lb1_ref, lw2_ref, lb2_ref, out_ref, h_sc) = refs
        gwg_ref = None

    Rp = gwx_ref.shape[2]
    x = x_ref[...]                                     # (tm, F) bf16

    def sigmoid(y):
        # exp + approx reciprocal both run on the EUP (free bundle slot);
        # ~2^-12 rel error, acceptable for inference-mode probabilities.
        return pl.reciprocal(1.0 + jnp.exp(-y), approx=True)

    # TODO(synk): nn.Dropout is identity here (eval-mode forward).
    g_bf16 = None
    for i in range(L):
        # global level i: relu(cat([g_prev, x]) @ W + b), concat-free split-W.
        z = jnp.dot(x, gwx_ref[i], preferred_element_type=jnp.float32)
        if i > 0:
            z = z + jnp.dot(g_bf16, gwg_ref[i - 1],
                            preferred_element_type=jnp.float32)
        g = jnp.maximum(z + gb_ref[i], 0.0)            # f32 (tm, Rp)
        g_bf16 = g.astype(jnp.bfloat16)

        # local head i, layer 1; stash h_i into the shared lane-concat scratch.
        h = jnp.maximum(
            jnp.dot(g_bf16, lw1_ref[i], preferred_element_type=jnp.float32)
            + lb1_ref[i],
            0.0,
        )
        h_sc[:, i * Rp:(i + 1) * Rp] = h.astype(jnp.bfloat16)

    # Global sigmoid head on the last global activation.
    p_glob = sigmoid(
        jnp.dot(g_bf16, sw_ref[...], preferred_element_type=jnp.float32)
        + sb_ref[...])

    # All local heads' layer 2 fused into a single (tm, L*Rp)@(L*Rp, Cp) dot
    # against the block-stacked weight built at init (reproduces the column
    # concat of the per-level sigmoid inputs).
    p_loc = sigmoid(
        jnp.dot(h_sc[...], lw2_ref[...], preferred_element_type=jnp.float32)
        + lb2_ref[...])

    out_ref[...] = ((1.0 - beta) * p_glob + beta * p_loc).astype(out_ref.dtype)


# ----------------------------------------------------------------------------
# Tiling / spec helpers.
# ----------------------------------------------------------------------------
def _round_up(n, m):
    return -(-n // m) * m


def _batch_tiling(batch):
    """Return (padded_batch, tile_m, num_tiles); tile_m * num_tiles == padded_batch.

    For batch >= 16 we always produce >= 2 tiles so both v7x TensorCores get
    work; on single-core v5e/v6e the extra grid step is ~0.35us (negligible).
    """
    if batch < 16:
        return batch, batch, 1
    pb = _round_up(batch, 8)
    cap = min(512, pb // 2)
    cap -= cap % 8
    for tm in range(cap, 7, -8):
        if pb % tm == 0:
            return pb, tm, pb // tm
    return pb, 8, pb // 8


def _const_index_map(rank):
    zeros = (0,) * rank

    def index_map(i):
        return zeros

    return index_map


def _const_spec(shape, single_buffer):
    if single_buffer:
        return pl.BlockSpec(shape, _const_index_map(len(shape)),
                            pipeline_mode=pl.Buffered(1))
    return pl.BlockSpec(shape, _const_index_map(len(shape)))


# ----------------------------------------------------------------------------
# Wrapper.
# ----------------------------------------------------------------------------
def hmcnf_forward(x, params, hierarchy, beta):
    meta = params["meta"]
    L, F, Rp, C, Cp = meta["L"], meta["F"], meta["Rp"], meta["C"], meta["Cp"]
    assert L == len(hierarchy)
    B = x.shape[0]
    assert x.shape[1] == F

    pb, tm, nb = _batch_tiling(B)
    xb = x.astype(jnp.bfloat16)
    if pb != B:
        xb = jnp.pad(xb, ((0, pb - B), (0, 0)))

    weights = [params["gwx"]]
    if L > 1:
        weights.append(params["gwg"])
    weights += [params["gb"], params["sw"], params["sb"],
                params["lw1"], params["lb1"], params["lw2"], params["lb2"]]
    args = [xb] + weights

    # Explicit VMEM budget: weights (x2 headroom in case single-buffering is
    # unavailable) + double-buffered x/out tiles + scratch + activations,
    # capped at 56 MiB so it also fits v7x's 64 MiB/TC physical VMEM.
    weight_bytes = sum(int(a.size) * a.dtype.itemsize for a in weights)
    io_tile_bytes = 2 * (tm * F * 2 + tm * Cp * 4)
    act_bytes = tm * (L * Rp * 2 + 4 * Rp * 4 + 2 * Cp * 4)
    vmem_limit = int(min(max(2 * weight_bytes + io_tile_bytes + act_bytes
                             + (4 << 20), 16 << 20), 56 << 20))

    flops = 2 * pb * (L * F * Rp + (L - 1) * Rp * Rp + L * Rp * Rp
                      + L * Rp * Cp + Rp * Cp)
    cost = pl.CostEstimate(
        flops=flops,
        transcendentals=2 * pb * Cp,
        bytes_accessed=weight_bytes + pb * F * 2 + pb * Cp * 4,
    )

    kernel = functools.partial(_hmcnf_kernel, num_levels=L, beta=float(beta))
    out_shape = jax.ShapeDtypeStruct((pb, Cp), jnp.float32)
    cparams = pltpu.CompilerParams(
        dimension_semantics=("parallel",),
        vmem_limit_bytes=vmem_limit,
    )
    scratch = [pltpu.VMEM((tm, L * Rp), jnp.bfloat16)]

    out = None
    # Constant-index weight blocks only need one VMEM buffer; fall back to the
    # default double-buffered pipeline if this build rejects pl.Buffered(1).
    for single_buffer in (True, False):
        try:
            in_specs = [pl.BlockSpec((tm, F), lambda i: (i, 0))]
            for a in weights:
                in_specs.append(_const_spec(a.shape, single_buffer))
            call = pl.pallas_call(
                kernel,
                out_shape=out_shape,
                grid=(nb,),
                in_specs=in_specs,
                out_specs=pl.BlockSpec((tm, Cp), lambda i: (i, 0)),
                scratch_shapes=scratch,
                compiler_params=cparams,
                cost_estimate=cost,
            )
            out = jax.block_until_ready(call(*args))
            break
        except Exception:
            if not single_buffer:
                raise
    # Strip batch / lane padding.
    return out[:B, :C]


# ----------------------------------------------------------------------------
# Parameter construction (deterministic, mimics nn.Linear uniform init).
# Layout is kernel-friendly:
#   * per-level weights stacked along a leading axis,
#   * global level-i>0 weight pre-split into g-part (Rp,Rp) and x-part (F,Rp),
#   * hidden width padded to Rp = round_up(R,128), labels to Cp (zero padding
#     keeps the math exact; padded output columns are sliced off),
#   * local layer-2 weights block-stacked into a single (L*Rp, Cp) matrix,
#   * matmul weights stored in bf16, biases in f32.
# NOTE: the final (1-beta)*p_glob + beta*p_loc mix assumes the global head's
# label ordering equals the concatenation order of `hierarchy` (same implicit
# assumption as the PyTorch module) and label_size == sum(hierarchy).
# ----------------------------------------------------------------------------
def _uniform(key, shape, bound):
    return jax.random.uniform(key, shape, jnp.float32, -bound, bound)


def init_hmcnf_params(key, features_size, label_size, hierarchy, relu_size):
    L = len(hierarchy)
    assert label_size == sum(hierarchy), \
        "final mix needs label_size == sum(hierarchy)"
    F, R, C = features_size, relu_size, label_size
    Rp = _round_up(R, 128)
    Cp = _round_up(C, 128)

    keys = iter(jax.random.split(key, 8 * L + 4))

    gwx = jnp.zeros((L, F, Rp), jnp.float32)
    gwg = jnp.zeros((max(L - 1, 1), Rp, Rp), jnp.float32)
    gb = jnp.zeros((L, 1, Rp), jnp.float32)
    lw1 = jnp.zeros((L, Rp, Rp), jnp.float32)
    lb1 = jnp.zeros((L, 1, Rp), jnp.float32)
    lw2 = jnp.zeros((L * Rp, Cp), jnp.float32)
    lb2 = jnp.zeros((1, Cp), jnp.float32)

    # global models: Dense(relu_size, relu); input is x (i==0) or [g_prev, x].
    for i in range(L):
        fan_in = F if i == 0 else R + F
        bound = 1.0 / float(fan_in) ** 0.5
        if i > 0:
            gwg = gwg.at[i - 1, :R, :R].set(_uniform(next(keys), (R, R), bound))
        gwx = gwx.at[i, :, :R].set(_uniform(next(keys), (F, R), bound))
        gb = gb.at[i, 0, :R].set(_uniform(next(keys), (R,), bound))

    # global sigmoid head: Dense(label_size, sigmoid) on g_last.
    bound = 1.0 / float(R) ** 0.5
    sw = jnp.zeros((Rp, Cp), jnp.float32).at[:R, :C].set(
        _uniform(next(keys), (R, C), bound))
    sb = jnp.zeros((1, Cp), jnp.float32).at[0, :C].set(
        _uniform(next(keys), (C,), bound))

    # local heads: Dense(relu_size, relu) -> Dense(h_i, sigmoid), layer 2
    # block-stacked for the single fused output matmul.
    off = 0
    for i in range(L):
        b1 = 1.0 / float(R) ** 0.5
        lw1 = lw1.at[i, :R, :R].set(_uniform(next(keys), (R, R), b1))
        lb1 = lb1.at[i, 0, :R].set(_uniform(next(keys), (R,), b1))
        hi = hierarchy[i]
        lw2 = lw2.at[i * Rp:i * Rp + R, off:off + hi].set(
            _uniform(next(keys), (R, hi), b1))
        lb2 = lb2.at[0, off:off + hi].set(_uniform(next(keys), (hi,), b1))
        off += hi

    bf = jnp.bfloat16
    return {
        "gwx": gwx.astype(bf), "gwg": gwg.astype(bf), "gb": gb,
        "sw": sw.astype(bf), "sb": sb,
        "lw1": lw1.astype(bf), "lb1": lb1,
        "lw2": lw2.astype(bf), "lb2": lb2,
        "meta": dict(L=L, F=F, R=R, Rp=Rp, C=C, Cp=Cp),
    }


if __name__ == "__main__":
    # Small shapes consistent with the module's forward.
    batch = 8
    features_size = 32
    hierarchy = [4, 6, 8]
    label_size = sum(hierarchy)   # 18 — must equal sum(hierarchy) for the mix
    relu_size = 64
    beta = 0.5

    key = jax.random.PRNGKey(0)
    kx, kp = jax.random.split(key)
    x = jax.random.normal(kx, (batch, features_size), jnp.float32)
    params = init_hmcnf_params(kp, features_size, label_size, hierarchy,
                               relu_size)

    labels = hmcnf_forward(x, params, hierarchy, beta)
    labels = jax.block_until_ready(labels)

    assert labels.shape == (batch, label_size)
    assert bool(jnp.all(jnp.isfinite(labels)))
    print("KERNEL_OK")
</pallas_src>

<mosaic_0001>
module attributes {stable_mosaic.version = 11 : i64} {
  func.func @_hmcnf_kernel(%arg0: i32, %arg1: memref<8x32xbf16, #tpu.memory_space<vmem>>, %arg2: memref<3x32x128xbf16, #tpu.memory_space<vmem>>, %arg3: memref<2x128x128xbf16, #tpu.memory_space<vmem>>, %arg4: memref<3x1x128xf32, #tpu.memory_space<vmem>>, %arg5: memref<128x128xbf16, #tpu.memory_space<vmem>>, %arg6: memref<1x128xf32, #tpu.memory_space<vmem>>, %arg7: memref<3x128x128xbf16, #tpu.memory_space<vmem>>, %arg8: memref<3x1x128xf32, #tpu.memory_space<vmem>>, %arg9: memref<384x128xbf16, #tpu.memory_space<vmem>>, %arg10: memref<1x128xf32, #tpu.memory_space<vmem>>, %arg11: memref<8x128xf32, #tpu.memory_space<vmem>>, %arg12: memref<8x384xbf16, #tpu.memory_space<vmem>>) attributes {dimension_semantics = [#tpu.dimension_semantics<parallel>], iteration_bounds = array<i64: 1>, scalar_prefetch = 0 : i64, scratch_operands = 1 : i64, tpu.core_type = #tpu.core_type<tc>, window_params = [{transform_indices = @transform_0, window_bounds = array<i64: 8, 32>}, {pipeline_mode = #tpu.pipeline_mode<synchronous>, transform_indices = @transform_1, window_bounds = array<i64: 3, 32, 128>}, {pipeline_mode = #tpu.pipeline_mode<synchronous>, transform_indices = @transform_2, window_bounds = array<i64: 2, 128, 128>}, {pipeline_mode = #tpu.pipeline_mode<synchronous>, transform_indices = @transform_3, window_bounds = array<i64: 3, 1, 128>}, {pipeline_mode = #tpu.pipeline_mode<synchronous>, transform_indices = @transform_4, window_bounds = array<i64: 128, 128>}, {pipeline_mode = #tpu.pipeline_mode<synchronous>, transform_indices = @transform_5, window_bounds = array<i64: 1, 128>}, {pipeline_mode = #tpu.pipeline_mode<synchronous>, transform_indices = @transform_6, window_bounds = array<i64: 3, 128, 128>}, {pipeline_mode = #tpu.pipeline_mode<synchronous>, transform_indices = @transform_7, window_bounds = array<i64: 3, 1, 128>}, {pipeline_mode = #tpu.pipeline_mode<synchronous>, transform_indices = @transform_8, window_bounds = array<i64: 384, 128>}, {pipeline_mode = #tpu.pipeline_mode<synchronous>, transform_indices = @transform_9, window_bounds = array<i64: 1, 128>}, {transform_indices = @transform_10, window_bounds = array<i64: 8, 128>}]} {
    %c0 = arith.constant 0 : index
    %c0_0 = arith.constant 0 : index
    %0 = vector.load %arg1[%c0, %c0_0] : memref<8x32xbf16, #tpu.memory_space<vmem>>, vector<8x32xbf16>
    %c0_1 = arith.constant 0 : index
    %c0_2 = arith.constant 0 : index
    %c0_3 = arith.constant 0 : index
    %1 = vector.load %arg2[%c0_1, %c0_2, %c0_3] : memref<3x32x128xbf16, #tpu.memory_space<vmem>>, vector<1x32x128xbf16>
    %2 = vector.shape_cast %1 : vector<1x32x128xbf16> to vector<32x128xbf16>
    %cst = arith.constant dense<0.000000e+00> : vector<8x128xf32>
    %3 = tpu.matmul %0, %2, %cst {dimension_numbers = #tpu.dot_dimension_numbers<[1], [0], [0], [1], [0, 0, 1, 1], [], []>} : vector<8x32xbf16>, vector<32x128xbf16>, vector<8x128xf32> -> vector<8x128xf32>
    %c0_4 = arith.constant 0 : index
    %c0_5 = arith.constant 0 : index
    %c0_6 = arith.constant 0 : index
    %4 = vector.load %arg4[%c0_4, %c0_5, %c0_6] : memref<3x1x128xf32, #tpu.memory_space<vmem>>, vector<1x1x128xf32>
    %5 = vector.shape_cast %4 : vector<1x1x128xf32> to vector<1x128xf32>
    %6 = vector.broadcast %5 : vector<1x128xf32> to vector<8x128xf32>
    %7 = arith.addf %3, %6 : vector<8x128xf32>
    %cst_7 = arith.constant 0.000000e+00 : f32
    %8 = vector.broadcast %cst_7 : f32 to vector<8x128xf32>
    %9 = arith.maximumf %7, %8 : vector<8x128xf32>
    %10 = arith.truncf %9 : vector<8x128xf32> to vector<8x128xbf16>
    %c0_8 = arith.constant 0 : index
    %c0_9 = arith.constant 0 : index
    %c0_10 = arith.constant 0 : index
    %11 = vector.load %arg7[%c0_8, %c0_9, %c0_10] : memref<3x128x128xbf16, #tpu.memory_space<vmem>>, vector<1x128x128xbf16>
    %12 = vector.shape_cast %11 : vector<1x128x128xbf16> to vector<128x128xbf16>
    %cst_11 = arith.constant dense<0.000000e+00> : vector<8x128xf32>
    %13 = tpu.matmul %10, %12, %cst_11 {dimension_numbers = #tpu.dot_dimension_numbers<[1], [0], [0], [1], [0, 0, 1, 1], [], []>} : vector<8x128xbf16>, vector<128x128xbf16>, vector<8x128xf32> -> vector<8x128xf32>
    %c0_12 = arith.constant 0 : index
    %c0_13 = arith.constant 0 : index
    %c0_14 = arith.constant 0 : index
    %14 = vector.load %arg8[%c0_12, %c0_13, %c0_14] : memref<3x1x128xf32, #tpu.memory_space<vmem>>, vector<1x1x128xf32>
    %15 = vector.shape_cast %14 : vector<1x1x128xf32> to vector<1x128xf32>
    %16 = vector.broadcast %15 : vector<1x128xf32> to vector<8x128xf32>
    %17 = arith.addf %13, %16 : vector<8x128xf32>
    %cst_15 = arith.constant 0.000000e+00 : f32
    %18 = vector.broadcast %cst_15 : f32 to vector<8x128xf32>
    %19 = arith.maximumf %17, %18 : vector<8x128xf32>
    %20 = arith.truncf %19 : vector<8x128xf32> to vector<8x128xbf16>
    %c0_16 = arith.constant 0 : index
    %c0_17 = arith.constant 0 : index
    %21 = vector.load %arg12[%c0_16, %c0_17] : memref<8x384xbf16, #tpu.memory_space<vmem>>, vector<8x128xbf16>
    tpu.vector_store %arg12[%c0_16, %c0_17], %20 {strides = array<i32>} : memref<8x384xbf16, #tpu.memory_space<vmem>>, vector<8x128xbf16>,
    %c1 = arith.constant 1 : index
    %c0_18 = arith.constant 0 : index
    %c0_19 = arith.constant 0 : index
    %22 = vector.load %arg2[%c1, %c0_18, %c0_19] : memref<3x32x128xbf16, #tpu.memory_space<vmem>>, vector<1x32x128xbf16>
    %23 = vector.shape_cast %22 : vector<1x32x128xbf16> to vector<32x128xbf16>
    %cst_20 = arith.constant dense<0.000000e+00> : vector<8x128xf32>
    %24 = tpu.matmul %0, %23, %cst_20 {dimension_numbers = #tpu.dot_dimension_numbers<[1], [0], [0], [1], [0, 0, 1, 1], [], []>} : vector<8x32xbf16>, vector<32x128xbf16>, vector<8x128xf32> -> vector<8x128xf32>
    %c0_21 = arith.constant 0 : index
    %c0_22 = arith.constant 0 : index
    %c0_23 = arith.constant 0 : index
    %25 = vector.load %arg3[%c0_21, %c0_22, %c0_23] : memref<2x128x128xbf16, #tpu.memory_space<vmem>>, vector<1x128x128xbf16>
    %26 = vector.shape_cast %25 : vector<1x128x128xbf16> to vector<128x128xbf16>
    %cst_24 = arith.constant dense<0.000000e+00> : vector<8x128xf32>
    %27 = tpu.matmul %10, %26, %cst_24 {dimension_numbers = #tpu.dot_dimension_numbers<[1], [0], [0], [1], [0, 0, 1, 1], [], []>} : vector<8x128xbf16>, vector<128x128xbf16>, vector<8x128xf32> -> vector<8x128xf32>
    %28 = arith.addf %24, %27 : vector<8x128xf32>
    %c1_25 = arith.constant 1 : index
    %c0_26 = arith.constant 0 : index
    %c0_27 = arith.constant 0 : index
    %29 = vector.load %arg4[%c1_25, %c0_26, %c0_27] : memref<3x1x128xf32, #tpu.memory_space<vmem>>, vector<1x1x128xf32>
    %30 = vector.shape_cast %29 : vector<1x1x128xf32> to vector<1x128xf32>
    %31 = vector.broadcast %30 : vector<1x128xf32> to vector<8x128xf32>
    %32 = arith.addf %28, %31 : vector<8x128xf32>
    %cst_28 = arith.constant 0.000000e+00 : f32
    %33 = vector.broadcast %cst_28 : f32 to vector<8x128xf32>
    %34 = arith.maximumf %32, %33 : vector<8x128xf32>
    %35 = arith.truncf %34 : vector<8x128xf32> to vector<8x128xbf16>
    %c1_29 = arith.constant 1 : index
    %c0_30 = arith.constant 0 : index
    %c0_31 = arith.constant 0 : index
    %36 = vector.load %arg7[%c1_29, %c0_30, %c0_31] : memref<3x128x128xbf16, #tpu.memory_space<vmem>>, vector<1x128x128xbf16>
    %37 = vector.shape_cast %36 : vector<1x128x128xbf16> to vector<128x128xbf16>
    %cst_32 = arith.constant dense<0.000000e+00> : vector<8x128xf32>
    %38 = tpu.matmul %35, %37, %cst_32 {dimension_numbers = #tpu.dot_dimension_numbers<[1], [0], [0], [1], [0, 0, 1, 1], [], []>} : vector<8x128xbf16>, vector<128x128xbf16>, vector<8x128xf32> -> vector<8x128xf32>
    %c1_33 = arith.constant 1 : index
    %c0_34 = arith.constant 0 : index
    %c0_35 = arith.constant 0 : index
    %39 = vector.load %arg8[%c1_33, %c0_34, %c0_35] : memref<3x1x128xf32, #tpu.memory_space<vmem>>, vector<1x1x128xf32>
    %40 = vector.shape_cast %39 : vector<1x1x128xf32> to vector<1x128xf32>
    %41 = vector.broadcast %40 : vector<1x128xf32> to vector<8x128xf32>
    %42 = arith.addf %38, %41 : vector<8x128xf32>
    %cst_36 = arith.constant 0.000000e+00 : f32
    %43 = vector.broadcast %cst_36 : f32 to vector<8x128xf32>
    %44 = arith.maximumf %42, %43 : vector<8x128xf32>
    %45 = arith.truncf %44 : vector<8x128xf32> to vector<8x128xbf16>
    %c0_37 = arith.constant 0 : index
    %c128 = arith.constant 128 : index
    %46 = vector.load %arg12[%c0_37, %c128] : memref<8x384xbf16, #tpu.memory_space<vmem>>, vector<8x128xbf16>
    tpu.vector_store %arg12[%c0_37, %c128], %45 {strides = array<i32>} : memref<8x384xbf16, #tpu.memory_space<vmem>>, vector<8x128xbf16>,
    %c2 = arith.constant 2 : index
    %c0_38 = arith.constant 0 : index
    %c0_39 = arith.constant 0 : index
    %47 = vector.load %arg2[%c2, %c0_38, %c0_39] : memref<3x32x128xbf16, #tpu.memory_space<vmem>>, vector<1x32x128xbf16>
    %48 = vector.shape_cast %47 : vector<1x32x128xbf16> to vector<32x128xbf16>
    %cst_40 = arith.constant dense<0.000000e+00> : vector<8x128xf32>
    %49 = tpu.matmul %0, %48, %cst_40 {dimension_numbers = #tpu.dot_dimension_numbers<[1], [0], [0], [1], [0, 0, 1, 1], [], []>} : vector<8x32xbf16>, vector<32x128xbf16>, vector<8x128xf32> -> vector<8x128xf32>
    %c1_41 = arith.constant 1 : index
    %c0_42 = arith.constant 0 : index
    %c0_43 = arith.constant 0 : index
    %50 = vector.load %arg3[%c1_41, %c0_42, %c0_43] : memref<2x128x128xbf16, #tpu.memory_space<vmem>>, vector<1x128x128xbf16>
    %51 = vector.shape_cast %50 : vector<1x128x128xbf16> to vector<128x128xbf16>
    %cst_44 = arith.constant dense<0.000000e+00> : vector<8x128xf32>
    %52 = tpu.matmul %35, %51, %cst_44 {dimension_numbers = #tpu.dot_dimension_numbers<[1], [0], [0], [1], [0, 0, 1, 1], [], []>} : vector<8x128xbf16>, vector<128x128xbf16>, vector<8x128xf32> -> vector<8x128xf32>
    %53 = arith.addf %49, %52 : vector<8x128xf32>
    %c2_45 = arith.constant 2 : index
    %c0_46 = arith.constant 0 : index
    %c0_47 = arith.constant 0 : index
    %54 = vector.load %arg4[%c2_45, %c0_46, %c0_47] : memref<3x1x128xf32, #tpu.memory_space<vmem>>, vector<1x1x128xf32>
    %55 = vector.shape_cast %54 : vector<1x1x128xf32> to vector<1x128xf32>
    %56 = vector.broadcast %55 : vector<1x128xf32> to vector<8x128xf32>
    %57 = arith.addf %53, %56 : vector<8x128xf32>
    %cst_48 = arith.constant 0.000000e+00 : f32
    %58 = vector.broadcast %cst_48 : f32 to vector<8x128xf32>
    %59 = arith.maximumf %57, %58 : vector<8x128xf32>
    %60 = arith.truncf %59 : vector<8x128xf32> to vector<8x128xbf16>
    %c2_49 = arith.constant 2 : index
    %c0_50 = arith.constant 0 : index
    %c0_51 = arith.constant 0 : index
    %61 = vector.load %arg7[%c2_49, %c0_50, %c0_51] : memref<3x128x128xbf16, #tpu.memory_space<vmem>>, vector<1x128x128xbf16>
    %62 = vector.shape_cast %61 : vector<1x128x128xbf16> to vector<128x128xbf16>
    %cst_52 = arith.constant dense<0.000000e+00> : vector<8x128xf32>
    %63 = tpu.matmul %60, %62, %cst_52 {dimension_numbers = #tpu.dot_dimension_numbers<[1], [0], [0], [1], [0, 0, 1, 1], [], []>} : vector<8x128xbf16>, vector<128x128xbf16>, vector<8x128xf32> -> vector<8x128xf32>
    %c2_53 = arith.constant 2 : index
    %c0_54 = arith.constant 0 : index
    %c0_55 = arith.constant 0 : index
    %64 = vector.load %arg8[%c2_53, %c0_54, %c0_55] : memref<3x1x128xf32, #tpu.memory_space<vmem>>, vector<1x1x128xf32>
    %65 = vector.shape_cast %64 : vector<1x1x128xf32> to vector<1x128xf32>
    %66 = vector.broadcast %65 : vector<1x128xf32> to vector<8x128xf32>
    %67 = arith.addf %63, %66 : vector<8x128xf32>
    %cst_56 = arith.constant 0.000000e+00 : f32
    %68 = vector.broadcast %cst_56 : f32 to vector<8x128xf32>
    %69 = arith.maximumf %67, %68 : vector<8x128xf32>
    %70 = arith.truncf %69 : vector<8x128xf32> to vector<8x128xbf16>
    %c0_57 = arith.constant 0 : index
    %c256 = arith.constant 256 : index
    %71 = vector.load %arg12[%c0_57, %c256] : memref<8x384xbf16, #tpu.memory_space<vmem>>, vector<8x128xbf16>
    tpu.vector_store %arg12[%c0_57, %c256], %70 {strides = array<i32>} : memref<8x384xbf16, #tpu.memory_space<vmem>>, vector<8x128xbf16>,
    %c0_58 = arith.constant 0 : index
    %c0_59 = arith.constant 0 : index
    %72 = vector.load %arg5[%c0_58, %c0_59] : memref<128x128xbf16, #tpu.memory_space<vmem>>, vector<128x128xbf16>
    %cst_60 = arith.constant dense<0.000000e+00> : vector<8x128xf32>
    %73 = tpu.matmul %60, %72, %cst_60 {dimension_numbers = #tpu.dot_dimension_numbers<[1], [0], [0], [1], [0, 0, 1, 1], [], []>} : vector<8x128xbf16>, vector<128x128xbf16>, vector<8x128xf32> -> vector<8x128xf32>
    %c0_61 = arith.constant 0 : index
    %c0_62 = arith.constant 0 : index
    %74 = vector.load %arg6[%c0_61, %c0_62] : memref<1x128xf32, #tpu.memory_space<vmem>>, vector<1x128xf32>
    %75 = vector.broadcast %74 : vector<1x128xf32> to vector<8x128xf32>
    %76 = arith.addf %73, %75 : vector<8x128xf32>
    %cst_63 = arith.constant 0.000000e+00 : f32
    %77 = vector.broadcast %cst_63 : f32 to vector<8x128xf32>
    %78 = arith.subf %77, %76 : vector<8x128xf32>
    %79 = math.exp %78 : vector<8x128xf32>
    %cst_64 = arith.constant 1.000000e+00 : f32
    %80 = vector.broadcast %cst_64 : f32 to vector<8x128xf32>
    %81 = arith.addf %80, %79 : vector<8x128xf32>
    %82 = tpu.reciprocal %81 {approx = true} : vector<8x128xf32> -> vector<8x128xf32>
    %c0_65 = arith.constant 0 : index
    %c0_66 = arith.constant 0 : index
    %83 = vector.load %arg12[%c0_65, %c0_66] : memref<8x384xbf16, #tpu.memory_space<vmem>>, vector<8x384xbf16>
    %c0_67 = arith.constant 0 : index
    %c0_68 = arith.constant 0 : index
    %84 = vector.load %arg9[%c0_67, %c0_68] : memref<384x128xbf16, #tpu.memory_space<vmem>>, vector<384x128xbf16>
    %cst_69 = arith.constant dense<0.000000e+00> : vector<8x128xf32>
    %85 = tpu.matmul %83, %84, %cst_69 {dimension_numbers = #tpu.dot_dimension_numbers<[1], [0], [0], [1], [0, 0, 1, 1], [], []>} : vector<8x384xbf16>, vector<384x128xbf16>, vector<8x128xf32> -> vector<8x128xf32>
    %c0_70 = arith.constant 0 : index
    %c0_71 = arith.constant 0 : index
    %86 = vector.load %arg10[%c0_70, %c0_71] : memref<1x128xf32, #tpu.memory_space<vmem>>, vector<1x128xf32>
    %87 = vector.broadcast %86 : vector<1x128xf32> to vector<8x128xf32>
    %88 = arith.addf %85, %87 : vector<8x128xf32>
    %cst_72 = arith.constant 0.000000e+00 : f32
    %89 = vector.broadcast %cst_72 : f32 to vector<8x128xf32>
    %90 = arith.subf %89, %88 : vector<8x128xf32>
    %91 = math.exp %90 : vector<8x128xf32>
    %cst_73 = arith.constant 1.000000e+00 : f32
    %92 = vector.broadcast %cst_73 : f32 to vector<8x128xf32>
    %93 = arith.addf %92, %91 : vector<8x128xf32>
    %94 = tpu.reciprocal %93 {approx = true} : vector<8x128xf32> -> vector<8x128xf32>
    %cst_74 = arith.constant 5.000000e-01 : f32
    %95 = vector.broadcast %cst_74 : f32 to vector<8x128xf32>
    %96 = arith.mulf %95, %82 : vector<8x128xf32>
    %cst_75 = arith.constant 5.000000e-01 : f32
    %97 = vector.broadcast %cst_75 : f32 to vector<8x128xf32>
    %98 = arith.mulf %97, %94 : vector<8x128xf32>
    %99 = arith.addf %96, %98 : vector<8x128xf32>
    %c0_76 = arith.constant 0 : index
    %c0_77 = arith.constant 0 : index
    %100 = vector.load %arg11[%c0_76, %c0_77] : memref<8x128xf32, #tpu.memory_space<vmem>>, vector<8x128xf32>
    tpu.vector_store %arg11[%c0_76, %c0_77], %99 {strides = array<i32>} : memref<8x128xf32, #tpu.memory_space<vmem>>, vector<8x128xf32>,
    return
  }
  func.func @transform_0(%arg0: i32) -> (i32, i32) {
    %c0_i32 = arith.constant 0 : i32
    %c0_i32_0 = arith.constant 0 : i32
    return %arg0, %c0_i32 : i32, i32
  }
  func.func @transform_1(%arg0: i32) -> (i32, i32, i32) {
    %c0_i32 = arith.constant 0 : i32
    %c0_i32_0 = arith.constant 0 : i32
    %c0_i32_1 = arith.constant 0 : i32
    %c0_i32_2 = arith.constant 0 : i32
    return %c0_i32, %c0_i32_0, %c0_i32_1 : i32, i32, i32
  }
  func.func @transform_2(%arg0: i32) -> (i32, i32, i32) {
    %c0_i32 = arith.constant 0 : i32
    %c0_i32_0 = arith.constant 0 : i32
    %c0_i32_1 = arith.constant 0 : i32
    %c0_i32_2 = arith.constant 0 : i32
    return %c0_i32, %c0_i32_0, %c0_i32_1 : i32, i32, i32
  }
  func.func @transform_3(%arg0: i32) -> (i32, i32, i32) {
    %c0_i32 = arith.constant 0 : i32
    %c0_i32_0 = arith.constant 0 : i32
    %c0_i32_1 = arith.constant 0 : i32
    %c0_i32_2 = arith.constant 0 : i32
    return %c0_i32, %c0_i32_0, %c0_i32_1 : i32, i32, i32
  }
  func.func @transform_4(%arg0: i32) -> (i32, i32) {
    %c0_i32 = arith.constant 0 : i32
    %c0_i32_0 = arith.constant 0 : i32
    %c0_i32_1 = arith.constant 0 : i32
    return %c0_i32, %c0_i32_0 : i32, i32
  }
  func.func @transform_5(%arg0: i32) -> (i32, i32) {
    %c0_i32 = arith.constant 0 : i32
    %c0_i32_0 = arith.constant 0 : i32
    %c0_i32_1 = arith.constant 0 : i32
    return %c0_i32, %c0_i32_0 : i32, i32
  }
  func.func @transform_6(%arg0: i32) -> (i32, i32, i32) {
    %c0_i32 = arith.constant 0 : i32
    %c0_i32_0 = arith.constant 0 : i32
    %c0_i32_1 = arith.constant 0 : i32
    %c0_i32_2 = arith.constant 0 : i32
    return %c0_i32, %c0_i32_0, %c0_i32_1 : i32, i32, i32
  }
  func.func @transform_7(%arg0: i32) -> (i32, i32, i32) {
    %c0_i32 = arith.constant 0 : i32
    %c0_i32_0 = arith.constant 0 : i32
    %c0_i32_1 = arith.constant 0 : i32
    %c0_i32_2 = arith.constant 0 : i32
    return %c0_i32, %c0_i32_0, %c0_i32_1 : i32, i32, i32
  }
  func.func @transform_8(%arg0: i32) -> (i32, i32) {
    %c0_i32 = arith.constant 0 : i32
    %c0_i32_0 = arith.constant 0 : i32
    %c0_i32_1 = arith.constant 0 : i32
    return %c0_i32, %c0_i32_0 : i32, i32
  }
  func.func @transform_9(%arg0: i32) -> (i32, i32) {
    %c0_i32 = arith.constant 0 : i32
    %c0_i32_0 = arith.constant 0 : i32
    %c0_i32_1 = arith.constant 0 : i32
    return %c0_i32, %c0_i32_0 : i32, i32
  }
  func.func @transform_10(%arg0: i32) -> (i32, i32) {
    %c0_i32 = arith.constant 0 : i32
    %c0_i32_0 = arith.constant 0 : i32
    return %arg0, %c0_i32 : i32, i32
  }
}

module attributes {stable_mosaic.version = 11 : i64} {
  func.func @_hmcnf_kernel(%arg0: i32, %arg1: memref<8x32xbf16, #tpu.memory_space<vmem>>, %arg2: memref<3x32x128xbf16, #tpu.memory_space<vmem>>, %arg3: memref<2x128x128xbf16, #tpu.memory_space<vmem>>, %arg4: memref<3x1x128xf32, #tpu.memory_space<vmem>>, %arg5: memref<128x128xbf16, #tpu.memory_space<vmem>>, %arg6: memref<1x128xf32, #tpu.memory_space<vmem>>, %arg7: memref<3x128x128xbf16, #tpu.memory_space<vmem>>, %arg8: memref<3x1x128xf32, #tpu.memory_space<vmem>>, %arg9: memref<384x128xbf16, #tpu.memory_space<vmem>>, %arg10: memref<1x128xf32, #tpu.memory_space<vmem>>, %arg11: memref<8x128xf32, #tpu.memory_space<vmem>>, %arg12: memref<8x384xbf16, #tpu.memory_space<vmem>>) attributes {dimension_semantics = [#tpu.dimension_semantics<parallel>], iteration_bounds = array<i64: 1>, scalar_prefetch = 0 : i64, scratch_operands = 1 : i64, tpu.core_type = #tpu.core_type<tc>, window_params = [{transform_indices = @transform_0, window_bounds = array<i64: 8, 32>}, {pipeline_mode = #tpu.pipeline_mode<synchronous>, transform_indices = @transform_1, window_bounds = array<i64: 3, 32, 128>}, {pipeline_mode = #tpu.pipeline_mode<synchronous>, transform_indices = @transform_2, window_bounds = array<i64: 2, 128, 128>}, {pipeline_mode = #tpu.pipeline_mode<synchronous>, transform_indices = @transform_3, window_bounds = array<i64: 3, 1, 128>}, {pipeline_mode = #tpu.pipeline_mode<synchronous>, transform_indices = @transform_4, window_bounds = array<i64: 128, 128>}, {pipeline_mode = #tpu.pipeline_mode<synchronous>, transform_indices = @transform_5, window_bounds = array<i64: 1, 128>}, {pipeline_mode = #tpu.pipeline_mode<synchronous>, transform_indices = @transform_6, window_bounds = array<i64: 3, 128, 128>}, {pipeline_mode = #tpu.pipeline_mode<synchronous>, transform_indices = @transform_7, window_bounds = array<i64: 3, 1, 128>}, {pipeline_mode = #tpu.pipeline_mode<synchronous>, transform_indices = @transform_8, window_bounds = array<i64: 384, 128>}, {pipeline_mode = #tpu.pipeline_mode<synchronous>, transform_indices = @transform_9, window_bounds = array<i64: 1, 128>}, {transform_indices = @transform_10, window_bounds = array<i64: 8, 128>}]} {
    %c0 = arith.constant 0 : index
    %c0_0 = arith.constant 0 : index
    %0 = vector.load %arg1[%c0, %c0_0] : memref<8x32xbf16, #tpu.memory_space<vmem>>, vector<8x32xbf16>
    %c0_1 = arith.constant 0 : index
    %c0_2 = arith.constant 0 : index
    %c0_3 = arith.constant 0 : index
    %1 = vector.load %arg2[%c0_1, %c0_2, %c0_3] : memref<3x32x128xbf16, #tpu.memory_space<vmem>>, vector<1x32x128xbf16>
    %2 = vector.shape_cast %1 : vector<1x32x128xbf16> to vector<32x128xbf16>
    %cst = arith.constant dense<0.000000e+00> : vector<8x128xf32>
    %3 = tpu.matmul %0, %2, %cst {dimension_numbers = #tpu.dot_dimension_numbers<[1], [0], [0], [1], [0, 0, 1, 1], [], []>} : vector<8x32xbf16>, vector<32x128xbf16>, vector<8x128xf32> -> vector<8x128xf32>
    %c0_4 = arith.constant 0 : index
    %c0_5 = arith.constant 0 : index
    %c0_6 = arith.constant 0 : index
    %4 = vector.load %arg4[%c0_4, %c0_5, %c0_6] : memref<3x1x128xf32, #tpu.memory_space<vmem>>, vector<1x1x128xf32>
    %5 = vector.shape_cast %4 : vector<1x1x128xf32> to vector<1x128xf32>
    %6 = vector.broadcast %5 : vector<1x128xf32> to vector<8x128xf32>
    %7 = arith.addf %3, %6 : vector<8x128xf32>
    %cst_7 = arith.constant 0.000000e+00 : f32
    %8 = vector.broadcast %cst_7 : f32 to vector<8x128xf32>
    %9 = arith.maximumf %7, %8 : vector<8x128xf32>
    %10 = arith.truncf %9 : vector<8x128xf32> to vector<8x128xbf16>
    %c0_8 = arith.constant 0 : index
    %c0_9 = arith.constant 0 : index
    %c0_10 = arith.constant 0 : index
    %11 = vector.load %arg7[%c0_8, %c0_9, %c0_10] : memref<3x128x128xbf16, #tpu.memory_space<vmem>>, vector<1x128x128xbf16>
    %12 = vector.shape_cast %11 : vector<1x128x128xbf16> to vector<128x128xbf16>
    %cst_11 = arith.constant dense<0.000000e+00> : vector<8x128xf32>
    %13 = tpu.matmul %10, %12, %cst_11 {dimension_numbers = #tpu.dot_dimension_numbers<[1], [0], [0], [1], [0, 0, 1, 1], [], []>} : vector<8x128xbf16>, vector<128x128xbf16>, vector<8x128xf32> -> vector<8x128xf32>
    %c0_12 = arith.constant 0 : index
    %c0_13 = arith.constant 0 : index
    %c0_14 = arith.constant 0 : index
    %14 = vector.load %arg8[%c0_12, %c0_13, %c0_14] : memref<3x1x128xf32, #tpu.memory_space<vmem>>, vector<1x1x128xf32>
    %15 = vector.shape_cast %14 : vector<1x1x128xf32> to vector<1x128xf32>
    %16 = vector.broadcast %15 : vector<1x128xf32> to vector<8x128xf32>
    %17 = arith.addf %13, %16 : vector<8x128xf32>
    %cst_15 = arith.constant 0.000000e+00 : f32
    %18 = vector.broadcast %cst_15 : f32 to vector<8x128xf32>
    %19 = arith.maximumf %17, %18 : vector<8x128xf32>
    %20 = arith.truncf %19 : vector<8x128xf32> to vector<8x128xbf16>
    %c0_16 = arith.constant 0 : index
    %c0_17 = arith.constant 0 : index
    %21 = vector.load %arg12[%c0_16, %c0_17] : memref<8x384xbf16, #tpu.memory_space<vmem>>, vector<8x128xbf16>
    tpu.vector_store %arg12[%c0_16, %c0_17], %20 {strides = array<i32>} : memref<8x384xbf16, #tpu.memory_space<vmem>>, vector<8x128xbf16>,
    %c1 = arith.constant 1 : index
    %c0_18 = arith.constant 0 : index
    %c0_19 = arith.constant 0 : index
    %22 = vector.load %arg2[%c1, %c0_18, %c0_19] : memref<3x32x128xbf16, #tpu.memory_space<vmem>>, vector<1x32x128xbf16>
    %23 = vector.shape_cast %22 : vector<1x32x128xbf16> to vector<32x128xbf16>
    %cst_20 = arith.constant dense<0.000000e+00> : vector<8x128xf32>
    %24 = tpu.matmul %0, %23, %cst_20 {dimension_numbers = #tpu.dot_dimension_numbers<[1], [0], [0], [1], [0, 0, 1, 1], [], []>} : vector<8x32xbf16>, vector<32x128xbf16>, vector<8x128xf32> -> vector<8x128xf32>
    %c0_21 = arith.constant 0 : index
    %c0_22 = arith.constant 0 : index
    %c0_23 = arith.constant 0 : index
    %25 = vector.load %arg3[%c0_21, %c0_22, %c0_23] : memref<2x128x128xbf16, #tpu.memory_space<vmem>>, vector<1x128x128xbf16>
    %26 = vector.shape_cast %25 : vector<1x128x128xbf16> to vector<128x128xbf16>
    %cst_24 = arith.constant dense<0.000000e+00> : vector<8x128xf32>
    %27 = tpu.matmul %10, %26, %cst_24 {dimension_numbers = #tpu.dot_dimension_numbers<[1], [0], [0], [1], [0, 0, 1, 1], [], []>} : vector<8x128xbf16>, vector<128x128xbf16>, vector<8x128xf32> -> vector<8x128xf32>
    %28 = arith.addf %24, %27 : vector<8x128xf32>
    %c1_25 = arith.constant 1 : index
    %c0_26 = arith.constant 0 : index
    %c0_27 = arith.constant 0 : index
    %29 = vector.load %arg4[%c1_25, %c0_26, %c0_27] : memref<3x1x128xf32, #tpu.memory_space<vmem>>, vector<1x1x128xf32>
    %30 = vector.shape_cast %29 : vector<1x1x128xf32> to vector<1x128xf32>
    %31 = vector.broadcast %30 : vector<1x128xf32> to vector<8x128xf32>
    %32 = arith.addf %28, %31 : vector<8x128xf32>
    %cst_28 = arith.constant 0.000000e+00 : f32
    %33 = vector.broadcast %cst_28 : f32 to vector<8x128xf32>
    %34 = arith.maximumf %32, %33 : vector<8x128xf32>
    %35 = arith.truncf %34 : vector<8x128xf32> to vector<8x128xbf16>
    %c1_29 = arith.constant 1 : index
    %c0_30 = arith.constant 0 : index
    %c0_31 = arith.constant 0 : index
    %36 = vector.load %arg7[%c1_29, %c0_30, %c0_31] : memref<3x128x128xbf16, #tpu.memory_space<vmem>>, vector<1x128x128xbf16>
    %37 = vector.shape_cast %36 : vector<1x128x128xbf16> to vector<128x128xbf16>
    %cst_32 = arith.constant dense<0.000000e+00> : vector<8x128xf32>
    %38 = tpu.matmul %35, %37, %cst_32 {dimension_numbers = #tpu.dot_dimension_numbers<[1], [0], [0], [1], [0, 0, 1, 1], [], []>} : vector<8x128xbf16>, vector<128x128xbf16>, vector<8x128xf32> -> vector<8x128xf32>
    %c1_33 = arith.constant 1 : index
    %c0_34 = arith.constant 0 : index
    %c0_35 = arith.constant 0 : index
    %39 = vector.load %arg8[%c1_33, %c0_34, %c0_35] : memref<3x1x128xf32, #tpu.memory_space<vmem>>, vector<1x1x128xf32>
    %40 = vector.shape_cast %39 : vector<1x1x128xf32> to vector<1x128xf32>
    %41 = vector.broadcast %40 : vector<1x128xf32> to vector<8x128xf32>
    %42 = arith.addf %38, %41 : vector<8x128xf32>
    %cst_36 = arith.constant 0.000000e+00 : f32
    %43 = vector.broadcast %cst_36 : f32 to vector<8x128xf32>
    %44 = arith.maximumf %42, %43 : vector<8x128xf32>
    %45 = arith.truncf %44 : vector<8x128xf32> to vector<8x128xbf16>
    %c0_37 = arith.constant 0 : index
    %c128 = arith.constant 128 : index
    %46 = vector.load %arg12[%c0_37, %c128] : memref<8x384xbf16, #tpu.memory_space<vmem>>, vector<8x128xbf16>
    tpu.vector_store %arg12[%c0_37, %c128], %45 {strides = array<i32>} : memref<8x384xbf16, #tpu.memory_space<vmem>>, vector<8x128xbf16>,
    %c2 = arith.constant 2 : index
    %c0_38 = arith.constant 0 : index
    %c0_39 = arith.constant 0 : index
    %47 = vector.load %arg2[%c2, %c0_38, %c0_39] : memref<3x32x128xbf16, #tpu.memory_space<vmem>>, vector<1x32x128xbf16>
    %48 = vector.shape_cast %47 : vector<1x32x128xbf16> to vector<32x128xbf16>
    %cst_40 = arith.constant dense<0.000000e+00> : vector<8x128xf32>
    %49 = tpu.matmul %0, %48, %cst_40 {dimension_numbers = #tpu.dot_dimension_numbers<[1], [0], [0], [1], [0, 0, 1, 1], [], []>} : vector<8x32xbf16>, vector<32x128xbf16>, vector<8x128xf32> -> vector<8x128xf32>
    %c1_41 = arith.constant 1 : index
    %c0_42 = arith.constant 0 : index
    %c0_43 = arith.constant 0 : index
    %50 = vector.load %arg3[%c1_41, %c0_42, %c0_43] : memref<2x128x128xbf16, #tpu.memory_space<vmem>>, vector<1x128x128xbf16>
    %51 = vector.shape_cast %50 : vector<1x128x128xbf16> to vector<128x128xbf16>
    %cst_44 = arith.constant dense<0.000000e+00> : vector<8x128xf32>
    %52 = tpu.matmul %35, %51, %cst_44 {dimension_numbers = #tpu.dot_dimension_numbers<[1], [0], [0], [1], [0, 0, 1, 1], [], []>} : vector<8x128xbf16>, vector<128x128xbf16>, vector<8x128xf32> -> vector<8x128xf32>
    %53 = arith.addf %49, %52 : vector<8x128xf32>
    %c2_45 = arith.constant 2 : index
    %c0_46 = arith.constant 0 : index
    %c0_47 = arith.constant 0 : index
    %54 = vector.load %arg4[%c2_45, %c0_46, %c0_47] : memref<3x1x128xf32, #tpu.memory_space<vmem>>, vector<1x1x128xf32>
    %55 = vector.shape_cast %54 : vector<1x1x128xf32> to vector<1x128xf32>
    %56 = vector.broadcast %55 : vector<1x128xf32> to vector<8x128xf32>
    %57 = arith.addf %53, %56 : vector<8x128xf32>
    %cst_48 = arith.constant 0.000000e+00 : f32
    %58 = vector.broadcast %cst_48 : f32 to vector<8x128xf32>
    %59 = arith.maximumf %57, %58 : vector<8x128xf32>
    %60 = arith.truncf %59 : vector<8x128xf32> to vector<8x128xbf16>
    %c2_49 = arith.constant 2 : index
    %c0_50 = arith.constant 0 : index
    %c0_51 = arith.constant 0 : index
    %61 = vector.load %arg7[%c2_49, %c0_50, %c0_51] : memref<3x128x128xbf16, #tpu.memory_space<vmem>>, vector<1x128x128xbf16>
    %62 = vector.shape_cast %61 : vector<1x128x128xbf16> to vector<128x128xbf16>
    %cst_52 = arith.constant dense<0.000000e+00> : vector<8x128xf32>
    %63 = tpu.matmul %60, %62, %cst_52 {dimension_numbers = #tpu.dot_dimension_numbers<[1], [0], [0], [1], [0, 0, 1, 1], [], []>} : vector<8x128xbf16>, vector<128x128xbf16>, vector<8x128xf32> -> vector<8x128xf32>
    %c2_53 = arith.constant 2 : index
    %c0_54 = arith.constant 0 : index
    %c0_55 = arith.constant 0 : index
    %64 = vector.load %arg8[%c2_53, %c0_54, %c0_55] : memref<3x1x128xf32, #tpu.memory_space<vmem>>, vector<1x1x128xf32>
    %65 = vector.shape_cast %64 : vector<1x1x128xf32> to vector<1x128xf32>
    %66 = vector.broadcast %65 : vector<1x128xf32> to vector<8x128xf32>
    %67 = arith.addf %63, %66 : vector<8x128xf32>
    %cst_56 = arith.constant 0.000000e+00 : f32
    %68 = vector.broadcast %cst_56 : f32 to vector<8x128xf32>
    %69 = arith.maximumf %67, %68 : vector<8x128xf32>
    %70 = arith.truncf %69 : vector<8x128xf32> to vector<8x128xbf16>
    %c0_57 = arith.constant 0 : index
    %c256 = arith.constant 256 : index
    %71 = vector.load %arg12[%c0_57, %c256] : memref<8x384xbf16, #tpu.memory_space<vmem>>, vector<8x128xbf16>
    tpu.vector_store %arg12[%c0_57, %c256], %70 {strides = array<i32>} : memref<8x384xbf16, #tpu.memory_space<vmem>>, vector<8x128xbf16>,
    %c0_58 = arith.constant 0 : index
    %c0_59 = arith.constant 0 : index
    %72 = vector.load %arg5[%c0_58, %c0_59] : memref<128x128xbf16, #tpu.memory_space<vmem>>, vector<128x128xbf16>
    %cst_60 = arith.constant dense<0.000000e+00> : vector<8x128xf32>
    %73 = tpu.matmul %60, %72, %cst_60 {dimension_numbers = #tpu.dot_dimension_numbers<[1], [0], [0], [1], [0, 0, 1, 1], [], []>} : vector<8x128xbf16>, vector<128x128xbf16>, vector<8x128xf32> -> vector<8x128xf32>
    %c0_61 = arith.constant 0 : index
    %c0_62 = arith.constant 0 : index
    %74 = vector.load %arg6[%c0_61, %c0_62] : memref<1x128xf32, #tpu.memory_space<vmem>>, vector<1x128xf32>
    %75 = vector.broadcast %74 : vector<1x128xf32> to vector<8x128xf32>
    %76 = arith.addf %73, %75 : vector<8x128xf32>
    %cst_63 = arith.constant 0.000000e+00 : f32
    %77 = vector.broadcast %cst_63 : f32 to vector<8x128xf32>
    %78 = arith.subf %77, %76 : vector<8x128xf32>
    %79 = math.exp %78 : vector<8x128xf32>
    %cst_64 = arith.constant 1.000000e+00 : f32
    %80 = vector.broadcast %cst_64 : f32 to vector<8x128xf32>
    %81 = arith.addf %80, %79 : vector<8x128xf32>
    %82 = tpu.reciprocal %81 {approx = true} : vector<8x128xf32> -> vector<8x128xf32>
    %c0_65 = arith.constant 0 : index
    %c0_66 = arith.constant 0 : index
    %83 = vector.load %arg12[%c0_65, %c0_66] : memref<8x384xbf16, #tpu.memory_space<vmem>>, vector<8x384xbf16>
    %c0_67 = arith.constant 0 : index
    %c0_68 = arith.constant 0 : index
    %84 = vector.load %arg9[%c0_67, %c0_68] : memref<384x128xbf16, #tpu.memory_space<vmem>>, vector<384x128xbf16>
    %cst_69 = arith.constant dense<0.000000e+00> : vector<8x128xf32>
    %85 = tpu.matmul %83, %84, %cst_69 {dimension_numbers = #tpu.dot_dimension_numbers<[1], [0], [0], [1], [0, 0, 1, 1], [], []>} : vector<8x384xbf16>, vector<384x128xbf16>, vector<8x128xf32> -> vector<8x128xf32>
    %c0_70 = arith.constant 0 : index
    %c0_71 = arith.constant 0 : index
    %86 = vector.load %arg10[%c0_70, %c0_71] : memref<1x128xf32, #tpu.memory_space<vmem>>, vector<1x128xf32>
    %87 = vector.broadcast %86 : vector<1x128xf32> to vector<8x128xf32>
    %88 = arith.addf %85, %87 : vector<8x128xf32>
    %cst_72 = arith.constant 0.000000e+00 : f32
    %89 = vector.broadcast %cst_72 : f32 to vector<8x128xf32>
    %90 = arith.subf %89, %88 : vector<8x128xf32>
    %91 = math.exp %90 : vector<8x128xf32>
    %cst_73 = arith.constant 1.000000e+00 : f32
    %92 = vector.broadcast %cst_73 : f32 to vector<8x128xf32>
    %93 = arith.addf %92, %91 : vector<8x128xf32>
    %94 = tpu.reciprocal %93 {approx = true} : vector<8x128xf32> -> vector<8x128xf32>
    %cst_74 = arith.constant 5.000000e-01 : f32
    %95 = vector.broadcast %cst_74 : f32 to vector<8x128xf32>
    %96 = arith.mulf %95, %82 : vector<8x128xf32>
    %cst_75 = arith.constant 5.000000e-01 : f32
    %97 = vector.broadcast %cst_75 : f32 to vector<8x128xf32>
    %98 = arith.mulf %97, %94 : vector<8x128xf32>
    %99 = arith.addf %96, %98 : vector<8x128xf32>
    %c0_76 = arith.constant 0 : index
    %c0_77 = arith.constant 0 : index
    %100 = vector.load %arg11[%c0_76, %c0_77] : memref<8x128xf32, #tpu.memory_space<vmem>>, vector<8x128xf32>
    tpu.vector_store %arg11[%c0_76, %c0_77], %99 {strides = array<i32>} : memref<8x128xf32, #tpu.memory_space<vmem>>, vector<8x128xf32>,
    return
  }
  func.func @transform_0(%arg0: i32) -> (i32, i32) {
    %c0_i32 = arith.constant 0 : i32
    %c0_i32_0 = arith.constant 0 : i32
    return %arg0, %c0_i32 : i32, i32
  }
  func.func @transform_1(%arg0: i32) -> (i32, i32, i32) {
    %c0_i32 = arith.constant 0 : i32
    %c0_i32_0 = arith.constant 0 : i32
    %c0_i32_1 = arith.constant 0 : i32
    %c0_i32_2 = arith.constant 0 : i32
    return %c0_i32, %c0_i32_0, %c0_i32_1 : i32, i32, i32
  }
  func.func @transform_2(%arg0: i32) -> (i32, i32, i32) {
    %c0_i32 = arith.constant 0 : i32
    %c0_i32_0 = arith.constant 0 : i32
    %c0_i32_1 = arith.constant 0 : i32
    %c0_i32_2 = arith.constant 0 : i32
    return %c0_i32, %c0_i32_0, %c0_i32_1 : i32, i32, i32
  }
  func.func @transform_3(%arg0: i32) -> (i32, i32, i32) {
    %c0_i32 = arith.constant 0 : i32
    %c0_i32_0 = arith.constant 0 : i32
    %c0_i32_1 = arith.constant 0 : i32
    %c0_i32_2 = arith.constant 0 : i32
    return %c0_i32, %c0_i32_0, %c0_i32_1 : i32, i32, i32
  }
  func.func @transform_4(%arg0: i32) -> (i32, i32) {
    %c0_i32 = arith.constant 0 : i32
    %c0_i32_0 = arith.constant 0 : i32
    %c0_i32_1 = arith.constant 0 : i32
    return %c0_i32, %c0_i32_0 : i32, i32
  }
  func.func @transform_5(%arg0: i32) -> (i32, i32) {
    %c0_i32 = arith.constant 0 : i32
    %c0_i32_0 = arith.constant 0 : i32
    %c0_i32_1 = arith.constant 0 : i32
    return %c0_i32, %c0_i32_0 : i32, i32
  }
  func.func @transform_6(%arg0: i32) -> (i32, i32, i32) {
    %c0_i32 = arith.constant 0 : i32
    %c0_i32_0 = arith.constant 0 : i32
    %c0_i32_1 = arith.constant 0 : i32
    %c0_i32_2 = arith.constant 0 : i32
    return %c0_i32, %c0_i32_0, %c0_i32_1 : i32, i32, i32
  }
  func.func @transform_7(%arg0: i32) -> (i32, i32, i32) {
    %c0_i32 = arith.constant 0 : i32
    %c0_i32_0 = arith.constant 0 : i32
    %c0_i32_1 = arith.constant 0 : i32
    %c0_i32_2 = arith.constant 0 : i32
    return %c0_i32, %c0_i32_0, %c0_i32_1 : i32, i32, i32
  }
  func.func @transform_8(%arg0: i32) -> (i32, i32) {
    %c0_i32 = arith.constant 0 : i32
    %c0_i32_0 = arith.constant 0 : i32
    %c0_i32_1 = arith.constant 0 : i32
    return %c0_i32, %c0_i32_0 : i32, i32
  }
  func.func @transform_9(%arg0: i32) -> (i32, i32) {
    %c0_i32 = arith.constant 0 : i32
    %c0_i32_0 = arith.constant 0 : i32
    %c0_i32_1 = arith.constant 0 : i32
    return %c0_i32, %c0_i32_0 : i32, i32
  }
  func.func @transform_10(%arg0: i32) -> (i32, i32) {
    %c0_i32 = arith.constant 0 : i32
    %c0_i32_0 = arith.constant 0 : i32
    return %arg0, %c0_i32 : i32, i32
  }
}

</mosaic_0001>

<llo_original>
// kernel: tpu_custom_call.1
$region0: #{tpu_custom_call.1}
  #allocation0 [shape = 'u32[]', space=smem, size = 0x4, offset = 0x4, fixed_abs, tag = 'smem constant byte address 0x4 - core index']
  #allocation1 [shape = 'u32[144,128]{1,0:T(1,128)}', space=vmem, size = 0x12000, scoped, tag = 'internal scratch']
  #allocation2 [shape = 'bf16[8,384]{1,0:T(8,128)(2,1)}', space=vmem, size = 0x1800, scoped, tag = 'scratch operand']
  %s0 = inlined_call_operand.hbm [shape: bf16[8,32], index: 0, kind: input, shape index: {}]
  %s1 = inlined_call_operand.hbm [shape: bf16[3,32,128], index: 1, kind: input, shape index: {}]
  %s2 = inlined_call_operand.hbm [shape: bf16[2,128,128], index: 2, kind: input, shape index: {}]
  %s3 = inlined_call_operand.vmem [shape: f32[3,1,128], index: 3, kind: input, shape index: {}]
  %s4 = inlined_call_operand.hbm [shape: bf16[128,128], index: 4, kind: input, shape index: {}]
  %s5 = inlined_call_operand.vmem [shape: f32[1,128], index: 5, kind: input, shape index: {}]
  %s6 = inlined_call_operand.hbm [shape: bf16[3,128,128], index: 6, kind: input, shape index: {}]
  %s7 = inlined_call_operand.vmem [shape: f32[3,1,128], index: 7, kind: input, shape index: {}]
  %s8 = inlined_call_operand.hbm [shape: bf16[384,128], index: 8, kind: input, shape index: {}]
  %s9 = inlined_call_operand.vmem [shape: f32[1,128], index: 9, kind: input, shape index: {}]
  %s10 = inlined_call_operand.hbm [shape: f32[8,128], index: 10, kind: output, shape index: {}]
  %s11 = sld [smem:[#allocation0]]
  $region74: #{tpu_custom_call.1} parent=0
    _
  %s13 = ssub.s32 1, %s11
  %s14 = scalar_select 0, %s13, %s11
  $region1: #{tpu_custom_call.1} parent=0
    #allocation3 [shape = 'u8[2048]{0}', space=vmem, size = 0x800, scoped, tag = 'input window, operand 0, single buffered']
    #allocation4 [shape = 's32[1]{0}', space=sflag, size = 0x4, scoped, tag = 'scoped memory for tpu_custom_call.1']
    #allocation5 [shape = 's32[1]{0}', space=sflag, size = 0x4, scoped, tag = 'scoped memory for tpu_custom_call.1']
    #allocation6 [shape = 'u8[24576]{0}', space=vmem, size = 0x6000, scoped, tag = 'input window, operand 1, single buffered']
    #allocation7 [shape = 's32[1]{0}', space=sflag, size = 0x4, scoped, tag = 'scoped memory for tpu_custom_call.1']
    #allocation8 [shape = 'u8[65536]{0}', space=vmem, size = 0x10000, scoped, tag = 'input window, operand 2, single buffered']
    #allocation9 [shape = 'u8[32768]{0}', space=vmem, size = 0x8000, scoped, tag = 'input window, operand 4, single buffered']
    #allocation10 [shape = 's32[1]{0}', space=sflag, size = 0x4, scoped, tag = 'scoped memory for tpu_custom_call.1']
    #allocation11 [shape = 'u8[98304]{0}', space=vmem, size = 0x18000, scoped, tag = 'input window, operand 6, single buffered']
    #allocation12 [shape = 'u8[98304]{0}', space=vmem, size = 0x18000, scoped, tag = 'input window, operand 8, single buffered']
    #allocation13 [shape = 's32[1]{0}', space=sflag, size = 0x4, scoped, tag = 'scoped memory for tpu_custom_call.1']
    #allocation14 [shape = 'u8[4096]{0}', space=vmem, size = 0x1000, scoped, tag = 'output window, operand 0, single buffered']
    %15 = vsyncpa [#allocation4], 0
    %16 = vsyncpa [#allocation7], 0
    %17 = vsyncpa [#allocation10], 0
    %18 = vsyncpa [#allocation13], 0
    %19 = vsyncpa [#allocation5], 0
    // Predicated region
    $region2: #{tpu_custom_call.1} parent=1 // pred_check
      _
    $region3: #{tpu_custom_call.1} parent=1 // pred_check_branch
      %21 = sbr.rel (0) target = $region5
    $region4: #{tpu_custom_call.1} parent=1 // pred_region
      %s23 = ssub.s32 64, 64
      %24 = vsyncadd [#allocation4], %s23
      %s26 = sshll.u32 [#allocation3], 4
      %s27 = int_to_ptr.vmem [resolvable:$true] %s26
      %29 = dma.hbm_to_vmem [thread:$0]  %s0, 64, %s27, [#allocation4]
    $region5: #{tpu_custom_call.1} parent=1 // pred_fallthru
      _
    // Predicated region
    $region6: #{tpu_custom_call.1} parent=1 // pred_check
      _
    $region7: #{tpu_custom_call.1} parent=1 // pred_check_branch
      %31 = sbr.rel (0) target = $region9
    $region8: #{tpu_custom_call.1} parent=1 // pred_region
      %s33 = ssub.s32 768, 768
      %34 = vsyncadd [#allocation7], %s33
      %s35 = sshll.u32 [#allocation6], 4
      %s36 = int_to_ptr.vmem [resolvable:$true] %s35
      %41 = dma.hbm_to_vmem [thread:$0]  %s1, 768, %s36, [#allocation7], 64, 64, 4
    $region9: #{tpu_custom_call.1} parent=1 // pred_fallthru
      _
    // Predicated region
    $region10: #{tpu_custom_call.1} parent=1 // pred_check
      _
    $region11: #{tpu_custom_call.1} parent=1 // pred_check_branch
      %43 = sbr.rel (0) target = $region13
    $region12: #{tpu_custom_call.1} parent=1 // pred_region
      %s45 = ssub.s32 2048, 2048
      %46 = vsyncadd [#allocation7], %s45
      %s47 = sshll.u32 [#allocation8], 4
      %s48 = int_to_ptr.vmem [resolvable:$true] %s47
      %53 = dma.hbm_to_vmem [thread:$0]  %s2, 2048, %s48, [#allocation7], 64, 64, 4
    $region13: #{tpu_custom_call.1} parent=1 // pred_fallthru
      _
    // Predicated region
    $region14: #{tpu_custom_call.1} parent=1 // pred_check
      _
    $region15: #{tpu_custom_call.1} parent=1 // pred_check_branch
      %55 = sbr.rel (0) target = $region17
    $region16: #{tpu_custom_call.1} parent=1 // pred_region
      _
    $region17: #{tpu_custom_call.1} parent=1 // pred_fallthru
      _
    // Predicated region
    $region18: #{tpu_custom_call.1} parent=1 // pred_check
      _
    $region19: #{tpu_custom_call.1} parent=1 // pred_check_branch
      %57 = sbr.rel (0) target = $region21
    $region20: #{tpu_custom_call.1} parent=1 // pred_region
      %s59 = ssub.s32 1024, 1024
      %60 = vsyncadd [#allocation10], %s59
      %s61 = sshll.u32 [#allocation9], 4
      %s62 = int_to_ptr.vmem [resolvable:$true] %s61
      %67 = dma.hbm_to_vmem [thread:$0]  %s4, 1024, %s62, [#allocation10], 64, 64, 4
    $region21: #{tpu_custom_call.1} parent=1 // pred_fallthru
      _
    // Predicated region
    $region22: #{tpu_custom_call.1} parent=1 // pred_check
      _
    $region23: #{tpu_custom_call.1} parent=1 // pred_check_branch
      %69 = sbr.rel (0) target = $region25
    $region24: #{tpu_custom_call.1} parent=1 // pred_region
      _
    $region25: #{tpu_custom_call.1} parent=1 // pred_fallthru
      _
    // Predicated region
    $region26: #{tpu_custom_call.1} parent=1 // pred_check
      _
    $region27: #{tpu_custom_call.1} parent=1 // pred_check_branch
      %71 = sbr.rel (0) target = $region29
    $region28: #{tpu_custom_call.1} parent=1 // pred_region
      %s73 = ssub.s32 3072, 3072
      %74 = vsyncadd [#allocation10], %s73
      %s75 = sshll.u32 [#allocation11], 4
      %s76 = int_to_ptr.vmem [resolvable:$true] %s75
      %81 = dma.hbm_to_vmem [thread:$0]  %s6, 3072, %s76, [#allocation10], 64, 64, 4
    $region29: #{tpu_custom_call.1} parent=1 // pred_fallthru
      _
    // Predicated region
    $region30: #{tpu_custom_call.1} parent=1 // pred_check
      _
    $region31: #{tpu_custom_call.1} parent=1 // pred_check_branch
      %83 = sbr.rel (0) target = $region33
    $region32: #{tpu_custom_call.1} parent=1 // pred_region
      _
    $region33: #{tpu_custom_call.1} parent=1 // pred_fallthru
      _
    // Predicated region
    $region34: #{tpu_custom_call.1} parent=1 // pred_check
      _
    $region35: #{tpu_custom_call.1} parent=1 // pred_check_branch
      %85 = sbr.rel (0) target = $region37
    $region36: #{tpu_custom_call.1} parent=1 // pred_region
      %s87 = ssub.s32 3072, 3072
      %88 = vsyncadd [#allocation13], %s87
      %s89 = sshll.u32 [#allocation12], 4
      %s90 = int_to_ptr.vmem [resolvable:$true] %s89
      %95 = dma.hbm_to_vmem [thread:$0]  %s8, 3072, %s90, [#allocation13], 64, 64, 4
    $region37: #{tpu_custom_call.1} parent=1 // pred_fallthru
      _
    // Predicated region
    $region38: #{tpu_custom_call.1} parent=1 // pred_check
      _
    $region39: #{tpu_custom_call.1} parent=1 // pred_check_branch
      %97 = sbr.rel (0) target = $region41
    $region40: #{tpu_custom_call.1} parent=1 // pred_region
      _
    $region41: #{tpu_custom_call.1} parent=1 // pred_fallthru
      _
    // Predicated region
    $region42: #{tpu_custom_call.1} parent=1 // pred_check
      _
    $region43: #{tpu_custom_call.1} parent=1 // pred_check_branch
      %99 = sbr.rel (0) target = $region45
    $region44: #{tpu_custom_call.1} parent=1 // pred_region
      %100 = dma.done [#allocation4], 64
    $region45: #{tpu_custom_call.1} parent=1 // pred_fallthru
      _
    // Predicated region
    $region46: #{tpu_custom_call.1} parent=1 // pred_check
      _
    $region47: #{tpu_custom_call.1} parent=1 // pred_check_branch
      %102 = sbr.rel (0) target = $region49
    $region48: #{tpu_custom_call.1} parent=1 // pred_region
      %103 = dma.done [#allocation7], 768
    $region49: #{tpu_custom_call.1} parent=1 // pred_fallthru
      _
    // Predicated region
    $region50: #{tpu_custom_call.1} parent=1 // pred_check
      _
    $region51: #{tpu_custom_call.1} parent=1 // pred_check_branch
      %105 = sbr.rel (0) target = $region53
    $region52: #{tpu_custom_call.1} parent=1 // pred_region
      %106 = dma.done [#allocation7], 2048
    $region53: #{tpu_custom_call.1} parent=1 // pred_fallthru
      _
    // Predicated region
    $region54: #{tpu_custom_call.1} parent=1 // pred_check
      _
    $region55: #{tpu_custom_call.1} parent=1 // pred_check_branch
      %108 = sbr.rel (0) target = $region57
    $region56: #{tpu_custom_call.1} parent=1 // pred_region
      %109 = dma.done [#allocation10], 1024
    $region57: #{tpu_custom_call.1} parent=1 // pred_fallthru
      _
    // Predicated region
    $region58: #{tpu_custom_call.1} parent=1 // pred_check
      _
    $region59: #{tpu_custom_call.1} parent=1 // pred_check_branch
      %111 = sbr.rel (0) target = $region61
    $region60: #{tpu_custom_call.1} parent=1 // pred_region
      %112 = dma.done [#allocation10], 3072
    $region61: #{tpu_custom_call.1} parent=1 // pred_fallthru
      _
    // Predicated region
    $region62: #{tpu_custom_call.1} parent=1 // pred_check
      _
    $region63: #{tpu_custom_call.1} parent=1 // pred_check_branch
      %114 = sbr.rel (0) target = $region65
    $region64: #{tpu_custom_call.1} parent=1 // pred_region
      %115 = dma.done [#allocation13], 3072
    $region65: #{tpu_custom_call.1} parent=1 // pred_fallthru
      _
    %v117 = vld [vmem:[#allocation3] sm:$0xf]
    %v118 = vld [vmem:[#allocation6] sm:$0xf]
    %v119 = vld [vmem:[#allocation6 + $0x4] sm:$0xf]
    %v120 = vld [vmem:[#allocation6 + $0x8] sm:$0xf]
    %v121 = vld [vmem:[#allocation6 + $0xc] sm:$0xf]
    %v122 = vld [vmem:[%s3] sm:$0x1]
    %v124 = vlaneseq
    %v125 = vshrl.u32 %v124, 7
    %v126 = vsub.s32 0, %v125
    %v127 = vrot.slane %v122, %v126
    %v133 = vunpack.c.l.b16 %v118
    %v134 = vunpack.c.l.b16 %v119
    %v135 = vunpack.c.l.b16 %v120
    %v136 = vunpack.c.l.b16 %v121
    %v137 = vpack.c.b16 %v134, %v133
    %v138 = vpack.c.b16 %v136, %v135
    %vm141 = vcmask 261120
    %v143 = vsel %vm141, %v117, 0
    %145 = vmatprep.subr.bf16.mxu0 0
    %146 = vmatpush1.bf16.msra.mxu0 %v137
    %147 = vmatprep.subr.bf16.mxu0 0
    %148 = vmatpush1.bf16.msra.mxu0 %v138
    %149 = vmatprep.subr.bf16.mxu0 0
    %150 = vmatpush1.bf16.msra.mxu0 0
    %151 = vmatprep.subr.bf16.mxu0 0
    %152 = vmatpush1.bf16.msra.mxu0 0
    %153 = vmatprep.subr.bf16.mxu0 0
    %154 = vmatpush1.bf16.msra.mxu0 0
    %155 = vmatprep.subr.bf16.mxu0 0
    %156 = vmatpush1.bf16.msra.mxu0 0
    %157 = vmatprep.subr.bf16.mxu0 0
    %158 = vmatpush1.bf16.msra.mxu0 0
    %159 = vmatprep.subr.bf16.mxu0 0
    %160 = vmatpush1.bf16.msra.mxu0 0
    %161 = vmatprep.subr.bf16.mxu0 0
    %162 = vmatpush1.bf16.msra.mxu0 0
    %163 = vmatprep.subr.bf16.mxu0 0
    %164 = vmatpush1.bf16.msra.mxu0 0
    %165 = vmatprep.subr.bf16.mxu0 0
    %166 = vmatpush1.bf16.msra.mxu0 0
    %167 = vmatprep.subr.bf16.mxu0 0
    %168 = vmatpush1.bf16.msra.mxu0 0
    %169 = vmatprep.subr.bf16.mxu0 0
    %170 = vmatpush1.bf16.msra.mxu0 0
    %171 = vmatprep.subr.bf16.mxu0 0
    %172 = vmatpush1.bf16.msra.mxu0 0
    %173 = vmatprep.subr.bf16.mxu0 0
    %174 = vmatpush1.bf16.msra.mxu0 0
    %175 = vmatprep.subr.bf16.mxu0 0
    %176 = vmatpush1.bf16.msra.mxu0 0
    %177 = vmatprep.mubr.bf16.mxu0 0
    %178 = vmatmul.mubr.bf16.gmra.mrb[0].mxu0 %v143
    %v179 = vpop.f32.mrb[0].mxu0
    %v180 = vadd.f32 %v127, %v179
    %v181 = vpop.f32.mrb[0].mxu0
    %v182 = vpop.f32.mrb[0].mxu0
    %v183 = vpop.f32.mrb[0].mxu0
    %184 = vdwg.mxu0
    %v185 = vmax.f32 %v180, 0.0
    %v186 = vpack.c.bf16 %v185, %v185
    %v187 = vld [vmem:[#allocation11] sm:$0xf]
    %v188 = vld [vmem:[#allocation11 + $0x4] sm:$0xf]
    %v189 = vld [vmem:[#allocation11 + $0x8] sm:$0xf]
    %v190 = vld [vmem:[#allocation11 + $0xc] sm:$0xf]
    %v191 = vld [vmem:[#allocation11 + $0x10] sm:$0xf]
    %v192 = vld [vmem:[#allocation11 + $0x14] sm:$0xf]
    %v193 = vld [vmem:[#allocation11 + $0x18] sm:$0xf]
    %v194 = vld [vmem:[#allocation11 + $0x1c] sm:$0xf]
    %v195 = vld [vmem:[#allocation11 + $0x20] sm:$0xf]
    %v196 = vld [vmem:[#allocation11 + $0x24] sm:$0xf]
    %v197 = vld [vmem:[#allocation11 + $0x28] sm:$0xf]
    %v198 = vld [vmem:[#allocation11 + $0x2c] sm:$0xf]
    %v199 = vld [vmem:[#allocation11 + $0x30] sm:$0xf]
    %v200 = vld [vmem:[#allocation11 + $0x34] sm:$0xf]
    %v201 = vld [vmem:[#allocation11 + $0x38] sm:$0xf]
    %v202 = vld [vmem:[#allocation11 + $0x3c] sm:$0xf]
    %v203 = vld [vmem:[%s7] sm:$0x1]
    %v205 = vlaneseq
    %v206 = vshrl.u32 %v205, 7
    %v207 = vsub.s32 0, %v206
    %v208 = vrot.slane %v203, %v207
    %v226 = vunpack.c.l.b16 %v187
    %v227 = vunpack.c.l.b16 %v188
    %v228 = vunpack.c.l.b16 %v189
    %v229 = vunpack.c.l.b16 %v190
    %v230 = vunpack.c.l.b16 %v191
    %v231 = vunpack.c.l.b16 %v192
    %v232 = vunpack.c.l.b16 %v193
    %v233 = vunpack.c.l.b16 %v194
    %v234 = vunpack.c.l.b16 %v195
    %v235 = vunpack.c.l.b16 %v196
    %v236 = vunpack.c.l.b16 %v197
    %v237 = vunpack.c.l.b16 %v198
    %v238 = vunpack.c.l.b16 %v199
    %v239 = vunpack.c.l.b16 %v200
    %v240 = vunpack.c.l.b16 %v201
    %v241 = vunpack.c.l.b16 %v202
    %v242 = vpack.c.b16 %v227, %v226
    %v243 = vpack.c.b16 %v229, %v228
    %v244 = vpack.c.b16 %v231, %v230
    %v245 = vpack.c.b16 %v233, %v232
    %v246 = vpack.c.b16 %v235, %v234
    %v247 = vpack.c.b16 %v237, %v236
    %v248 = vpack.c.b16 %v239, %v238
    %v249 = vpack.c.b16 %v241, %v240
    %258 = vmatprep.subr.bf16.mxu0 0
    %259 = vmatpush1.bf16.msra.mxu0 %v242
    %260 = vmatprep.subr.bf16.mxu0 0
    %261 = vmatpush1.bf16.msra.mxu0 %v243
    %262 = vmatprep.subr.bf16.mxu0 0
    %263 = vmatpush1.bf16.msra.mxu0 %v244
    %264 = vmatprep.subr.bf16.mxu0 0
    %265 = vmatpush1.bf16.msra.mxu0 %v245
    %266 = vmatprep.subr.bf16.mxu0 0
    %267 = vmatpush1.bf16.msra.mxu0 %v246
    %268 = vmatprep.subr.bf16.mxu0 0
    %269 = vmatpush1.bf16.msra.mxu0 %v247
    %270 = vmatprep.subr.bf16.mxu0 0
    %271 = vmatpush1.bf16.msra.mxu0 %v248
    %272 = vmatprep.subr.bf16.mxu0 0
    %273 = vmatpush1.bf16.msra.mxu0 %v249
    %274 = vmatprep.subr.bf16.mxu0 0
    %275 = vmatpush1.bf16.msra.mxu0 0
    %276 = vmatprep.subr.bf16.mxu0 0
    %277 = vmatpush1.bf16.msra.mxu0 0
    %278 = vmatprep.subr.bf16.mxu0 0
    %279 = vmatpush1.bf16.msra.mxu0 0
    %280 = vmatprep.subr.bf16.mxu0 0
    %281 = vmatpush1.bf16.msra.mxu0 0
    %282 = vmatprep.subr.bf16.mxu0 0
    %283 = vmatpush1.bf16.msra.mxu0 0
    %284 = vmatprep.subr.bf16.mxu0 0
    %285 = vmatpush1.bf16.msra.mxu0 0
    %286 = vmatprep.subr.bf16.mxu0 0
    %287 = vmatpush1.bf16.msra.mxu0 0
    %288 = vmatprep.subr.bf16.mxu0 0
    %289 = vmatpush1.bf16.msra.mxu0 0
    %290 = vmatprep.mubr.bf16.mxu0 0
    %291 = vmatmul.mubr.bf16.gmra.mrb[0].mxu0 %v186
    %v292 = vpop.f32.mrb[0].mxu0
    %v293 = vadd.f32 %v208, %v292
    %v294 = vpop.f32.mrb[0].mxu0
    %v295 = vpop.f32.mrb[0].mxu0
    %v296 = vpop.f32.mrb[0].mxu0
    %297 = vdwg.mxu0
    %v298 = vmax.f32 %v293, 0.0
    %v299 = vpack.c.bf16 %v298, %v298
    %300 = vst [vmem:[#allocation2] sm:$0xf] %v299
    %s301 = scalar_lea.vmem [#allocation6], 16
    %v302 = vld [vmem:[%s301] sm:$0xf]
    %v303 = vld [vmem:[%s301 + $0x4] sm:$0xf]
    %v304 = vld [vmem:[%s301 + $0x8] sm:$0xf]
    %v305 = vld [vmem:[%s301 + $0xc] sm:$0xf]
    %v306 = vld [vmem:[#allocation8] sm:$0xf]
    %v307 = vld [vmem:[#allocation8 + $0x4] sm:$0xf]
    %v308 = vld [vmem:[#allocation8 + $0x8] sm:$0xf]
    %v309 = vld [vmem:[#allocation8 + $0xc] sm:$0xf]
    %v310 = vld [vmem:[#allocation8 + $0x10] sm:$0xf]
    %v311 = vld [vmem:[#allocation8 + $0x14] sm:$0xf]
    %v312 = vld [vmem:[#allocation8 + $0x18] sm:$0xf]
    %v313 = vld [vmem:[#allocation8 + $0x1c] sm:$0xf]
    %v314 = vld [vmem:[#allocation8 + $0x20] sm:$0xf]
    %v315 = vld [vmem:[#allocation8 + $0x24] sm:$0xf]
    %v316 = vld [vmem:[#allocation8 + $0x28] sm:$0xf]
    %v317 = vld [vmem:[#allocation8 + $0x2c] sm:$0xf]
    %v318 = vld [vmem:[#allocation8 + $0x30] sm:$0xf]
    %v319 = vld [vmem:[#allocation8 + $0x34] sm:$0xf]
    %v320 = vld [vmem:[#allocation8 + $0x38] sm:$0xf]
    %v321 = vld [vmem:[#allocation8 + $0x3c] sm:$0xf]
    %v338 = vunpack.c.l.b16 %v306
    %v339 = vunpack.c.l.b16 %v307
    %v340 = vunpack.c.l.b16 %v308
    %v341 = vunpack.c.l.b16 %v309
    %v342 = vunpack.c.l.b16 %v310
    %v343 = vunpack.c.l.b16 %v311
    %v344 = vunpack.c.l.b16 %v312
    %v345 = vunpack.c.l.b16 %v313
    %v346 = vunpack.c.l.b16 %v314
    %v347 = vunpack.c.l.b16 %v315
    %v348 = vunpack.c.l.b16 %v316
    %v349 = vunpack.c.l.b16 %v317
    %v350 = vunpack.c.l.b16 %v318
    %v351 = vunpack.c.l.b16 %v319
    %v352 = vunpack.c.l.b16 %v320
    %v353 = vunpack.c.l.b16 %v321
    %v354 = vpack.c.b16 %v339, %v338
    %v355 = vpack.c.b16 %v341, %v340
    %v356 = vpack.c.b16 %v343, %v342
    %v357 = vpack.c.b16 %v345, %v344
    %v358 = vpack.c.b16 %v347, %v346
    %v359 = vpack.c.b16 %v349, %v348
    %v360 = vpack.c.b16 %v351, %v350
    %v361 = vpack.c.b16 %v353, %v352
    %370 = vmatprep.subr.bf16.mxu0 0
    %371 = vmatpush1.bf16.msra.mxu0 %v354
    %372 = vmatprep.subr.bf16.mxu0 0
    %373 = vmatpush1.bf16.msra.mxu0 %v355
    %374 = vmatprep.subr.bf16.mxu0 0
    %375 = vmatpush1.bf16.msra.mxu0 %v356
    %376 = vmatprep.subr.bf16.mxu0 0
    %377 = vmatpush1.bf16.msra.mxu0 %v357
    %378 = vmatprep.subr.bf16.mxu0 0
    %379 = vmatpush1.bf16.msra.mxu0 %v358
    %380 = vmatprep.subr.bf16.mxu0 0
    %381 = vmatpush1.bf16.msra.mxu0 %v359
    %382 = vmatprep.subr.bf16.mxu0 0
    %383 = vmatpush1.bf16.msra.mxu0 %v360
    %384 = vmatprep.subr.bf16.mxu0 0
    %385 = vmatpush1.bf16.msra.mxu0 %v361
    %386 = vmatprep.subr.bf16.mxu0 0
    %387 = vmatpush1.bf16.msra.mxu0 0
    %388 = vmatprep.subr.bf16.mxu0 0
    %389 = vmatpush1.bf16.msra.mxu0 0
    %390 = vmatprep.subr.bf16.mxu0 0
    %391 = vmatpush1.bf16.msra.mxu0 0
    %392 = vmatprep.subr.bf16.mxu0 0
    %393 = vmatpush1.bf16.msra.mxu0 0
    %394 = vmatprep.subr.bf16.mxu0 0
    %395 = vmatpush1.bf16.msra.mxu0 0
    %396 = vmatprep.subr.bf16.mxu0 0
    %397 = vmatpush1.bf16.msra.mxu0 0
    %398 = vmatprep.subr.bf16.mxu0 0
    %399 = vmatpush1.bf16.msra.mxu0 0
    %400 = vmatprep.subr.bf16.mxu0 0
    %401 = vmatpush1.bf16.msra.mxu0 0
    %402 = vmatprep.mubr.bf16.mxu0 0
    %403 = vmatmul.mubr.bf16.gmra.mrb[0].mxu0 %v186
    %v404 = vpop.f32.mrb[0].mxu0
    %v405 = vadd.f32 0.0, %v404
    %v406 = vpop.f32.mrb[0].mxu0
    %v407 = vpop.f32.mrb[0].mxu0
    %v408 = vpop.f32.mrb[0].mxu0
    %409 = vdwg.mxu0
    %v414 = vunpack.c.l.b16 %v302
    %v415 = vunpack.c.l.b16 %v303
    %v416 = vunpack.c.l.b16 %v304
    %v417 = vunpack.c.l.b16 %v305
    %v418 = vpack.c.b16 %v415, %v414
    %v419 = vpack.c.b16 %v417, %v416
    %422 = vmatprep.subr.bf16.mxu0 0
    %423 = vmatpush1.bf16.msra.mxu0 %v418
    %424 = vmatprep.subr.bf16.mxu0 0
    %425 = vmatpush1.bf16.msra.mxu0 %v419
    %426 = vmatprep.subr.bf16.mxu0 0
    %427 = vmatpush1.bf16.msra.mxu0 0
    %428 = vmatprep.subr.bf16.mxu0 0
    %429 = vmatpush1.bf16.msra.mxu0 0
    %430 = vmatprep.subr.bf16.mxu0 0
    %431 = vmatpush1.bf16.msra.mxu0 0
    %432 = vmatprep.subr.bf16.mxu0 0
    %433 = vmatpush1.bf16.msra.mxu0 0
    %434 = vmatprep.subr.bf16.mxu0 0
    %435 = vmatpush1.bf16.msra.mxu0 0
    %436 = vmatprep.subr.bf16.mxu0 0
    %437 = vmatpush1.bf16.msra.mxu0 0
    %438 = vmatprep.subr.bf16.mxu0 0
    %439 = vmatpush1.bf16.msra.mxu0 0
    %440 = vmatprep.subr.bf16.mxu0 0
    %441 = vmatpush1.bf16.msra.mxu0 0
    %442 = vmatprep.subr.bf16.mxu0 0
    %443 = vmatpush1.bf16.msra.mxu0 0
    %444 = vmatprep.subr.bf16.mxu0 0
    %445 = vmatpush1.bf16.msra.mxu0 0
    %446 = vmatprep.subr.bf16.mxu0 0
    %447 = vmatpush1.bf16.msra.mxu0 0
    %448 = vmatprep.subr.bf16.mxu0 0
    %449 = vmatpush1.bf16.msra.mxu0 0
    %450 = vmatprep.subr.bf16.mxu0 0
    %451 = vmatpush1.bf16.msra.mxu0 0
    %452 = vmatprep.subr.bf16.mxu0 0
    %453 = vmatpush1.bf16.msra.mxu0 0
    %454 = vmatprep.mubr.bf16.mxu0 0
    %455 = vmatmul.mubr.bf16.gmra.mrb[0].mxu0 %v143
    %v456 = vpop.f32.mrb[0].mxu0
    %v457 = vadd.f32 %v405, %v456
    %v458 = vpop.f32.mrb[0].mxu0
    %v459 = vpop.f32.mrb[0].mxu0
    %v460 = vpop.f32.mrb[0].mxu0
    %461 = vdwg.mxu0
    %s462 = scalar_lea.vmem %s3, 1
    %v463 = vld [vmem:[%s462] sm:$0x1]
    %v465 = vlaneseq
    %v466 = vshrl.u32 %v465, 7
    %v467 = vsub.s32 0, %v466
    %v468 = vrot.slane %v463, %v467
    %v470 = vadd.f32 %v457, %v468
    %v471 = vmax.f32 %v470, 0.0
    %v472 = vpack.c.bf16 %v471, %v471
    %s473 = scalar_lea.vmem [#allocation11], 64
    %v474 = vld [vmem:[%s473] sm:$0xf]
    %v475 = vld [vmem:[%s473 + $0x4] sm:$0xf]
    %v476 = vld [vmem:[%s473 + $0x8] sm:$0xf]
    %v477 = vld [vmem:[%s473 + $0xc] sm:$0xf]
    %v478 = vld [vmem:[%s473 + $0x10] sm:$0xf]
    %v479 = vld [vmem:[%s473 + $0x14] sm:$0xf]
    %v480 = vld [vmem:[%s473 + $0x18] sm:$0xf]
    %v481 = vld [vmem:[%s473 + $0x1c] sm:$0xf]
    %v482 = vld [vmem:[%s473 + $0x20] sm:$0xf]
    %v483 = vld [vmem:[%s473 + $0x24] sm:$0xf]
    %v484 = vld [vmem:[%s473 + $0x28] sm:$0xf]
    %v485 = vld [vmem:[%s473 + $0x2c] sm:$0xf]
    %v486 = vld [vmem:[%s473 + $0x30] sm:$0xf]
    %v487 = vld [vmem:[%s473 + $0x34] sm:$0xf]
    %v488 = vld [vmem:[%s473 + $0x38] sm:$0xf]
    %v489 = vld [vmem:[%s473 + $0x3c] sm:$0xf]
    %s490 = scalar_lea.vmem %s7, 1
    %v491 = vld [vmem:[%s490] sm:$0x1]
    %v493 = vlaneseq
    %v494 = vshrl.u32 %v493, 7
    %v495 = vsub.s32 0, %v494
    %v496 = vrot.slane %v491, %v495
    %v514 = vunpack.c.l.b16 %v474
    %v515 = vunpack.c.l.b16 %v475
    %v516 = vunpack.c.l.b16 %v476
    %v517 = vunpack.c.l.b16 %v477
    %v518 = vunpack.c.l.b16 %v478
    %v519 = vunpack.c.l.b16 %v479
    %v520 = vunpack.c.l.b16 %v480
    %v521 = vunpack.c.l.b16 %v481
    %v522 = vunpack.c.l.b16 %v482
    %v523 = vunpack.c.l.b16 %v483
    %v524 = vunpack.c.l.b16 %v484
    %v525 = vunpack.c.l.b16 %v485
    %v526 = vunpack.c.l.b16 %v486
    %v527 = vunpack.c.l.b16 %v487
    %v528 = vunpack.c.l.b16 %v488
    %v529 = vunpack.c.l.b16 %v489
    %v530 = vpack.c.b16 %v515, %v514
    %v531 = vpack.c.b16 %v517, %v516
    %v532 = vpack.c.b16 %v519, %v518
    %v533 = vpack.c.b16 %v521, %v520
    %v534 = vpack.c.b16 %v523, %v522
    %v535 = vpack.c.b16 %v525, %v524
    %v536 = vpack.c.b16 %v527, %v526
    %v537 = vpack.c.b16 %v529, %v528
    %546 = vmatprep.subr.bf16.mxu0 0
    %547 = vmatpush1.bf16.msra.mxu0 %v530
    %548 = vmatprep.subr.bf16.mxu0 0
    %549 = vmatpush1.bf16.msra.mxu0 %v531
    %550 = vmatprep.subr.bf16.mxu0 0
    %551 = vmatpush1.bf16.msra.mxu0 %v532
    %552 = vmatprep.subr.bf16.mxu0 0
    %553 = vmatpush1.bf16.msra.mxu0 %v533
    %554 = vmatprep.subr.bf16.mxu0 0
    %555 = vmatpush1.bf16.msra.mxu0 %v534
    %556 = vmatprep.subr.bf16.mxu0 0
    %557 = vmatpush1.bf16.msra.mxu0 %v535
    %558 = vmatprep.subr.bf16.mxu0 0
    %559 = vmatpush1.bf16.msra.mxu0 %v536
    %560 = vmatprep.subr.bf16.mxu0 0
    %561 = vmatpush1.bf16.msra.mxu0 %v537
    %562 = vmatprep.subr.bf16.mxu0 0
    %563 = vmatpush1.bf16.msra.mxu0 0
    %564 = vmatprep.subr.bf16.mxu0 0
    %565 = vmatpush1.bf16.msra.mxu0 0
    %566 = vmatprep.subr.bf16.mxu0 0
    %567 = vmatpush1.bf16.msra.mxu0 0
    %568 = vmatprep.subr.bf16.mxu0 0
    %569 = vmatpush1.bf16.msra.mxu0 0
    %570 = vmatprep.subr.bf16.mxu0 0
    %571 = vmatpush1.bf16.msra.mxu0 0
    %572 = vmatprep.subr.bf16.mxu0 0
    %573 = vmatpush1.bf16.msra.mxu0 0
    %574 = vmatprep.subr.bf16.mxu0 0
    %575 = vmatpush1.bf16.msra.mxu0 0
    %576 = vmatprep.subr.bf16.mxu0 0
    %577 = vmatpush1.bf16.msra.mxu0 0
    %578 = vmatprep.mubr.bf16.mxu0 0
    %579 = vmatmul.mubr.bf16.gmra.mrb[0].mxu0 %v472
    %v580 = vpop.f32.mrb[0].mxu0
    %v581 = vadd.f32 %v496, %v580
    %v582 = vpop.f32.mrb[0].mxu0
    %v583 = vpop.f32.mrb[0].mxu0
    %v584 = vpop.f32.mrb[0].mxu0
    %585 = vdwg.mxu0
    %v586 = vmax.f32 %v581, 0.0
    %v587 = vpack.c.bf16 %v586, %v586
    %588 = vst [vmem:[#allocation2 + $0x4] sm:$0xf] %v587
    %s589 = scalar_lea.vmem [#allocation6], 32
    %v590 = vld [vmem:[%s589] sm:$0xf]
    %v591 = vld [vmem:[%s589 + $0x4] sm:$0xf]
    %v592 = vld [vmem:[%s589 + $0x8] sm:$0xf]
    %v593 = vld [vmem:[%s589 + $0xc] sm:$0xf]
    %s594 = scalar_lea.vmem [#allocation8], 64
    %v595 = vld [vmem:[%s594] sm:$0xf]
    %v596 = vld [vmem:[%s594 + $0x4] sm:$0xf]
    %v597 = vld [vmem:[%s594 + $0x8] sm:$0xf]
    %v598 = vld [vmem:[%s594 + $0xc] sm:$0xf]
    %v599 = vld [vmem:[%s594 + $0x10] sm:$0xf]
    %v600 = vld [vmem:[%s594 + $0x14] sm:$0xf]
    %v601 = vld [vmem:[%s594 + $0x18] sm:$0xf]
    %v602 = vld [vmem:[%s594 + $0x1c] sm:$0xf]
    %v603 = vld [vmem:[%s594 + $0x20] sm:$0xf]
    %v604 = vld [vmem:[%s594 + $0x24] sm:$0xf]
    %v605 = vld [vmem:[%s594 + $0x28] sm:$0xf]
    %v606 = vld [vmem:[%s594 + $0x2c] sm:$0xf]
    %v607 = vld [vmem:[%s594 + $0x30] sm:$0xf]
    %v608 = vld [vmem:[%s594 + $0x34] sm:$0xf]
    %v609 = vld [vmem:[%s594 + $0x38] sm:$0xf]
    %v610 = vld [vmem:[%s594 + $0x3c] sm:$0xf]
    %v627 = vunpack.c.l.b16 %v595
    %v628 = vunpack.c.l.b16 %v596
    %v629 = vunpack.c.l.b16 %v597
    %v630 = vunpack.c.l.b16 %v598
    %v631 = vunpack.c.l.b16 %v599
    %v632 = vunpack.c.l.b16 %v600
    %v633 = vunpack.c.l.b16 %v601
    %v634 = vunpack.c.l.b16 %v602
    %v635 = vunpack.c.l.b16 %v603
    %v636 = vunpack.c.l.b16 %v604
    %v637 = vunpack.c.l.b16 %v605
    %v638 = vunpack.c.l.b16 %v606
    %v639 = vunpack.c.l.b16 %v607
    %v640 = vunpack.c.l.b16 %v608
    %v641 = vunpack.c.l.b16 %v609
    %v642 = vunpack.c.l.b16 %v610
    %v643 = vpack.c.b16 %v628, %v627
    %v644 = vpack.c.b16 %v630, %v629
    %v645 = vpack.c.b16 %v632, %v631
    %v646 = vpack.c.b16 %v634, %v633
    %v647 = vpack.c.b16 %v636, %v635
    %v648 = vpack.c.b16 %v638, %v637
    %v649 = vpack.c.b16 %v640, %v639
    %v650 = vpack.c.b16 %v642, %v641
    %659 = vmatprep.subr.bf16.mxu0 0
    %660 = vmatpush1.bf16.msra.mxu0 %v643
    %661 = vmatprep.subr.bf16.mxu0 0
    %662 = vmatpush1.bf16.msra.mxu0 %v644
    %663 = vmatprep.subr.bf16.mxu0 0
    %664 = vmatpush1.bf16.msra.mxu0 %v645
    %665 = vmatprep.subr.bf16.mxu0 0
    %666 = vmatpush1.bf16.msra.mxu0 %v646
    %667 = vmatprep.subr.bf16.mxu0 0
    %668 = vmatpush1.bf16.msra.mxu0 %v647
    %669 = vmatprep.subr.bf16.mxu0 0
    %670 = vmatpush1.bf16.msra.mxu0 %v648
    %671 = vmatprep.subr.bf16.mxu0 0
    %672 = vmatpush1.bf16.msra.mxu0 %v649
    %673 = vmatprep.subr.bf16.mxu0 0
    %674 = vmatpush1.bf16.msra.mxu0 %v650
    %675 = vmatprep.subr.bf16.mxu0 0
    %676 = vmatpush1.bf16.msra.mxu0 0
    %677 = vmatprep.subr.bf16.mxu0 0
    %678 = vmatpush1.bf16.msra.mxu0 0
    %679 = vmatprep.subr.bf16.mxu0 0
    %680 = vmatpush1.bf16.msra.mxu0 0
    %681 = vmatprep.subr.bf16.mxu0 0
    %682 = vmatpush1.bf16.msra.mxu0 0
    %683 = vmatprep.subr.bf16.mxu0 0
    %684 = vmatpush1.bf16.msra.mxu0 0
    %685 = vmatprep.subr.bf16.mxu0 0
    %686 = vmatpush1.bf16.msra.mxu0 0
    %687 = vmatprep.subr.bf16.mxu0 0
    %688 = vmatpush1.bf16.msra.mxu0 0
    %689 = vmatprep.subr.bf16.mxu0 0
    %690 = vmatpush1.bf16.msra.mxu0 0
    %691 = vmatprep.mubr.bf16.mxu0 0
    %692 = vmatmul.mubr.bf16.gmra.mrb[0].mxu0 %v472
    %v693 = vpop.f32.mrb[0].mxu0
    %v694 = vadd.f32 0.0, %v693
    %v695 = vpop.f32.mrb[0].mxu0
    %v696 = vpop.f32.mrb[0].mxu0
    %v697 = vpop.f32.mrb[0].mxu0
    %698 = vdwg.mxu0
    %v703 = vunpack.c.l.b16 %v590
    %v704 = vunpack.c.l.b16 %v591
    %v705 = vunpack.c.l.b16 %v592
    %v706 = vunpack.c.l.b16 %v593
    %v707 = vpack.c.b16 %v704, %v703
    %v708 = vpack.c.b16 %v706, %v705
    %711 = vmatprep.subr.bf16.mxu0 0
    %712 = vmatpush1.bf16.msra.mxu0 %v707
    %713 = vmatprep.subr.bf16.mxu0 0
    %714 = vmatpush1.bf16.msra.mxu0 %v708
    %715 = vmatprep.subr.bf16.mxu0 0
    %716 = vmatpush1.bf16.msra.mxu0 0
    %717 = vmatprep.subr.bf16.mxu0 0
    %718 = vmatpush1.bf16.msra.mxu0 0
    %719 = vmatprep.subr.bf16.mxu0 0
    %720 = vmatpush1.bf16.msra.mxu0 0
    %721 = vmatprep.subr.bf16.mxu0 0
    %722 = vmatpush1.bf16.msra.mxu0 0
    %723 = vmatprep.subr.bf16.mxu0 0
    %724 = vmatpush1.bf16.msra.mxu0 0
    %725 = vmatprep.subr.bf16.mxu0 0
    %726 = vmatpush1.bf16.msra.mxu0 0
    %727 = vmatprep.subr.bf16.mxu0 0
    %728 = vmatpush1.bf16.msra.mxu0 0
    %729 = vmatprep.subr.bf16.mxu0 0
    %730 = vmatpush1.bf16.msra.mxu0 0
    %731 = vmatprep.subr.bf16.mxu0 0
    %732 = vmatpush1.bf16.msra.mxu0 0
    %733 = vmatprep.subr.bf16.mxu0 0
    %734 = vmatpush1.bf16.msra.mxu0 0
    %735 = vmatprep.subr.bf16.mxu0 0
    %736 = vmatpush1.bf16.msra.mxu0 0
    %737 = vmatprep.subr.bf16.mxu0 0
    %738 = vmatpush1.bf16.msra.mxu0 0
    %739 = vmatprep.subr.bf16.mxu0 0
    %740 = vmatpush1.bf16.msra.mxu0 0
    %741 = vmatprep.subr.bf16.mxu0 0
    %742 = vmatpush1.bf16.msra.mxu0 0
    %743 = vmatprep.mubr.bf16.mxu0 0
    %744 = vmatmul.mubr.bf16.gmra.mrb[0].mxu0 %v143
    %v745 = vpop.f32.mrb[0].mxu0
    %v746 = vadd.f32 %v694, %v745
    %v747 = vpop.f32.mrb[0].mxu0
    %v748 = vpop.f32.mrb[0].mxu0
    %v749 = vpop.f32.mrb[0].mxu0
    %750 = vdwg.mxu0
    %s751 = scalar_lea.vmem %s3, 2
    %v752 = vld [vmem:[%s751] sm:$0x1]
    %v754 = vlaneseq
    %v755 = vshrl.u32 %v754, 7
    %v756 = vsub.s32 0, %v755
    %v757 = vrot.slane %v752, %v756
    %v759 = vadd.f32 %v746, %v757
    %v760 = vmax.f32 %v759, 0.0
    %v761 = vpack.c.bf16 %v760, %v760
    %s762 = scalar_lea.vmem [#allocation11], 128
    %v763 = vld [vmem:[%s762] sm:$0xf]
    %v764 = vld [vmem:[%s762 + $0x4] sm:$0xf]
    %v765 = vld [vmem:[%s762 + $0x8] sm:$0xf]
    %v766 = vld [vmem:[%s762 + $0xc] sm:$0xf]
    %v767 = vld [vmem:[%s762 + $0x10] sm:$0xf]
    %v768 = vld [vmem:[%s762 + $0x14] sm:$0xf]
    %v769 = vld [vmem:[%s762 + $0x18] sm:$0xf]
    %v770 = vld [vmem:[%s762 + $0x1c] sm:$0xf]
    %v771 = vld [vmem:[%s762 + $0x20] sm:$0xf]
    %v772 = vld [vmem:[%s762 + $0x24] sm:$0xf]
    %v773 = vld [vmem:[%s762 + $0x28] sm:$0xf]
    %v774 = vld [vmem:[%s762 + $0x2c] sm:$0xf]
    %v775 = vld [vmem:[%s762 + $0x30] sm:$0xf]
    %v776 = vld [vmem:[%s762 + $0x34] sm:$0xf]
    %v777 = vld [vmem:[%s762 + $0x38] sm:$0xf]
    %v778 = vld [vmem:[%s762 + $0x3c] sm:$0xf]
    %s779 = scalar_lea.vmem %s7, 2
    %v780 = vld [vmem:[%s779] sm:$0x1]
    %v782 = vlaneseq
    %v783 = vshrl.u32 %v782, 7
    %v784 = vsub.s32 0, %v783
    %v785 = vrot.slane %v780, %v784
    %v803 = vunpack.c.l.b16 %v763
    %v804 = vunpack.c.l.b16 %v764
    %v805 = vunpack.c.l.b16 %v765
    %v806 = vunpack.c.l.b16 %v766
    %v807 = vunpack.c.l.b16 %v767
    %v808 = vunpack.c.l.b16 %v768
    %v809 = vunpack.c.l.b16 %v769
    %v810 = vunpack.c.l.b16 %v770
    %v811 = vunpack.c.l.b16 %v771
    %v812 = vunpack.c.l.b16 %v772
    %v813 = vunpack.c.l.b16 %v773
    %v814 = vunpack.c.l.b16 %v774
    %v815 = vunpack.c.l.b16 %v775
    %v816 = vunpack.c.l.b16 %v776
    %v817 = vunpack.c.l.b16 %v777
    %v818 = vunpack.c.l.b16 %v778
    %v819 = vpack.c.b16 %v804, %v803
    %v820 = vpack.c.b16 %v806, %v805
    %v821 = vpack.c.b16 %v808, %v807
    %v822 = vpack.c.b16 %v810, %v809
    %v823 = vpack.c.b16 %v812, %v811
    %v824 = vpack.c.b16 %v814, %v813
    %v825 = vpack.c.b16 %v816, %v815
    %v826 = vpack.c.b16 %v818, %v817
    %835 = vmatprep.subr.bf16.mxu0 0
    %836 = vmatpush1.bf16.msra.mxu0 %v819
    %837 = vmatprep.subr.bf16.mxu0 0
    %838 = vmatpush1.bf16.msra.mxu0 %v820
    %839 = vmatprep.subr.bf16.mxu0 0
    %840 = vmatpush1.bf16.msra.mxu0 %v821
    %841 = vmatprep.subr.bf16.mxu0 0
    %842 = vmatpush1.bf16.msra.mxu0 %v822
    %843 = vmatprep.subr.bf16.mxu0 0
    %844 = vmatpush1.bf16.msra.mxu0 %v823
    %845 = vmatprep.subr.bf16.mxu0 0
    %846 = vmatpush1.bf16.msra.mxu0 %v824
    %847 = vmatprep.subr.bf16.mxu0 0
    %848 = vmatpush1.bf16.msra.mxu0 %v825
    %849 = vmatprep.subr.bf16.mxu0 0
    %850 = vmatpush1.bf16.msra.mxu0 %v826
    %851 = vmatprep.subr.bf16.mxu0 0
    %852 = vmatpush1.bf16.msra.mxu0 0
    %853 = vmatprep.subr.bf16.mxu0 0
    %854 = vmatpush1.bf16.msra.mxu0 0
    %855 = vmatprep.subr.bf16.mxu0 0
    %856 = vmatpush1.bf16.msra.mxu0 0
    %857 = vmatprep.subr.bf16.mxu0 0
    %858 = vmatpush1.bf16.msra.mxu0 0
    %859 = vmatprep.subr.bf16.mxu0 0
    %860 = vmatpush1.bf16.msra.mxu0 0
    %861 = vmatprep.subr.bf16.mxu0 0
    %862 = vmatpush1.bf16.msra.mxu0 0
    %863 = vmatprep.subr.bf16.mxu0 0
    %864 = vmatpush1.bf16.msra.mxu0 0
    %865 = vmatprep.subr.bf16.mxu0 0
    %866 = vmatpush1.bf16.msra.mxu0 0
    %867 = vmatprep.mubr.bf16.mxu0 0
    %868 = vmatmul.mubr.bf16.gmra.mrb[0].mxu0 %v761
    %v869 = vpop.f32.mrb[0].mxu0
    %v870 = vadd.f32 %v785, %v869
    %v871 = vpop.f32.mrb[0].mxu0
    %v872 = vpop.f32.mrb[0].mxu0
    %v873 = vpop.f32.mrb[0].mxu0
    %874 = vdwg.mxu0
    %v875 = vmax.f32 %v870, 0.0
    %v876 = vpack.c.bf16 %v875, %v875
    %877 = vst [vmem:[#allocation2 + $0x8] sm:$0xf] %v876
    %v878 = vld [vmem:[#allocation9] sm:$0xf]
    %v879 = vld [vmem:[#allocation9 + $0x4] sm:$0xf]
    %v880 = vld [vmem:[#allocation9 + $0x8] sm:$0xf]
    %v881 = vld [vmem:[#allocation9 + $0xc] sm:$0xf]
    %v882 = vld [vmem:[#allocation9 + $0x10] sm:$0xf]
    %v883 = vld [vmem:[#allocation9 + $0x14] sm:$0xf]
    %v884 = vld [vmem:[#allocation9 + $0x18] sm:$0xf]
    %v885 = vld [vmem:[#allocation9 + $0x1c] sm:$0xf]
    %v886 = vld [vmem:[#allocation9 + $0x20] sm:$0xf]
    %v887 = vld [vmem:[#allocation9 + $0x24] sm:$0xf]
    %v888 = vld [vmem:[#allocation9 + $0x28] sm:$0xf]
    %v889 = vld [vmem:[#allocation9 + $0x2c] sm:$0xf]
    %v890 = vld [vmem:[#allocation9 + $0x30] sm:$0xf]
    %v891 = vld [vmem:[#allocation9 + $0x34] sm:$0xf]
    %v892 = vld [vmem:[#allocation9 + $0x38] sm:$0xf]
    %v893 = vld [vmem:[#allocation9 + $0x3c] sm:$0xf]
    %v894 = vld [vmem:[%s5] sm:$0x1]
    %v896 = vlaneseq
    %v897 = vshrl.u32 %v896, 7
    %v898 = vsub.s32 0, %v897
    %v899 = vrot.slane %v894, %v898
    %v917 = vunpack.c.l.b16 %v878
    %v918 = vunpack.c.l.b16 %v879
    %v919 = vunpack.c.l.b16 %v880
    %v920 = vunpack.c.l.b16 %v881
    %v921 = vunpack.c.l.b16 %v882
    %v922 = vunpack.c.l.b16 %v883
    %v923 = vunpack.c.l.b16 %v884
    %v924 = vunpack.c.l.b16 %v885
    %v925 = vunpack.c.l.b16 %v886
    %v926 = vunpack.c.l.b16 %v887
    %v927 = vunpack.c.l.b16 %v888
    %v928 = vunpack.c.l.b16 %v889
    %v929 = vunpack.c.l.b16 %v890
    %v930 = vunpack.c.l.b16 %v891
    %v931 = vunpack.c.l.b16 %v892
    %v932 = vunpack.c.l.b16 %v893
    %v933 = vpack.c.b16 %v918, %v917
    %v934 = vpack.c.b16 %v920, %v919
    %v935 = vpack.c.b16 %v922, %v921
    %v936 = vpack.c.b16 %v924, %v923
    %v937 = vpack.c.b16 %v926, %v925
    %v938 = vpack.c.b16 %v928, %v927
    %v939 = vpack.c.b16 %v930, %v929
    %v940 = vpack.c.b16 %v932, %v931
    %949 = vmatprep.subr.bf16.mxu0 0
    %950 = vmatpush1.bf16.msra.mxu0 %v933
    %951 = vmatprep.subr.bf16.mxu0 0
    %952 = vmatpush1.bf16.msra.mxu0 %v934
    %953 = vmatprep.subr.bf16.mxu0 0
    %954 = vmatpush1.bf16.msra.mxu0 %v935
    %955 = vmatprep.subr.bf16.mxu0 0
    %956 = vmatpush1.bf16.msra.mxu0 %v936
    %957 = vmatprep.subr.bf16.mxu0 0
    %958 = vmatpush1.bf16.msra.mxu0 %v937
    %959 = vmatprep.subr.bf16.mxu0 0
    %960 = vmatpush1.bf16.msra.mxu0 %v938
    %961 = vmatprep.subr.bf16.mxu0 0
    %962 = vmatpush1.bf16.msra.mxu0 %v939
    %963 = vmatprep.subr.bf16.mxu0 0
    %964 = vmatpush1.bf16.msra.mxu0 %v940
    %965 = vmatprep.subr.bf16.mxu0 0
    %966 = vmatpush1.bf16.msra.mxu0 0
    %967 = vmatprep.subr.bf16.mxu0 0
    %968 = vmatpush1.bf16.msra.mxu0 0
    %969 = vmatprep.subr.bf16.mxu0 0
    %970 = vmatpush1.bf16.msra.mxu0 0
    %971 = vmatprep.subr.bf16.mxu0 0
    %972 = vmatpush1.bf16.msra.mxu0 0
    %973 = vmatprep.subr.bf16.mxu0 0
    %974 = vmatpush1.bf16.msra.mxu0 0
    %975 = vmatprep.subr.bf16.mxu0 0
    %976 = vmatpush1.bf16.msra.mxu0 0
    %977 = vmatprep.subr.bf16.mxu0 0
    %978 = vmatpush1.bf16.msra.mxu0 0
    %979 = vmatprep.subr.bf16.mxu0 0
    %980 = vmatpush1.bf16.msra.mxu0 0
    %981 = vmatprep.mubr.bf16.mxu0 0
    %982 = vmatmul.mubr.bf16.gmra.mrb[0].mxu0 %v761
    %v983 = vpop.f32.mrb[0].mxu0
    %v984 = vadd.f32 %v899, %v983
    %v985 = vpop.f32.mrb[0].mxu0
    %v986 = vpop.f32.mrb[0].mxu0
    %v987 = vpop.f32.mrb[0].mxu0
    %988 = vdwg.mxu0
    %v989 = vsub.f32 0.0, %v984
    %v990 = vmul.f32 %v989, 1.442695
    %v991 = vpow.pop %v990
    %v992 = vadd.f32 %v991, 1.0
    %v993 = vrcp.pop %v992
    %v994 = vld [vmem:[#allocation2] sm:$0xff]
    %v995 = vld [vmem:[#allocation2 + $0x8] sm:$0xf]
    %v996 = vld [vmem:[#allocation12] sm:$0xf]
    %v997 = vld [vmem:[#allocation12 + $0x4] sm:$0xf]
    %v998 = vld [vmem:[#allocation12 + $0x8] sm:$0xf]
    %v999 = vld [vmem:[#allocation12 + $0xc] sm:$0xf]
    %v1000 = vld [vmem:[#allocation12 + $0x10] sm:$0xf]
    %v1001 = vld [vmem:[#allocation12 + $0x14] sm:$0xf]
    %v1002 = vld [vmem:[#allocation12 + $0x18] sm:$0xf]
    %v1003 = vld [vmem:[#allocation12 + $0x1c] sm:$0xf]
    %v1004 = vld [vmem:[#allocation12 + $0x20] sm:$0xf]
    %v1005 = vld [vmem:[#allocation12 + $0x24] sm:$0xf]
    %v1006 = vld [vmem:[#allocation12 + $0x28] sm:$0xf]
    %v1007 = vld [vmem:[#allocation12 + $0x2c] sm:$0xf]
    %v1008 = vld [vmem:[#allocation12 + $0x30] sm:$0xf]
    %v1009 = vld [vmem:[#allocation12 + $0x34] sm:$0xf]
    %v1010 = vld [vmem:[#allocation12 + $0x38] sm:$0xf]
    %v1011 = vld [vmem:[#allocation12 + $0x3c] sm:$0xf]
    %v1012 = vld [vmem:[#allocation12 + $0x40] sm:$0xf]
    %v1013 = vld [vmem:[#allocation12 + $0x44] sm:$0xf]
    %v1014 = vld [vmem:[#allocation12 + $0x48] sm:$0xf]
    %v1015 = vld [vmem:[#allocation12 + $0x4c] sm:$0xf]
    %v1016 = vld [vmem:[#allocation12 + $0x50] sm:$0xf]
    %v1017 = vld [vmem:[#allocation12 + $0x54] sm:$0xf]
    %v1018 = vld [vmem:[#allocation12 + $0x58] sm:$0xf]
    %v1019 = vld [vmem:[#allocation12 + $0x5c] sm:$0xf]
    %v1020 = vld [vmem:[#allocation12 + $0x60] sm:$0xf]
    %v1021 = vld [vmem:[#allocation12 + $0x64] sm:$0xf]
    %v1022 = vld [vmem:[#allocation12 + $0x68] sm:$0xf]
    %v1023 = vld [vmem:[#allocation12 + $0x6c] sm:$0xf]
    %v1024 = vld [vmem:[#allocation12 + $0x70] sm:$0xf]
    %v1025 = vld [vmem:[#allocation12 + $0x74] sm:$0xf]
    %v1026 = vld [vmem:[#allocation12 + $0x78] sm:$0xf]
    %v1027 = vld [vmem:[#allocation12 + $0x7c] sm:$0xf]
    %v1028 = vld [vmem:[#allocation12 + $0x80] sm:$0xf]
    %v1029 = vld [vmem:[#allocation12 + $0x84] sm:$0xf]
    %v1030 = vld [vmem:[#allocation12 + $0x88] sm:$0xf]
    %v1031 = vld [vmem:[#allocation12 + $0x8c] sm:$0xf]
    %v1032 = vld [vmem:[#allocation12 + $0x90] sm:$0xf]
    %v1033 = vld [vmem:[#allocation12 + $0x94] sm:$0xf]
    %v1034 = vld [vmem:[#allocation12 + $0x98] sm:$0xf]
    %v1035 = vld [vmem:[#allocation12 + $0x9c] sm:$0xf]
    %v1036 = vld [vmem:[#allocation12 + $0xa0] sm:$0xf]
    %v1037 = vld [vmem:[#allocation12 + $0xa4] sm:$0xf]
    %v1038 = vld [vmem:[#allocation12 + $0xa8] sm:$0xf]
    %v1039 = vld [vmem:[#allocation12 + $0xac] sm:$0xf]
    %v1040 = vld [vmem:[#allocation12 + $0xb0] sm:$0xf]
    %v1041 = vld [vmem:[#allocation12 + $0xb4] sm:$0xf]
    %v1042 = vld [vmem:[#allocation12 + $0xb8] sm:$0xf]
    %v1043 = vld [vmem:[#allocation12 + $0xbc] sm:$0xf]
    %v1044 = vld [vmem:[%s9] sm:$0x1]
    %v1046 = vlaneseq
    %v1047 = vshrl.u32 %v1046, 7
    %v1048 = vsub.s32 0, %v1047
    %v1049 = vrot.slane %v1044, %v1048
    %v1053 = vunpack.c.l.b16 %v994
    %v1054 = vunpack.c.h.b16 %v994
    %v1055 = vunpack.c.l.b16 %v995
    %v1056 = vpack.c.b16 %v1053, %v1053
    %v1057 = vpack.c.b16 %v1054, %v1054
    %v1058 = vpack.c.b16 %v1055, %v1055
    %v1110 = vunpack.c.l.b16 %v996
    %v1111 = vunpack.c.l.b16 %v997
    %v1112 = vunpack.c.l.b16 %v998
    %v1113 = vunpack.c.l.b16 %v999
    %v1114 = vunpack.c.l.b16 %v1000
    %v1115 = vunpack.c.l.b16 %v1001
    %v1116 = vunpack.c.l.b16 %v1002
    %v1117 = vunpack.c.l.b16 %v1003
    %v1118 = vunpack.c.l.b16 %v1004
    %v1119 = vunpack.c.l.b16 %v1005
    %v1120 = vunpack.c.l.b16 %v1006
    %v1121 = vunpack.c.l.b16 %v1007
    %v1122 = vunpack.c.l.b16 %v1008
    %v1123 = vunpack.c.l.b16 %v1009
    %v1124 = vunpack.c.l.b16 %v1010
    %v1125 = vunpack.c.l.b16 %v1011
    %v1126 = vunpack.c.l.b16 %v1012
    %v1127 = vunpack.c.l.b16 %v1013
    %v1128 = vunpack.c.l.b16 %v1014
    %v1129 = vunpack.c.l.b16 %v1015
    %v1130 = vunpack.c.l.b16 %v1016
    %v1131 = vunpack.c.l.b16 %v1017
    %v1132 = vunpack.c.l.b16 %v1018
    %v1133 = vunpack.c.l.b16 %v1019
    %v1134 = vunpack.c.l.b16 %v1020
    %v1135 = vunpack.c.l.b16 %v1021
    %v1136 = vunpack.c.l.b16 %v1022
    %v1137 = vunpack.c.l.b16 %v1023
    %v1138 = vunpack.c.l.b16 %v1024
    %v1139 = vunpack.c.l.b16 %v1025
    %v1140 = vunpack.c.l.b16 %v1026
    %v1141 = vunpack.c.l.b16 %v1027
    %v1142 = vunpack.c.l.b16 %v1028
    %v1143 = vunpack.c.l.b16 %v1029
    %v1144 = vunpack.c.l.b16 %v1030
    %v1145 = vunpack.c.l.b16 %v1031
    %v1146 = vunpack.c.l.b16 %v1032
    %v1147 = vunpack.c.l.b16 %v1033
    %v1148 = vunpack.c.l.b16 %v1034
    %v1149 = vunpack.c.l.b16 %v1035
    %v1150 = vunpack.c.l.b16 %v1036
    %v1151 = vunpack.c.l.b16 %v1037
    %v1152 = vunpack.c.l.b16 %v1038
    %v1153 = vunpack.c.l.b16 %v1039
    %v1154 = vunpack.c.l.b16 %v1040
    %v1155 = vunpack.c.l.b16 %v1041
    %v1156 = vunpack.c.l.b16 %v1042
    %v1157 = vunpack.c.l.b16 %v1043
    %v1158 = vpack.c.b16 %v1111, %v1110
    %v1159 = vpack.c.b16 %v1113, %v1112
    %v1160 = vpack.c.b16 %v1115, %v1114
    %v1161 = vpack.c.b16 %v1117, %v1116
    %v1162 = vpack.c.b16 %v1119, %v1118
    %v1163 = vpack.c.b16 %v1121, %v1120
    %v1164 = vpack.c.b16 %v1123, %v1122
    %v1165 = vpack.c.b16 %v1125, %v1124
    %v1166 = vpack.c.b16 %v1127, %v1126
    %v1167 = vpack.c.b16 %v1129, %v1128
    %v1168 = vpack.c.b16 %v1131, %v1130
    %v1169 = vpack.c.b16 %v1133, %v1132
    %v1170 = vpack.c.b16 %v1135, %v1134
    %v1171 = vpack.c.b16 %v1137, %v1136
    %v1172 = vpack.c.b16 %v1139, %v1138
    %v1173 = vpack.c.b16 %v1141, %v1140
    %v1174 = vpack.c.b16 %v1143, %v1142
    %v1175 = vpack.c.b16 %v1145, %v1144
    %v1176 = vpack.c.b16 %v1147, %v1146
    %v1177 = vpack.c.b16 %v1149, %v1148
    %v1178 = vpack.c.b16 %v1151, %v1150
    %v1179 = vpack.c.b16 %v1153, %v1152
    %v1180 = vpack.c.b16 %v1155, %v1154
    %v1181 = vpack.c.b16 %v1157, %v1156
    %1206 = vmatprep.subr.bf16.mxu0 0
    %1207 = vmatpush1.bf16.msra.mxu0 %v1158
    %1208 = vmatprep.subr.bf16.mxu0 0
    %1209 = vmatpush1.bf16.msra.mxu0 %v1159
    %1210 = vmatprep.subr.bf16.mxu0 0
    %1211 = vmatpush1.bf16.msra.mxu0 %v1160
    %1212 = vmatprep.subr.bf16.mxu0 0
    %1213 = vmatpush1.bf16.msra.mxu0 %v1161
    %1214 = vmatprep.subr.bf16.mxu0 0
    %1215 = vmatpush1.bf16.msra.mxu0 %v1162
    %1216 = vmatprep.subr.bf16.mxu0 0
    %1217 = vmatpush1.bf16.msra.mxu0 %v1163
    %1218 = vmatprep.subr.bf16.mxu0 0
    %1219 = vmatpush1.bf16.msra.mxu0 %v1164
    %1220 = vmatprep.subr.bf16.mxu0 0
    %1221 = vmatpush1.bf16.msra.mxu0 %v1165
    %1222 = vmatprep.subr.bf16.mxu0 0
    %1223 = vmatpush1.bf16.msra.mxu0 %v1166
    %1224 = vmatprep.subr.bf16.mxu0 0
    %1225 = vmatpush1.bf16.msra.mxu0 %v1167
    %1226 = vmatprep.subr.bf16.mxu0 0
    %1227 = vmatpush1.bf16.msra.mxu0 %v1168
    %1228 = vmatprep.subr.bf16.mxu0 0
    %1229 = vmatpush1.bf16.msra.mxu0 %v1169
    %1230 = vmatprep.subr.bf16.mxu0 0
    %1231 = vmatpush1.bf16.msra.mxu0 %v1170
    %1232 = vmatprep.subr.bf16.mxu0 0
    %1233 = vmatpush1.bf16.msra.mxu0 %v1171
    %1234 = vmatprep.subr.bf16.mxu0 0
    %1235 = vmatpush1.bf16.msra.mxu0 %v1172
    %1236 = vmatprep.subr.bf16.mxu0 0
    %1237 = vmatpush1.bf16.msra.mxu0 %v1173
    %1238 = vmatprep.mubr.bf16.mxu0 %v1057
    %1239 = vmatmul.mubr.bf16.gmra.mrb[0].mxu0 %v1056
    %v1240 = vpop.f32.mrb[0].mxu0
    %v1241 = vadd.f32 %v1049, %v1240
    %v1242 = vpop.f32.mrb[0].mxu0
    %v1243 = vpop.f32.mrb[0].mxu0
    %v1244 = vpop.f32.mrb[0].mxu0
    %1245 = vdwg.mxu0
    %1246 = vmatprep.subr.bf16.mxu0 0
    %1247 = vmatpush1.bf16.msra.mxu0 %v1174
    %1248 = vmatprep.subr.bf16.mxu0 0
    %1249 = vmatpush1.bf16.msra.mxu0 %v1175
    %1250 = vmatprep.subr.bf16.mxu0 0
    %1251 = vmatpush1.bf16.msra.mxu0 %v1176
    %1252 = vmatprep.subr.bf16.mxu0 0
    %1253 = vmatpush1.bf16.msra.mxu0 %v1177
    %1254 = vmatprep.subr.bf16.mxu0 0
    %1255 = vmatpush1.bf16.msra.mxu0 %v1178
    %1256 = vmatprep.subr.bf16.mxu0 0
    %1257 = vmatpush1.bf16.msra.mxu0 %v1179
    %1258 = vmatprep.subr.bf16.mxu0 0
    %1259 = vmatpush1.bf16.msra.mxu0 %v1180
    %1260 = vmatprep.subr.bf16.mxu0 0
    %1261 = vmatpush1.bf16.msra.mxu0 %v1181
    %1262 = vmatprep.subr.bf16.mxu0 0
    %1263 = vmatpush1.bf16.msra.mxu0 0
    %1264 = vmatprep.subr.bf16.mxu0 0
    %1265 = vmatpush1.bf16.msra.mxu0 0
    %1266 = vmatprep.subr.bf16.mxu0 0
    %1267 = vmatpush1.bf16.msra.mxu0 0
    %1268 = vmatprep.subr.bf16.mxu0 0
    %1269 = vmatpush1.bf16.msra.mxu0 0
    %1270 = vmatprep.subr.bf16.mxu0 0
    %1271 = vmatpush1.bf16.msra.mxu0 0
    %1272 = vmatprep.subr.bf16.mxu0 0
    %1273 = vmatpush1.bf16.msra.mxu0 0
    %1274 = vmatprep.subr.bf16.mxu0 0
    %1275 = vmatpush1.bf16.msra.mxu0 0
    %1276 = vmatprep.subr.bf16.mxu0 0
    %1277 = vmatpush1.bf16.msra.mxu0 0
    %1278 = vmatprep.mubr.bf16.mxu0 0
    %1279 = vmatmul.mubr.bf16.gmra.mrb[0].mxu0 %v1058
    %v1280 = vpop.f32.mrb[0].mxu0
    %v1281 = vadd.f32 %v1241, %v1280
    %v1282 = vpop.f32.mrb[0].mxu0
    %v1283 = vpop.f32.mrb[0].mxu0
    %v1284 = vpop.f32.mrb[0].mxu0
    %1285 = vdwg.mxu0
    %v1286 = vsub.f32 0.0, %v1281
    %v1287 = vmul.f32 %v1286, 1.442695
    %v1288 = vpow.pop %v1287
    %v1289 = vadd.f32 %v1288, 1.0
    %v1290 = vrcp.pop %v1289
    %v1291 = vmul.f32 %v993, 0.5
    %v1292 = vmul.f32 %v1290, 0.5
    %v1293 = vadd.f32 %v1291, %v1292
    %1294 = vst [vmem:[#allocation14] sm:$0xff] %v1293
    // Predicated region
    $region66: #{tpu_custom_call.1} parent=1 // pred_check
      _
    $region67: #{tpu_custom_call.1} parent=1 // pred_check_branch
      %1296 = sbr.rel (0) target = $region69
    $region68: #{tpu_custom_call.1} parent=1 // pred_region
      %s1298 = ssub.s32 128, 128
      %1299 = vsyncadd [#allocation5], %s1298
      %s1301 = sshll.u32 [#allocation14], 4
      %s1302 = int_to_ptr.vmem [resolvable:$true] %s1301
      %1304 = dma.vmem_to_hbm [thread:$0]  %s1302, 128, %s10, [#allocation5]
    $region69: #{tpu_custom_call.1} parent=1 // pred_fallthru
      _
    // Predicated region
    $region70: #{tpu_custom_call.1} parent=1 // pred_check
      _
    $region71: #{tpu_custom_call.1} parent=1 // pred_check_branch
      %1306 = sbr.rel (0) target = $region73
    $region72: #{tpu_custom_call.1} parent=1 // pred_region
      %1307 = dma.done [#allocation5], 128
    $region73: #{tpu_custom_call.1} parent=1 // pred_fallthru
      _
    %1308 = vsyncpa [#allocation4], 1
    %1309 = vsyncpa [#allocation7], 1
    %1310 = vsyncpa [#allocation10], 1
    %1311 = vsyncpa [#allocation13], 1
    %1312 = vsyncpa [#allocation5], 1

// kernel: tpu_custom_call.1
$region0: #{tpu_custom_call.1}
  #allocation0 [shape = 'u32[]', space=smem, size = 0x4, offset = 0x4, fixed_abs, tag = 'smem constant byte address 0x4 - core index']
  #allocation1 [shape = 'u32[144,128]{1,0:T(1,128)}', space=vmem, size = 0x12000, scoped, tag = 'internal scratch']
  #allocation2 [shape = 'bf16[8,384]{1,0:T(8,128)(2,1)}', space=vmem, size = 0x1800, scoped, tag = 'scratch operand']
  %s0 = inlined_call_operand.hbm [shape: bf16[8,32], index: 0, kind: input, shape index: {}]
  %s1 = inlined_call_operand.hbm [shape: bf16[3,32,128], index: 1, kind: input, shape index: {}]
  %s2 = inlined_call_operand.hbm [shape: bf16[2,128,128], index: 2, kind: input, shape index: {}]
  %s3 = inlined_call_operand.vmem [shape: f32[3,1,128], index: 3, kind: input, shape index: {}]
  %s4 = inlined_call_operand.hbm [shape: bf16[128,128], index: 4, kind: input, shape index: {}]
  %s5 = inlined_call_operand.vmem [shape: f32[1,128], index: 5, kind: input, shape index: {}]
  %s6 = inlined_call_operand.hbm [shape: bf16[3,128,128], index: 6, kind: input, shape index: {}]
  %s7 = inlined_call_operand.vmem [shape: f32[3,1,128], index: 7, kind: input, shape index: {}]
  %s8 = inlined_call_operand.hbm [shape: bf16[384,128], index: 8, kind: input, shape index: {}]
  %s9 = inlined_call_operand.vmem [shape: f32[1,128], index: 9, kind: input, shape index: {}]
  %s10 = inlined_call_operand.hbm [shape: f32[8,128], index: 10, kind: output, shape index: {}]
  %s11 = sld [smem:[#allocation0]]
  $region74: #{tpu_custom_call.1} parent=0
    _
  %s13 = ssub.s32 1, %s11
  %s14 = scalar_select 0, %s13, %s11
  $region1: #{tpu_custom_call.1} parent=0
    #allocation3 [shape = 'u8[2048]{0}', space=vmem, size = 0x800, scoped, tag = 'input window, operand 0, single buffered']
    #allocation4 [shape = 's32[1]{0}', space=sflag, size = 0x4, scoped, tag = 'scoped memory for tpu_custom_call.1']
    #allocation5 [shape = 's32[1]{0}', space=sflag, size = 0x4, scoped, tag = 'scoped memory for tpu_custom_call.1']
    #allocation6 [shape = 'u8[24576]{0}', space=vmem, size = 0x6000, scoped, tag = 'input window, operand 1, single buffered']
    #allocation7 [shape = 's32[1]{0}', space=sflag, size = 0x4, scoped, tag = 'scoped memory for tpu_custom_call.1']
    #allocation8 [shape = 'u8[65536]{0}', space=vmem, size = 0x10000, scoped, tag = 'input window, operand 2, single buffered']
    #allocation9 [shape = 'u8[32768]{0}', space=vmem, size = 0x8000, scoped, tag = 'input window, operand 4, single buffered']
    #allocation10 [shape = 's32[1]{0}', space=sflag, size = 0x4, scoped, tag = 'scoped memory for tpu_custom_call.1']
    #allocation11 [shape = 'u8[98304]{0}', space=vmem, size = 0x18000, scoped, tag = 'input window, operand 6, single buffered']
    #allocation12 [shape = 'u8[98304]{0}', space=vmem, size = 0x18000, scoped, tag = 'input window, operand 8, single buffered']
    #allocation13 [shape = 's32[1]{0}', space=sflag, size = 0x4, scoped, tag = 'scoped memory for tpu_custom_call.1']
    #allocation14 [shape = 'u8[4096]{0}', space=vmem, size = 0x1000, scoped, tag = 'output window, operand 0, single buffered']
    %15 = vsyncpa [#allocation4], 0
    %16 = vsyncpa [#allocation7], 0
    %17 = vsyncpa [#allocation10], 0
    %18 = vsyncpa [#allocation13], 0
    %19 = vsyncpa [#allocation5], 0
    // Predicated region
    $region2: #{tpu_custom_call.1} parent=1 // pred_check
      _
    $region3: #{tpu_custom_call.1} parent=1 // pred_check_branch
      %21 = sbr.rel (0) target = $region5
    $region4: #{tpu_custom_call.1} parent=1 // pred_region
      %s23 = ssub.s32 64, 64
      %24 = vsyncadd [#allocation4], %s23
      %s26 = sshll.u32 [#allocation3], 4
      %s27 = int_to_ptr.vmem [resolvable:$true] %s26
      %29 = dma.hbm_to_vmem [thread:$0]  %s0, 64, %s27, [#allocation4]
    $region5: #{tpu_custom_call.1} parent=1 // pred_fallthru
      _
    // Predicated region
    $region6: #{tpu_custom_call.1} parent=1 // pred_check
      _
    $region7: #{tpu_custom_call.1} parent=1 // pred_check_branch
      %31 = sbr.rel (0) target = $region9
    $region8: #{tpu_custom_call.1} parent=1 // pred_region
      %s33 = ssub.s32 768, 768
      %34 = vsyncadd [#allocation7], %s33
      %s35 = sshll.u32 [#allocation6], 4
      %s36 = int_to_ptr.vmem [resolvable:$true] %s35
      %41 = dma.hbm_to_vmem [thread:$0]  %s1, 768, %s36, [#allocation7], 64, 64, 4
    $region9: #{tpu_custom_call.1} parent=1 // pred_fallthru
      _
    // Predicated region
    $region10: #{tpu_custom_call.1} parent=1 // pred_check
      _
    $region11: #{tpu_custom_call.1} parent=1 // pred_check_branch
      %43 = sbr.rel (0) target = $region13
    $region12: #{tpu_custom_call.1} parent=1 // pred_region
      %s45 = ssub.s32 2048, 2048
      %46 = vsyncadd [#allocation7], %s45
      %s47 = sshll.u32 [#allocation8], 4
      %s48 = int_to_ptr.vmem [resolvable:$true] %s47
      %53 = dma.hbm_to_vmem [thread:$0]  %s2, 2048, %s48, [#allocation7], 64, 64, 4
    $region13: #{tpu_custom_call.1} parent=1 // pred_fallthru
      _
    // Predicated region
    $region14: #{tpu_custom_call.1} parent=1 // pred_check
      _
    $region15: #{tpu_custom_call.1} parent=1 // pred_check_branch
      %55 = sbr.rel (0) target = $region17
    $region16: #{tpu_custom_call.1} parent=1 // pred_region
      _
    $region17: #{tpu_custom_call.1} parent=1 // pred_fallthru
      _
    // Predicated region
    $region18: #{tpu_custom_call.1} parent=1 // pred_check
      _
    $region19: #{tpu_custom_call.1} parent=1 // pred_check_branch
      %57 = sbr.rel (0) target = $region21
    $region20: #{tpu_custom_call.1} parent=1 // pred_region
      %s59 = ssub.s32 1024, 1024
      %60 = vsyncadd [#allocation10], %s59
      %s61 = sshll.u32 [#allocation9], 4
      %s62 = int_to_ptr.vmem [resolvable:$true] %s61
      %67 = dma.hbm_to_vmem [thread:$0]  %s4, 1024, %s62, [#allocation10], 64, 64, 4
    $region21: #{tpu_custom_call.1} parent=1 // pred_fallthru
      _
    // Predicated region
    $region22: #{tpu_custom_call.1} parent=1 // pred_check
      _
    $region23: #{tpu_custom_call.1} parent=1 // pred_check_branch
      %69 = sbr.rel (0) target = $region25
    $region24: #{tpu_custom_call.1} parent=1 // pred_region
      _
    $region25: #{tpu_custom_call.1} parent=1 // pred_fallthru
      _
    // Predicated region
    $region26: #{tpu_custom_call.1} parent=1 // pred_check
      _
    $region27: #{tpu_custom_call.1} parent=1 // pred_check_branch
      %71 = sbr.rel (0) target = $region29
    $region28: #{tpu_custom_call.1} parent=1 // pred_region
      %s73 = ssub.s32 3072, 3072
      %74 = vsyncadd [#allocation10], %s73
      %s75 = sshll.u32 [#allocation11], 4
      %s76 = int_to_ptr.vmem [resolvable:$true] %s75
      %81 = dma.hbm_to_vmem [thread:$0]  %s6, 3072, %s76, [#allocation10], 64, 64, 4
    $region29: #{tpu_custom_call.1} parent=1 // pred_fallthru
      _
    // Predicated region
    $region30: #{tpu_custom_call.1} parent=1 // pred_check
      _
    $region31: #{tpu_custom_call.1} parent=1 // pred_check_branch
      %83 = sbr.rel (0) target = $region33
    $region32: #{tpu_custom_call.1} parent=1 // pred_region
      _
    $region33: #{tpu_custom_call.1} parent=1 // pred_fallthru
      _
    // Predicated region
    $region34: #{tpu_custom_call.1} parent=1 // pred_check
      _
    $region35: #{tpu_custom_call.1} parent=1 // pred_check_branch
      %85 = sbr.rel (0) target = $region37
    $region36: #{tpu_custom_call.1} parent=1 // pred_region
      %s87 = ssub.s32 3072, 3072
      %88 = vsyncadd [#allocation13], %s87
      %s89 = sshll.u32 [#allocation12], 4
      %s90 = int_to_ptr.vmem [resolvable:$true] %s89
      %95 = dma.hbm_to_vmem [thread:$0]  %s8, 3072, %s90, [#allocation13], 64, 64, 4
    $region37: #{tpu_custom_call.1} parent=1 // pred_fallthru
      _
    // Predicated region
    $region38: #{tpu_custom_call.1} parent=1 // pred_check
      _
    $region39: #{tpu_custom_call.1} parent=1 // pred_check_branch
      %97 = sbr.rel (0) target = $region41
    $region40: #{tpu_custom_call.1} parent=1 // pred_region
      _
    $region41: #{tpu_custom_call.1} parent=1 // pred_fallthru
      _
    // Predicated region
    $region42: #{tpu_custom_call.1} parent=1 // pred_check
      _
    $region43: #{tpu_custom_call.1} parent=1 // pred_check_branch
      %99 = sbr.rel (0) target = $region45
    $region44: #{tpu_custom_call.1} parent=1 // pred_region
      %100 = dma.done [#allocation4], 64
    $region45: #{tpu_custom_call.1} parent=1 // pred_fallthru
      _
    // Predicated region
    $region46: #{tpu_custom_call.1} parent=1 // pred_check
      _
    $region47: #{tpu_custom_call.1} parent=1 // pred_check_branch
      %102 = sbr.rel (0) target = $region49
    $region48: #{tpu_custom_call.1} parent=1 // pred_region
      %103 = dma.done [#allocation7], 768
    $region49: #{tpu_custom_call.1} parent=1 // pred_fallthru
      _
    // Predicated region
    $region50: #{tpu_custom_call.1} parent=1 // pred_check
      _
    $region51: #{tpu_custom_call.1} parent=1 // pred_check_branch
      %105 = sbr.rel (0) target = $region53
    $region52: #{tpu_custom_call.1} parent=1 // pred_region
      %106 = dma.done [#allocation7], 2048
    $region53: #{tpu_custom_call.1} parent=1 // pred_fallthru
      _
    // Predicated region
    $region54: #{tpu_custom_call.1} parent=1 // pred_check
      _
    $region55: #{tpu_custom_call.1} parent=1 // pred_check_branch
      %108 = sbr.rel (0) target = $region57
    $region56: #{tpu_custom_call.1} parent=1 // pred_region
      %109 = dma.done [#allocation10], 1024
    $region57: #{tpu_custom_call.1} parent=1 // pred_fallthru
      _
    // Predicated region
    $region58: #{tpu_custom_call.1} parent=1 // pred_check
      _
    $region59: #{tpu_custom_call.1} parent=1 // pred_check_branch
      %111 = sbr.rel (0) target = $region61
    $region60: #{tpu_custom_call.1} parent=1 // pred_region
      %112 = dma.done [#allocation10], 3072
    $region61: #{tpu_custom_call.1} parent=1 // pred_fallthru
      _
    // Predicated region
    $region62: #{tpu_custom_call.1} parent=1 // pred_check
      _
    $region63: #{tpu_custom_call.1} parent=1 // pred_check_branch
      %114 = sbr.rel (0) target = $region65
    $region64: #{tpu_custom_call.1} parent=1 // pred_region
      %115 = dma.done [#allocation13], 3072
    $region65: #{tpu_custom_call.1} parent=1 // pred_fallthru
      _
    %v117 = vld [vmem:[#allocation3] sm:$0xf]
    %v118 = vld [vmem:[#allocation6] sm:$0xf]
    %v119 = vld [vmem:[#allocation6 + $0x4] sm:$0xf]
    %v120 = vld [vmem:[#allocation6 + $0x8] sm:$0xf]
    %v121 = vld [vmem:[#allocation6 + $0xc] sm:$0xf]
    %v122 = vld [vmem:[%s3] sm:$0x1]
    %v124 = vlaneseq
    %v125 = vshrl.u32 %v124, 7
    %v126 = vsub.s32 0, %v125
    %v127 = vrot.slane %v122, %v126
    %v133 = vunpack.c.l.b16 %v118
    %v134 = vunpack.c.l.b16 %v119
    %v135 = vunpack.c.l.b16 %v120
    %v136 = vunpack.c.l.b16 %v121
    %v137 = vpack.c.b16 %v134, %v133
    %v138 = vpack.c.b16 %v136, %v135
    %vm141 = vcmask 261120
    %v143 = vsel %vm141, %v117, 0
    %145 = vmatprep.subr.bf16.mxu0 0
    %146 = vmatpush1.bf16.msra.mxu0 %v137
    %147 = vmatprep.subr.bf16.mxu0 0
    %148 = vmatpush1.bf16.msra.mxu0 %v138
    %149 = vmatprep.subr.bf16.mxu0 0
    %150 = vmatpush1.bf16.msra.mxu0 0
    %151 = vmatprep.subr.bf16.mxu0 0
    %152 = vmatpush1.bf16.msra.mxu0 0
    %153 = vmatprep.subr.bf16.mxu0 0
    %154 = vmatpush1.bf16.msra.mxu0 0
    %155 = vmatprep.subr.bf16.mxu0 0
    %156 = vmatpush1.bf16.msra.mxu0 0
    %157 = vmatprep.subr.bf16.mxu0 0
    %158 = vmatpush1.bf16.msra.mxu0 0
    %159 = vmatprep.subr.bf16.mxu0 0
    %160 = vmatpush1.bf16.msra.mxu0 0
    %161 = vmatprep.subr.bf16.mxu0 0
    %162 = vmatpush1.bf16.msra.mxu0 0
    %163 = vmatprep.subr.bf16.mxu0 0
    %164 = vmatpush1.bf16.msra.mxu0 0
    %165 = vmatprep.subr.bf16.mxu0 0
    %166 = vmatpush1.bf16.msra.mxu0 0
    %167 = vmatprep.subr.bf16.mxu0 0
    %168 = vmatpush1.bf16.msra.mxu0 0
    %169 = vmatprep.subr.bf16.mxu0 0
    %170 = vmatpush1.bf16.msra.mxu0 0
    %171 = vmatprep.subr.bf16.mxu0 0
    %172 = vmatpush1.bf16.msra.mxu0 0
    %173 = vmatprep.subr.bf16.mxu0 0
    %174 = vmatpush1.bf16.msra.mxu0 0
    %175 = vmatprep.subr.bf16.mxu0 0
    %176 = vmatpush1.bf16.msra.mxu0 0
    %177 = vmatprep.mubr.bf16.mxu0 0
    %178 = vmatmul.mubr.bf16.gmra.mrb[0].mxu0 %v143
    %v179 = vpop.f32.mrb[0].mxu0
    %v180 = vadd.f32 %v127, %v179
    %v181 = vpop.f32.mrb[0].mxu0
    %v182 = vpop.f32.mrb[0].mxu0
    %v183 = vpop.f32.mrb[0].mxu0
    %184 = vdwg.mxu0
    %v185 = vmax.f32 %v180, 0.0
    %v186 = vpack.c.bf16 %v185, %v185
    %v187 = vld [vmem:[#allocation11] sm:$0xf]
    %v188 = vld [vmem:[#allocation11 + $0x4] sm:$0xf]
    %v189 = vld [vmem:[#allocation11 + $0x8] sm:$0xf]
    %v190 = vld [vmem:[#allocation11 + $0xc] sm:$0xf]
    %v191 = vld [vmem:[#allocation11 + $0x10] sm:$0xf]
    %v192 = vld [vmem:[#allocation11 + $0x14] sm:$0xf]
    %v193 = vld [vmem:[#allocation11 + $0x18] sm:$0xf]
    %v194 = vld [vmem:[#allocation11 + $0x1c] sm:$0xf]
    %v195 = vld [vmem:[#allocation11 + $0x20] sm:$0xf]
    %v196 = vld [vmem:[#allocation11 + $0x24] sm:$0xf]
    %v197 = vld [vmem:[#allocation11 + $0x28] sm:$0xf]
    %v198 = vld [vmem:[#allocation11 + $0x2c] sm:$0xf]
    %v199 = vld [vmem:[#allocation11 + $0x30] sm:$0xf]
    %v200 = vld [vmem:[#allocation11 + $0x34] sm:$0xf]
    %v201 = vld [vmem:[#allocation11 + $0x38] sm:$0xf]
    %v202 = vld [vmem:[#allocation11 + $0x3c] sm:$0xf]
    %v203 = vld [vmem:[%s7] sm:$0x1]
    %v205 = vlaneseq
    %v206 = vshrl.u32 %v205, 7
    %v207 = vsub.s32 0, %v206
    %v208 = vrot.slane %v203, %v207
    %v226 = vunpack.c.l.b16 %v187
    %v227 = vunpack.c.l.b16 %v188
    %v228 = vunpack.c.l.b16 %v189
    %v229 = vunpack.c.l.b16 %v190
    %v230 = vunpack.c.l.b16 %v191
    %v231 = vunpack.c.l.b16 %v192
    %v232 = vunpack.c.l.b16 %v193
    %v233 = vunpack.c.l.b16 %v194
    %v234 = vunpack.c.l.b16 %v195
    %v235 = vunpack.c.l.b16 %v196
    %v236 = vunpack.c.l.b16 %v197
    %v237 = vunpack.c.l.b16 %v198
    %v238 = vunpack.c.l.b16 %v199
    %v239 = vunpack.c.l.b16 %v200
    %v240 = vunpack.c.l.b16 %v201
    %v241 = vunpack.c.l.b16 %v202
    %v242 = vpack.c.b16 %v227, %v226
    %v243 = vpack.c.b16 %v229, %v228
    %v244 = vpack.c.b16 %v231, %v230
    %v245 = vpack.c.b16 %v233, %v232
    %v246 = vpack.c.b16 %v235, %v234
    %v247 = vpack.c.b16 %v237, %v236
    %v248 = vpack.c.b16 %v239, %v238
    %v249 = vpack.c.b16 %v241, %v240
    %258 = vmatprep.subr.bf16.mxu0 0
    %259 = vmatpush1.bf16.msra.mxu0 %v242
    %260 = vmatprep.subr.bf16.mxu0 0
    %261 = vmatpush1.bf16.msra.mxu0 %v243
    %262 = vmatprep.subr.bf16.mxu0 0
    %263 = vmatpush1.bf16.msra.mxu0 %v244
    %264 = vmatprep.subr.bf16.mxu0 0
    %265 = vmatpush1.bf16.msra.mxu0 %v245
    %266 = vmatprep.subr.bf16.mxu0 0
    %267 = vmatpush1.bf16.msra.mxu0 %v246
    %268 = vmatprep.subr.bf16.mxu0 0
    %269 = vmatpush1.bf16.msra.mxu0 %v247
    %270 = vmatprep.subr.bf16.mxu0 0
    %271 = vmatpush1.bf16.msra.mxu0 %v248
    %272 = vmatprep.subr.bf16.mxu0 0
    %273 = vmatpush1.bf16.msra.mxu0 %v249
    %274 = vmatprep.subr.bf16.mxu0 0
    %275 = vmatpush1.bf16.msra.mxu0 0
    %276 = vmatprep.subr.bf16.mxu0 0
    %277 = vmatpush1.bf16.msra.mxu0 0
    %278 = vmatprep.subr.bf16.mxu0 0
    %279 = vmatpush1.bf16.msra.mxu0 0
    %280 = vmatprep.subr.bf16.mxu0 0
    %281 = vmatpush1.bf16.msra.mxu0 0
    %282 = vmatprep.subr.bf16.mxu0 0
    %283 = vmatpush1.bf16.msra.mxu0 0
    %284 = vmatprep.subr.bf16.mxu0 0
    %285 = vmatpush1.bf16.msra.mxu0 0
    %286 = vmatprep.subr.bf16.mxu0 0
    %287 = vmatpush1.bf16.msra.mxu0 0
    %288 = vmatprep.subr.bf16.mxu0 0
    %289 = vmatpush1.bf16.msra.mxu0 0
    %290 = vmatprep.mubr.bf16.mxu0 0
    %291 = vmatmul.mubr.bf16.gmra.mrb[0].mxu0 %v186
    %v292 = vpop.f32.mrb[0].mxu0
    %v293 = vadd.f32 %v208, %v292
    %v294 = vpop.f32.mrb[0].mxu0
    %v295 = vpop.f32.mrb[0].mxu0
    %v296 = vpop.f32.mrb[0].mxu0
    %297 = vdwg.mxu0
    %v298 = vmax.f32 %v293, 0.0
    %v299 = vpack.c.bf16 %v298, %v298
    %300 = vst [vmem:[#allocation2] sm:$0xf] %v299
    %s301 = scalar_lea.vmem [#allocation6], 16
    %v302 = vld [vmem:[%s301] sm:$0xf]
    %v303 = vld [vmem:[%s301 + $0x4] sm:$0xf]
    %v304 = vld [vmem:[%s301 + $0x8] sm:$0xf]
    %v305 = vld [vmem:[%s301 + $0xc] sm:$0xf]
    %v306 = vld [vmem:[#allocation8] sm:$0xf]
    %v307 = vld [vmem:[#allocation8 + $0x4] sm:$0xf]
    %v308 = vld [vmem:[#allocation8 + $0x8] sm:$0xf]
    %v309 = vld [vmem:[#allocation8 + $0xc] sm:$0xf]
    %v310 = vld [vmem:[#allocation8 + $0x10] sm:$0xf]
    %v311 = vld [vmem:[#allocation8 + $0x14] sm:$0xf]
    %v312 = vld [vmem:[#allocation8 + $0x18] sm:$0xf]
    %v313 = vld [vmem:[#allocation8 + $0x1c] sm:$0xf]
    %v314 = vld [vmem:[#allocation8 + $0x20] sm:$0xf]
    %v315 = vld [vmem:[#allocation8 + $0x24] sm:$0xf]
    %v316 = vld [vmem:[#allocation8 + $0x28] sm:$0xf]
    %v317 = vld [vmem:[#allocation8 + $0x2c] sm:$0xf]
    %v318 = vld [vmem:[#allocation8 + $0x30] sm:$0xf]
    %v319 = vld [vmem:[#allocation8 + $0x34] sm:$0xf]
    %v320 = vld [vmem:[#allocation8 + $0x38] sm:$0xf]
    %v321 = vld [vmem:[#allocation8 + $0x3c] sm:$0xf]
    %v338 = vunpack.c.l.b16 %v306
    %v339 = vunpack.c.l.b16 %v307
    %v340 = vunpack.c.l.b16 %v308
    %v341 = vunpack.c.l.b16 %v309
    %v342 = vunpack.c.l.b16 %v310
    %v343 = vunpack.c.l.b16 %v311
    %v344 = vunpack.c.l.b16 %v312
    %v345 = vunpack.c.l.b16 %v313
    %v346 = vunpack.c.l.b16 %v314
    %v347 = vunpack.c.l.b16 %v315
    %v348 = vunpack.c.l.b16 %v316
    %v349 = vunpack.c.l.b16 %v317
    %v350 = vunpack.c.l.b16 %v318
    %v351 = vunpack.c.l.b16 %v319
    %v352 = vunpack.c.l.b16 %v320
    %v353 = vunpack.c.l.b16 %v321
    %v354 = vpack.c.b16 %v339, %v338
    %v355 = vpack.c.b16 %v341, %v340
    %v356 = vpack.c.b16 %v343, %v342
    %v357 = vpack.c.b16 %v345, %v344
    %v358 = vpack.c.b16 %v347, %v346
    %v359 = vpack.c.b16 %v349, %v348
    %v360 = vpack.c.b16 %v351, %v350
    %v361 = vpack.c.b16 %v353, %v352
    %370 = vmatprep.subr.bf16.mxu0 0
    %371 = vmatpush1.bf16.msra.mxu0 %v354
    %372 = vmatprep.subr.bf16.mxu0 0
    %373 = vmatpush1.bf16.msra.mxu0 %v355
    %374 = vmatprep.subr.bf16.mxu0 0
    %375 = vmatpush1.bf16.msra.mxu0 %v356
    %376 = vmatprep.subr.bf16.mxu0 0
    %377 = vmatpush1.bf16.msra.mxu0 %v357
    %378 = vmatprep.subr.bf16.mxu0 0
    %379 = vmatpush1.bf16.msra.mxu0 %v358
    %380 = vmatprep.subr.bf16.mxu0 0
    %381 = vmatpush1.bf16.msra.mxu0 %v359
    %382 = vmatprep.subr.bf16.mxu0 0
    %383 = vmatpush1.bf16.msra.mxu0 %v360
    %384 = vmatprep.subr.bf16.mxu0 0
    %385 = vmatpush1.bf16.msra.mxu0 %v361
    %386 = vmatprep.subr.bf16.mxu0 0
    %387 = vmatpush1.bf16.msra.mxu0 0
    %388 = vmatprep.subr.bf16.mxu0 0
    %389 = vmatpush1.bf16.msra.mxu0 0
    %390 = vmatprep.subr.bf16.mxu0 0
    %391 = vmatpush1.bf16.msra.mxu0 0
    %392 = vmatprep.subr.bf16.mxu0 0
    %393 = vmatpush1.bf16.msra.mxu0 0
    %394 = vmatprep.subr.bf16.mxu0 0
    %395 = vmatpush1.bf16.msra.mxu0 0
    %396 = vmatprep.subr.bf16.mxu0 0
    %397 = vmatpush1.bf16.msra.mxu0 0
    %398 = vmatprep.subr.bf16.mxu0 0
    %399 = vmatpush1.bf16.msra.mxu0 0
    %400 = vmatprep.subr.bf16.mxu0 0
    %401 = vmatpush1.bf16.msra.mxu0 0
    %402 = vmatprep.mubr.bf16.mxu0 0
    %403 = vmatmul.mubr.bf16.gmra.mrb[0].mxu0 %v186
    %v404 = vpop.f32.mrb[0].mxu0
    %v405 = vadd.f32 0.0, %v404
    %v406 = vpop.f32.mrb[0].mxu0
    %v407 = vpop.f32.mrb[0].mxu0
    %v408 = vpop.f32.mrb[0].mxu0
    %409 = vdwg.mxu0
    %v414 = vunpack.c.l.b16 %v302
    %v415 = vunpack.c.l.b16 %v303
    %v416 = vunpack.c.l.b16 %v304
    %v417 = vunpack.c.l.b16 %v305
    %v418 = vpack.c.b16 %v415, %v414
    %v419 = vpack.c.b16 %v417, %v416
    %422 = vmatprep.subr.bf16.mxu0 0
    %423 = vmatpush1.bf16.msra.mxu0 %v418
    %424 = vmatprep.subr.bf16.mxu0 0
    %425 = vmatpush1.bf16.msra.mxu0 %v419
    %426 = vmatprep.subr.bf16.mxu0 0
    %427 = vmatpush1.bf16.msra.mxu0 0
    %428 = vmatprep.subr.bf16.mxu0 0
    %429 = vmatpush1.bf16.msra.mxu0 0
    %430 = vmatprep.subr.bf16.mxu0 0
    %431 = vmatpush1.bf16.msra.mxu0 0
    %432 = vmatprep.subr.bf16.mxu0 0
    %433 = vmatpush1.bf16.msra.mxu0 0
    %434 = vmatprep.subr.bf16.mxu0 0
    %435 = vmatpush1.bf16.msra.mxu0 0
    %436 = vmatprep.subr.bf16.mxu0 0
    %437 = vmatpush1.bf16.msra.mxu0 0
    %438 = vmatprep.subr.bf16.mxu0 0
    %439 = vmatpush1.bf16.msra.mxu0 0
    %440 = vmatprep.subr.bf16.mxu0 0
    %441 = vmatpush1.bf16.msra.mxu0 0
    %442 = vmatprep.subr.bf16.mxu0 0
    %443 = vmatpush1.bf16.msra.mxu0 0
    %444 = vmatprep.subr.bf16.mxu0 0
    %445 = vmatpush1.bf16.msra.mxu0 0
    %446 = vmatprep.subr.bf16.mxu0 0
    %447 = vmatpush1.bf16.msra.mxu0 0
    %448 = vmatprep.subr.bf16.mxu0 0
    %449 = vmatpush1.bf16.msra.mxu0 0
    %450 = vmatprep.subr.bf16.mxu0 0
    %451 = vmatpush1.bf16.msra.mxu0 0
    %452 = vmatprep.subr.bf16.mxu0 0
    %453 = vmatpush1.bf16.msra.mxu0 0
    %454 = vmatprep.mubr.bf16.mxu0 0
    %455 = vmatmul.mubr.bf16.gmra.mrb[0].mxu0 %v143
    %v456 = vpop.f32.mrb[0].mxu0
    %v457 = vadd.f32 %v405, %v456
    %v458 = vpop.f32.mrb[0].mxu0
    %v459 = vpop.f32.mrb[0].mxu0
    %v460 = vpop.f32.mrb[0].mxu0
    %461 = vdwg.mxu0
    %s462 = scalar_lea.vmem %s3, 1
    %v463 = vld [vmem:[%s462] sm:$0x1]
    %v465 = vlaneseq
    %v466 = vshrl.u32 %v465, 7
    %v467 = vsub.s32 0, %v466
    %v468 = vrot.slane %v463, %v467
    %v470 = vadd.f32 %v457, %v468
    %v471 = vmax.f32 %v470, 0.0
    %v472 = vpack.c.bf16 %v471, %v471
    %s473 = scalar_lea.vmem [#allocation11], 64
    %v474 = vld [vmem:[%s473] sm:$0xf]
    %v475 = vld [vmem:[%s473 + $0x4] sm:$0xf]
    %v476 = vld [vmem:[%s473 + $0x8] sm:$0xf]
    %v477 = vld [vmem:[%s473 + $0xc] sm:$0xf]
    %v478 = vld [vmem:[%s473 + $0x10] sm:$0xf]
    %v479 = vld [vmem:[%s473 + $0x14] sm:$0xf]
    %v480 = vld [vmem:[%s473 + $0x18] sm:$0xf]
    %v481 = vld [vmem:[%s473 + $0x1c] sm:$0xf]
    %v482 = vld [vmem:[%s473 + $0x20] sm:$0xf]
    %v483 = vld [vmem:[%s473 + $0x24] sm:$0xf]
    %v484 = vld [vmem:[%s473 + $0x28] sm:$0xf]
    %v485 = vld [vmem:[%s473 + $0x2c] sm:$0xf]
    %v486 = vld [vmem:[%s473 + $0x30] sm:$0xf]
    %v487 = vld [vmem:[%s473 + $0x34] sm:$0xf]
    %v488 = vld [vmem:[%s473 + $0x38] sm:$0xf]
    %v489 = vld [vmem:[%s473 + $0x3c] sm:$0xf]
    %s490 = scalar_lea.vmem %s7, 1
    %v491 = vld [vmem:[%s490] sm:$0x1]
    %v493 = vlaneseq
    %v494 = vshrl.u32 %v493, 7
    %v495 = vsub.s32 0, %v494
    %v496 = vrot.slane %v491, %v495
    %v514 = vunpack.c.l.b16 %v474
    %v515 = vunpack.c.l.b16 %v475
    %v516 = vunpack.c.l.b16 %v476
    %v517 = vunpack.c.l.b16 %v477
    %v518 = vunpack.c.l.b16 %v478
    %v519 = vunpack.c.l.b16 %v479
    %v520 = vunpack.c.l.b16 %v480
    %v521 = vunpack.c.l.b16 %v481
    %v522 = vunpack.c.l.b16 %v482
    %v523 = vunpack.c.l.b16 %v483
    %v524 = vunpack.c.l.b16 %v484
    %v525 = vunpack.c.l.b16 %v485
    %v526 = vunpack.c.l.b16 %v486
    %v527 = vunpack.c.l.b16 %v487
    %v528 = vunpack.c.l.b16 %v488
    %v529 = vunpack.c.l.b16 %v489
    %v530 = vpack.c.b16 %v515, %v514
    %v531 = vpack.c.b16 %v517, %v516
    %v532 = vpack.c.b16 %v519, %v518
    %v533 = vpack.c.b16 %v521, %v520
    %v534 = vpack.c.b16 %v523, %v522
    %v535 = vpack.c.b16 %v525, %v524
    %v536 = vpack.c.b16 %v527, %v526
    %v537 = vpack.c.b16 %v529, %v528
    %546 = vmatprep.subr.bf16.mxu0 0
    %547 = vmatpush1.bf16.msra.mxu0 %v530
    %548 = vmatprep.subr.bf16.mxu0 0
    %549 = vmatpush1.bf16.msra.mxu0 %v531
    %550 = vmatprep.subr.bf16.mxu0 0
    %551 = vmatpush1.bf16.msra.mxu0 %v532
    %552 = vmatprep.subr.bf16.mxu0 0
    %553 = vmatpush1.bf16.msra.mxu0 %v533
    %554 = vmatprep.subr.bf16.mxu0 0
    %555 = vmatpush1.bf16.msra.mxu0 %v534
    %556 = vmatprep.subr.bf16.mxu0 0
    %557 = vmatpush1.bf16.msra.mxu0 %v535
    %558 = vmatprep.subr.bf16.mxu0 0
    %559 = vmatpush1.bf16.msra.mxu0 %v536
    %560 = vmatprep.subr.bf16.mxu0 0
    %561 = vmatpush1.bf16.msra.mxu0 %v537
    %562 = vmatprep.subr.bf16.mxu0 0
    %563 = vmatpush1.bf16.msra.mxu0 0
    %564 = vmatprep.subr.bf16.mxu0 0
    %565 = vmatpush1.bf16.msra.mxu0 0
    %566 = vmatprep.subr.bf16.mxu0 0
    %567 = vmatpush1.bf16.msra.mxu0 0
    %568 = vmatprep.subr.bf16.mxu0 0
    %569 = vmatpush1.bf16.msra.mxu0 0
    %570 = vmatprep.subr.bf16.mxu0 0
    %571 = vmatpush1.bf16.msra.mxu0 0
    %572 = vmatprep.subr.bf16.mxu0 0
    %573 = vmatpush1.bf16.msra.mxu0 0
    %574 = vmatprep.subr.bf16.mxu0 0
    %575 = vmatpush1.bf16.msra.mxu0 0
    %576 = vmatprep.subr.bf16.mxu0 0
    %577 = vmatpush1.bf16.msra.mxu0 0
    %578 = vmatprep.mubr.bf16.mxu0 0
    %579 = vmatmul.mubr.bf16.gmra.mrb[0].mxu0 %v472
    %v580 = vpop.f32.mrb[0].mxu0
    %v581 = vadd.f32 %v496, %v580
    %v582 = vpop.f32.mrb[0].mxu0
    %v583 = vpop.f32.mrb[0].mxu0
    %v584 = vpop.f32.mrb[0].mxu0
    %585 = vdwg.mxu0
    %v586 = vmax.f32 %v581, 0.0
    %v587 = vpack.c.bf16 %v586, %v586
    %588 = vst [vmem:[#allocation2 + $0x4] sm:$0xf] %v587
    %s589 = scalar_lea.vmem [#allocation6], 32
    %v590 = vld [vmem:[%s589] sm:$0xf]
    %v591 = vld [vmem:[%s589 + $0x4] sm:$0xf]
    %v592 = vld [vmem:[%s589 + $0x8] sm:$0xf]
    %v593 = vld [vmem:[%s589 + $0xc] sm:$0xf]
    %s594 = scalar_lea.vmem [#allocation8], 64
    %v595 = vld [vmem:[%s594] sm:$0xf]
    %v596 = vld [vmem:[%s594 + $0x4] sm:$0xf]
    %v597 = vld [vmem:[%s594 + $0x8] sm:$0xf]
    %v598 = vld [vmem:[%s594 + $0xc] sm:$0xf]
    %v599 = vld [vmem:[%s594 + $0x10] sm:$0xf]
    %v600 = vld [vmem:[%s594 + $0x14] sm:$0xf]
    %v601 = vld [vmem:[%s594 + $0x18] sm:$0xf]
    %v602 = vld [vmem:[%s594 + $0x1c] sm:$0xf]
    %v603 = vld [vmem:[%s594 + $0x20] sm:$0xf]
    %v604 = vld [vmem:[%s594 + $0x24] sm:$0xf]
    %v605 = vld [vmem:[%s594 + $0x28] sm:$0xf]
    %v606 = vld [vmem:[%s594 + $0x2c] sm:$0xf]
    %v607 = vld [vmem:[%s594 + $0x30] sm:$0xf]
    %v608 = vld [vmem:[%s594 + $0x34] sm:$0xf]
    %v609 = vld [vmem:[%s594 + $0x38] sm:$0xf]
    %v610 = vld [vmem:[%s594 + $0x3c] sm:$0xf]
    %v627 = vunpack.c.l.b16 %v595
    %v628 = vunpack.c.l.b16 %v596
    %v629 = vunpack.c.l.b16 %v597
    %v630 = vunpack.c.l.b16 %v598
    %v631 = vunpack.c.l.b16 %v599
    %v632 = vunpack.c.l.b16 %v600
    %v633 = vunpack.c.l.b16 %v601
    %v634 = vunpack.c.l.b16 %v602
    %v635 = vunpack.c.l.b16 %v603
    %v636 = vunpack.c.l.b16 %v604
    %v637 = vunpack.c.l.b16 %v605
    %v638 = vunpack.c.l.b16 %v606
    %v639 = vunpack.c.l.b16 %v607
    %v640 = vunpack.c.l.b16 %v608
    %v641 = vunpack.c.l.b16 %v609
    %v642 = vunpack.c.l.b16 %v610
    %v643 = vpack.c.b16 %v628, %v627
    %v644 = vpack.c.b16 %v630, %v629
    %v645 = vpack.c.b16 %v632, %v631
    %v646 = vpack.c.b16 %v634, %v633
    %v647 = vpack.c.b16 %v636, %v635
    %v648 = vpack.c.b16 %v638, %v637
    %v649 = vpack.c.b16 %v640, %v639
    %v650 = vpack.c.b16 %v642, %v641
    %659 = vmatprep.subr.bf16.mxu0 0
    %660 = vmatpush1.bf16.msra.mxu0 %v643
    %661 = vmatprep.subr.bf16.mxu0 0
    %662 = vmatpush1.bf16.msra.mxu0 %v644
    %663 = vmatprep.subr.bf16.mxu0 0
    %664 = vmatpush1.bf16.msra.mxu0 %v645
    %665 = vmatprep.subr.bf16.mxu0 0
    %666 = vmatpush1.bf16.msra.mxu0 %v646
    %667 = vmatprep.subr.bf16.mxu0 0
    %668 = vmatpush1.bf16.msra.mxu0 %v647
    %669 = vmatprep.subr.bf16.mxu0 0
    %670 = vmatpush1.bf16.msra.mxu0 %v648
    %671 = vmatprep.subr.bf16.mxu0 0
    %672 = vmatpush1.bf16.msra.mxu0 %v649
    %673 = vmatprep.subr.bf16.mxu0 0
    %674 = vmatpush1.bf16.msra.mxu0 %v650
    %675 = vmatprep.subr.bf16.mxu0 0
    %676 = vmatpush1.bf16.msra.mxu0 0
    %677 = vmatprep.subr.bf16.mxu0 0
    %678 = vmatpush1.bf16.msra.mxu0 0
    %679 = vmatprep.subr.bf16.mxu0 0
    %680 = vmatpush1.bf16.msra.mxu0 0
    %681 = vmatprep.subr.bf16.mxu0 0
    %682 = vmatpush1.bf16.msra.mxu0 0
    %683 = vmatprep.subr.bf16.mxu0 0
    %684 = vmatpush1.bf16.msra.mxu0 0
    %685 = vmatprep.subr.bf16.mxu0 0
    %686 = vmatpush1.bf16.msra.mxu0 0
    %687 = vmatprep.subr.bf16.mxu0 0
    %688 = vmatpush1.bf16.msra.mxu0 0
    %689 = vmatprep.subr.bf16.mxu0 0
    %690 = vmatpush1.bf16.msra.mxu0 0
    %691 = vmatprep.mubr.bf16.mxu0 0
    %692 = vmatmul.mubr.bf16.gmra.mrb[0].mxu0 %v472
    %v693 = vpop.f32.mrb[0].mxu0
    %v694 = vadd.f32 0.0, %v693
    %v695 = vpop.f32.mrb[0].mxu0
    %v696 = vpop.f32.mrb[0].mxu0
    %v697 = vpop.f32.mrb[0].mxu0
    %698 = vdwg.mxu0
    %v703 = vunpack.c.l.b16 %v590
    %v704 = vunpack.c.l.b16 %v591
    %v705 = vunpack.c.l.b16 %v592
    %v706 = vunpack.c.l.b16 %v593
    %v707 = vpack.c.b16 %v704, %v703
    %v708 = vpack.c.b16 %v706, %v705
    %711 = vmatprep.subr.bf16.mxu0 0
    %712 = vmatpush1.bf16.msra.mxu0 %v707
    %713 = vmatprep.subr.bf16.mxu0 0
    %714 = vmatpush1.bf16.msra.mxu0 %v708
    %715 = vmatprep.subr.bf16.mxu0 0
    %716 = vmatpush1.bf16.msra.mxu0 0
    %717 = vmatprep.subr.bf16.mxu0 0
    %718 = vmatpush1.bf16.msra.mxu0 0
    %719 = vmatprep.subr.bf16.mxu0 0
    %720 = vmatpush1.bf16.msra.mxu0 0
    %721 = vmatprep.subr.bf16.mxu0 0
    %722 = vmatpush1.bf16.msra.mxu0 0
    %723 = vmatprep.subr.bf16.mxu0 0
    %724 = vmatpush1.bf16.msra.mxu0 0
    %725 = vmatprep.subr.bf16.mxu0 0
    %726 = vmatpush1.bf16.msra.mxu0 0
    %727 = vmatprep.subr.bf16.mxu0 0
    %728 = vmatpush1.bf16.msra.mxu0 0
    %729 = vmatprep.subr.bf16.mxu0 0
    %730 = vmatpush1.bf16.msra.mxu0 0
    %731 = vmatprep.subr.bf16.mxu0 0
    %732 = vmatpush1.bf16.msra.mxu0 0
    %733 = vmatprep.subr.bf16.mxu0 0
    %734 = vmatpush1.bf16.msra.mxu0 0
    %735 = vmatprep.subr.bf16.mxu0 0
    %736 = vmatpush1.bf16.msra.mxu0 0
    %737 = vmatprep.subr.bf16.mxu0 0
    %738 = vmatpush1.bf16.msra.mxu0 0
    %739 = vmatprep.subr.bf16.mxu0 0
    %740 = vmatpush1.bf16.msra.mxu0 0
    %741 = vmatprep.subr.bf16.mxu0 0
    %742 = vmatpush1.bf16.msra.mxu0 0
    %743 = vmatprep.mubr.bf16.mxu0 0
    %744 = vmatmul.mubr.bf16.gmra.mrb[0].mxu0 %v143
    %v745 = vpop.f32.mrb[0].mxu0
    %v746 = vadd.f32 %v694, %v745
    %v747 = vpop.f32.mrb[0].mxu0
    %v748 = vpop.f32.mrb[0].mxu0
    %v749 = vpop.f32.mrb[0].mxu0
    %750 = vdwg.mxu0
    %s751 = scalar_lea.vmem %s3, 2
    %v752 = vld [vmem:[%s751] sm:$0x1]
    %v754 = vlaneseq
    %v755 = vshrl.u32 %v754, 7
    %v756 = vsub.s32 0, %v755
    %v757 = vrot.slane %v752, %v756
    %v759 = vadd.f32 %v746, %v757
    %v760 = vmax.f32 %v759, 0.0
    %v761 = vpack.c.bf16 %v760, %v760
    %s762 = scalar_lea.vmem [#allocation11], 128
    %v763 = vld [vmem:[%s762] sm:$0xf]
    %v764 = vld [vmem:[%s762 + $0x4] sm:$0xf]
    %v765 = vld [vmem:[%s762 + $0x8] sm:$0xf]
    %v766 = vld [vmem:[%s762 + $0xc] sm:$0xf]
    %v767 = vld [vmem:[%s762 + $0x10] sm:$0xf]
    %v768 = vld [vmem:[%s762 + $0x14] sm:$0xf]
    %v769 = vld [vmem:[%s762 + $0x18] sm:$0xf]
    %v770 = vld [vmem:[%s762 + $0x1c] sm:$0xf]
    %v771 = vld [vmem:[%s762 + $0x20] sm:$0xf]
    %v772 = vld [vmem:[%s762 + $0x24] sm:$0xf]
    %v773 = vld [vmem:[%s762 + $0x28] sm:$0xf]
    %v774 = vld [vmem:[%s762 + $0x2c] sm:$0xf]
    %v775 = vld [vmem:[%s762 + $0x30] sm:$0xf]
    %v776 = vld [vmem:[%s762 + $0x34] sm:$0xf]
    %v777 = vld [vmem:[%s762 + $0x38] sm:$0xf]
    %v778 = vld [vmem:[%s762 + $0x3c] sm:$0xf]
    %s779 = scalar_lea.vmem %s7, 2
    %v780 = vld [vmem:[%s779] sm:$0x1]
    %v782 = vlaneseq
    %v783 = vshrl.u32 %v782, 7
    %v784 = vsub.s32 0, %v783
    %v785 = vrot.slane %v780, %v784
    %v803 = vunpack.c.l.b16 %v763
    %v804 = vunpack.c.l.b16 %v764
    %v805 = vunpack.c.l.b16 %v765
    %v806 = vunpack.c.l.b16 %v766
    %v807 = vunpack.c.l.b16 %v767
    %v808 = vunpack.c.l.b16 %v768
    %v809 = vunpack.c.l.b16 %v769
    %v810 = vunpack.c.l.b16 %v770
    %v811 = vunpack.c.l.b16 %v771
    %v812 = vunpack.c.l.b16 %v772
    %v813 = vunpack.c.l.b16 %v773
    %v814 = vunpack.c.l.b16 %v774
    %v815 = vunpack.c.l.b16 %v775
    %v816 = vunpack.c.l.b16 %v776
    %v817 = vunpack.c.l.b16 %v777
    %v818 = vunpack.c.l.b16 %v778
    %v819 = vpack.c.b16 %v804, %v803
    %v820 = vpack.c.b16 %v806, %v805
    %v821 = vpack.c.b16 %v808, %v807
    %v822 = vpack.c.b16 %v810, %v809
    %v823 = vpack.c.b16 %v812, %v811
    %v824 = vpack.c.b16 %v814, %v813
    %v825 = vpack.c.b16 %v816, %v815
    %v826 = vpack.c.b16 %v818, %v817
    %835 = vmatprep.subr.bf16.mxu0 0
    %836 = vmatpush1.bf16.msra.mxu0 %v819
    %837 = vmatprep.subr.bf16.mxu0 0
    %838 = vmatpush1.bf16.msra.mxu0 %v820
    %839 = vmatprep.subr.bf16.mxu0 0
    %840 = vmatpush1.bf16.msra.mxu0 %v821
    %841 = vmatprep.subr.bf16.mxu0 0
    %842 = vmatpush1.bf16.msra.mxu0 %v822
    %843 = vmatprep.subr.bf16.mxu0 0
    %844 = vmatpush1.bf16.msra.mxu0 %v823
    %845 = vmatprep.subr.bf16.mxu0 0
    %846 = vmatpush1.bf16.msra.mxu0 %v824
    %847 = vmatprep.subr.bf16.mxu0 0
    %848 = vmatpush1.bf16.msra.mxu0 %v825
    %849 = vmatprep.subr.bf16.mxu0 0
    %850 = vmatpush1.bf16.msra.mxu0 %v826
    %851 = vmatprep.subr.bf16.mxu0 0
    %852 = vmatpush1.bf16.msra.mxu0 0
    %853 = vmatprep.subr.bf16.mxu0 0
    %854 = vmatpush1.bf16.msra.mxu0 0
    %855 = vmatprep.subr.bf16.mxu0 0
    %856 = vmatpush1.bf16.msra.mxu0 0
    %857 = vmatprep.subr.bf16.mxu0 0
    %858 = vmatpush1.bf16.msra.mxu0 0
    %859 = vmatprep.subr.bf16.mxu0 0
    %860 = vmatpush1.bf16.msra.mxu0 0
    %861 = vmatprep.subr.bf16.mxu0 0
    %862 = vmatpush1.bf16.msra.mxu0 0
    %863 = vmatprep.subr.bf16.mxu0 0
    %864 = vmatpush1.bf16.msra.mxu0 0
    %865 = vmatprep.subr.bf16.mxu0 0
    %866 = vmatpush1.bf16.msra.mxu0 0
    %867 = vmatprep.mubr.bf16.mxu0 0
    %868 = vmatmul.mubr.bf16.gmra.mrb[0].mxu0 %v761
    %v869 = vpop.f32.mrb[0].mxu0
    %v870 = vadd.f32 %v785, %v869
    %v871 = vpop.f32.mrb[0].mxu0
    %v872 = vpop.f32.mrb[0].mxu0
    %v873 = vpop.f32.mrb[0].mxu0
    %874 = vdwg.mxu0
    %v875 = vmax.f32 %v870, 0.0
    %v876 = vpack.c.bf16 %v875, %v875
    %877 = vst [vmem:[#allocation2 + $0x8] sm:$0xf] %v876
    %v878 = vld [vmem:[#allocation9] sm:$0xf]
    %v879 = vld [vmem:[#allocation9 + $0x4] sm:$0xf]
    %v880 = vld [vmem:[#allocation9 + $0x8] sm:$0xf]
    %v881 = vld [vmem:[#allocation9 + $0xc] sm:$0xf]
    %v882 = vld [vmem:[#allocation9 + $0x10] sm:$0xf]
    %v883 = vld [vmem:[#allocation9 + $0x14] sm:$0xf]
    %v884 = vld [vmem:[#allocation9 + $0x18] sm:$0xf]
    %v885 = vld [vmem:[#allocation9 + $0x1c] sm:$0xf]
    %v886 = vld [vmem:[#allocation9 + $0x20] sm:$0xf]
    %v887 = vld [vmem:[#allocation9 + $0x24] sm:$0xf]
    %v888 = vld [vmem:[#allocation9 + $0x28] sm:$0xf]
    %v889 = vld [vmem:[#allocation9 + $0x2c] sm:$0xf]
    %v890 = vld [vmem:[#allocation9 + $0x30] sm:$0xf]
    %v891 = vld [vmem:[#allocation9 + $0x34] sm:$0xf]
    %v892 = vld [vmem:[#allocation9 + $0x38] sm:$0xf]
    %v893 = vld [vmem:[#allocation9 + $0x3c] sm:$0xf]
    %v894 = vld [vmem:[%s5] sm:$0x1]
    %v896 = vlaneseq
    %v897 = vshrl.u32 %v896, 7
    %v898 = vsub.s32 0, %v897
    %v899 = vrot.slane %v894, %v898
    %v917 = vunpack.c.l.b16 %v878
    %v918 = vunpack.c.l.b16 %v879
    %v919 = vunpack.c.l.b16 %v880
    %v920 = vunpack.c.l.b16 %v881
    %v921 = vunpack.c.l.b16 %v882
    %v922 = vunpack.c.l.b16 %v883
    %v923 = vunpack.c.l.b16 %v884
    %v924 = vunpack.c.l.b16 %v885
    %v925 = vunpack.c.l.b16 %v886
    %v926 = vunpack.c.l.b16 %v887
    %v927 = vunpack.c.l.b16 %v888
    %v928 = vunpack.c.l.b16 %v889
    %v929 = vunpack.c.l.b16 %v890
    %v930 = vunpack.c.l.b16 %v891
    %v931 = vunpack.c.l.b16 %v892
    %v932 = vunpack.c.l.b16 %v893
    %v933 = vpack.c.b16 %v918, %v917
    %v934 = vpack.c.b16 %v920, %v919
    %v935 = vpack.c.b16 %v922, %v921
    %v936 = vpack.c.b16 %v924, %v923
    %v937 = vpack.c.b16 %v926, %v925
    %v938 = vpack.c.b16 %v928, %v927
    %v939 = vpack.c.b16 %v930, %v929
    %v940 = vpack.c.b16 %v932, %v931
    %949 = vmatprep.subr.bf16.mxu0 0
    %950 = vmatpush1.bf16.msra.mxu0 %v933
    %951 = vmatprep.subr.bf16.mxu0 0
    %952 = vmatpush1.bf16.msra.mxu0 %v934
    %953 = vmatprep.subr.bf16.mxu0 0
    %954 = vmatpush1.bf16.msra.mxu0 %v935
    %955 = vmatprep.subr.bf16.mxu0 0
    %956 = vmatpush1.bf16.msra.mxu0 %v936
    %957 = vmatprep.subr.bf16.mxu0 0
    %958 = vmatpush1.bf16.msra.mxu0 %v937
    %959 = vmatprep.subr.bf16.mxu0 0
    %960 = vmatpush1.bf16.msra.mxu0 %v938
    %961 = vmatprep.subr.bf16.mxu0 0
    %962 = vmatpush1.bf16.msra.mxu0 %v939
    %963 = vmatprep.subr.bf16.mxu0 0
    %964 = vmatpush1.bf16.msra.mxu0 %v940
    %965 = vmatprep.subr.bf16.mxu0 0
    %966 = vmatpush1.bf16.msra.mxu0 0
    %967 = vmatprep.subr.bf16.mxu0 0
    %968 = vmatpush1.bf16.msra.mxu0 0
    %969 = vmatprep.subr.bf16.mxu0 0
    %970 = vmatpush1.bf16.msra.mxu0 0
    %971 = vmatprep.subr.bf16.mxu0 0
    %972 = vmatpush1.bf16.msra.mxu0 0
    %973 = vmatprep.subr.bf16.mxu0 0
    %974 = vmatpush1.bf16.msra.mxu0 0
    %975 = vmatprep.subr.bf16.mxu0 0
    %976 = vmatpush1.bf16.msra.mxu0 0
    %977 = vmatprep.subr.bf16.mxu0 0
    %978 = vmatpush1.bf16.msra.mxu0 0
    %979 = vmatprep.subr.bf16.mxu0 0
    %980 = vmatpush1.bf16.msra.mxu0 0
    %981 = vmatprep.mubr.bf16.mxu0 0
    %982 = vmatmul.mubr.bf16.gmra.mrb[0].mxu0 %v761
    %v983 = vpop.f32.mrb[0].mxu0
    %v984 = vadd.f32 %v899, %v983
    %v985 = vpop.f32.mrb[0].mxu0
    %v986 = vpop.f32.mrb[0].mxu0
    %v987 = vpop.f32.mrb[0].mxu0
    %988 = vdwg.mxu0
    %v989 = vsub.f32 0.0, %v984
    %v990 = vmul.f32 %v989, 1.442695
    %v991 = vpow.pop %v990
    %v992 = vadd.f32 %v991, 1.0
    %v993 = vrcp.pop %v992
    %v994 = vld [vmem:[#allocation2] sm:$0xff]
    %v995 = vld [vmem:[#allocation2 + $0x8] sm:$0xf]
    %v996 = vld [vmem:[#allocation12] sm:$0xf]
    %v997 = vld [vmem:[#allocation12 + $0x4] sm:$0xf]
    %v998 = vld [vmem:[#allocation12 + $0x8] sm:$0xf]
    %v999 = vld [vmem:[#allocation12 + $0xc] sm:$0xf]
    %v1000 = vld [vmem:[#allocation12 + $0x10] sm:$0xf]
    %v1001 = vld [vmem:[#allocation12 + $0x14] sm:$0xf]
    %v1002 = vld [vmem:[#allocation12 + $0x18] sm:$0xf]
    %v1003 = vld [vmem:[#allocation12 + $0x1c] sm:$0xf]
    %v1004 = vld [vmem:[#allocation12 + $0x20] sm:$0xf]
    %v1005 = vld [vmem:[#allocation12 + $0x24] sm:$0xf]
    %v1006 = vld [vmem:[#allocation12 + $0x28] sm:$0xf]
    %v1007 = vld [vmem:[#allocation12 + $0x2c] sm:$0xf]
    %v1008 = vld [vmem:[#allocation12 + $0x30] sm:$0xf]
    %v1009 = vld [vmem:[#allocation12 + $0x34] sm:$0xf]
    %v1010 = vld [vmem:[#allocation12 + $0x38] sm:$0xf]
    %v1011 = vld [vmem:[#allocation12 + $0x3c] sm:$0xf]
    %v1012 = vld [vmem:[#allocation12 + $0x40] sm:$0xf]
    %v1013 = vld [vmem:[#allocation12 + $0x44] sm:$0xf]
    %v1014 = vld [vmem:[#allocation12 + $0x48] sm:$0xf]
    %v1015 = vld [vmem:[#allocation12 + $0x4c] sm:$0xf]
    %v1016 = vld [vmem:[#allocation12 + $0x50] sm:$0xf]
    %v1017 = vld [vmem:[#allocation12 + $0x54] sm:$0xf]
    %v1018 = vld [vmem:[#allocation12 + $0x58] sm:$0xf]
    %v1019 = vld [vmem:[#allocation12 + $0x5c] sm:$0xf]
    %v1020 = vld [vmem:[#allocation12 + $0x60] sm:$0xf]
    %v1021 = vld [vmem:[#allocation12 + $0x64] sm:$0xf]
    %v1022 = vld [vmem:[#allocation12 + $0x68] sm:$0xf]
    %v1023 = vld [vmem:[#allocation12 + $0x6c] sm:$0xf]
    %v1024 = vld [vmem:[#allocation12 + $0x70] sm:$0xf]
    %v1025 = vld [vmem:[#allocation12 + $0x74] sm:$0xf]
    %v1026 = vld [vmem:[#allocation12 + $0x78] sm:$0xf]
    %v1027 = vld [vmem:[#allocation12 + $0x7c] sm:$0xf]
    %v1028 = vld [vmem:[#allocation12 + $0x80] sm:$0xf]
    %v1029 = vld [vmem:[#allocation12 + $0x84] sm:$0xf]
    %v1030 = vld [vmem:[#allocation12 + $0x88] sm:$0xf]
    %v1031 = vld [vmem:[#allocation12 + $0x8c] sm:$0xf]
    %v1032 = vld [vmem:[#allocation12 + $0x90] sm:$0xf]
    %v1033 = vld [vmem:[#allocation12 + $0x94] sm:$0xf]
    %v1034 = vld [vmem:[#allocation12 + $0x98] sm:$0xf]
    %v1035 = vld [vmem:[#allocation12 + $0x9c] sm:$0xf]
    %v1036 = vld [vmem:[#allocation12 + $0xa0] sm:$0xf]
    %v1037 = vld [vmem:[#allocation12 + $0xa4] sm:$0xf]
    %v1038 = vld [vmem:[#allocation12 + $0xa8] sm:$0xf]
    %v1039 = vld [vmem:[#allocation12 + $0xac] sm:$0xf]
    %v1040 = vld [vmem:[#allocation12 + $0xb0] sm:$0xf]
    %v1041 = vld [vmem:[#allocation12 + $0xb4] sm:$0xf]
    %v1042 = vld [vmem:[#allocation12 + $0xb8] sm:$0xf]
    %v1043 = vld [vmem:[#allocation12 + $0xbc] sm:$0xf]
    %v1044 = vld [vmem:[%s9] sm:$0x1]
    %v1046 = vlaneseq
    %v1047 = vshrl.u32 %v1046, 7
    %v1048 = vsub.s32 0, %v1047
    %v1049 = vrot.slane %v1044, %v1048
    %v1053 = vunpack.c.l.b16 %v994
    %v1054 = vunpack.c.h.b16 %v994
    %v1055 = vunpack.c.l.b16 %v995
    %v1056 = vpack.c.b16 %v1053, %v1053
    %v1057 = vpack.c.b16 %v1054, %v1054
    %v1058 = vpack.c.b16 %v1055, %v1055
    %v1110 = vunpack.c.l.b16 %v996
    %v1111 = vunpack.c.l.b16 %v997
    %v1112 = vunpack.c.l.b16 %v998
    %v1113 = vunpack.c.l.b16 %v999
    %v1114 = vunpack.c.l.b16 %v1000
    %v1115 = vunpack.c.l.b16 %v1001
    %v1116 = vunpack.c.l.b16 %v1002
    %v1117 = vunpack.c.l.b16 %v1003
    %v1118 = vunpack.c.l.b16 %v1004
    %v1119 = vunpack.c.l.b16 %v1005
    %v1120 = vunpack.c.l.b16 %v1006
    %v1121 = vunpack.c.l.b16 %v1007
    %v1122 = vunpack.c.l.b16 %v1008
    %v1123 = vunpack.c.l.b16 %v1009
    %v1124 = vunpack.c.l.b16 %v1010
    %v1125 = vunpack.c.l.b16 %v1011
    %v1126 = vunpack.c.l.b16 %v1012
    %v1127 = vunpack.c.l.b16 %v1013
    %v1128 = vunpack.c.l.b16 %v1014
    %v1129 = vunpack.c.l.b16 %v1015
    %v1130 = vunpack.c.l.b16 %v1016
    %v1131 = vunpack.c.l.b16 %v1017
    %v1132 = vunpack.c.l.b16 %v1018
    %v1133 = vunpack.c.l.b16 %v1019
    %v1134 = vunpack.c.l.b16 %v1020
    %v1135 = vunpack.c.l.b16 %v1021
    %v1136 = vunpack.c.l.b16 %v1022
    %v1137 = vunpack.c.l.b16 %v1023
    %v1138 = vunpack.c.l.b16 %v1024
    %v1139 = vunpack.c.l.b16 %v1025
    %v1140 = vunpack.c.l.b16 %v1026
    %v1141 = vunpack.c.l.b16 %v1027
    %v1142 = vunpack.c.l.b16 %v1028
    %v1143 = vunpack.c.l.b16 %v1029
    %v1144 = vunpack.c.l.b16 %v1030
    %v1145 = vunpack.c.l.b16 %v1031
    %v1146 = vunpack.c.l.b16 %v1032
    %v1147 = vunpack.c.l.b16 %v1033
    %v1148 = vunpack.c.l.b16 %v1034
    %v1149 = vunpack.c.l.b16 %v1035
    %v1150 = vunpack.c.l.b16 %v1036
    %v1151 = vunpack.c.l.b16 %v1037
    %v1152 = vunpack.c.l.b16 %v1038
    %v1153 = vunpack.c.l.b16 %v1039
    %v1154 = vunpack.c.l.b16 %v1040
    %v1155 = vunpack.c.l.b16 %v1041
    %v1156 = vunpack.c.l.b16 %v1042
    %v1157 = vunpack.c.l.b16 %v1043
    %v1158 = vpack.c.b16 %v1111, %v1110
    %v1159 = vpack.c.b16 %v1113, %v1112
    %v1160 = vpack.c.b16 %v1115, %v1114
    %v1161 = vpack.c.b16 %v1117, %v1116
    %v1162 = vpack.c.b16 %v1119, %v1118
    %v1163 = vpack.c.b16 %v1121, %v1120
    %v1164 = vpack.c.b16 %v1123, %v1122
    %v1165 = vpack.c.b16 %v1125, %v1124
    %v1166 = vpack.c.b16 %v1127, %v1126
    %v1167 = vpack.c.b16 %v1129, %v1128
    %v1168 = vpack.c.b16 %v1131, %v1130
    %v1169 = vpack.c.b16 %v1133, %v1132
    %v1170 = vpack.c.b16 %v1135, %v1134
    %v1171 = vpack.c.b16 %v1137, %v1136
    %v1172 = vpack.c.b16 %v1139, %v1138
    %v1173 = vpack.c.b16 %v1141, %v1140
    %v1174 = vpack.c.b16 %v1143, %v1142
    %v1175 = vpack.c.b16 %v1145, %v1144
    %v1176 = vpack.c.b16 %v1147, %v1146
    %v1177 = vpack.c.b16 %v1149, %v1148
    %v1178 = vpack.c.b16 %v1151, %v1150
    %v1179 = vpack.c.b16 %v1153, %v1152
    %v1180 = vpack.c.b16 %v1155, %v1154
    %v1181 = vpack.c.b16 %v1157, %v1156
    %1206 = vmatprep.subr.bf16.mxu0 0
    %1207 = vmatpush1.bf16.msra.mxu0 %v1158
    %1208 = vmatprep.subr.bf16.mxu0 0
    %1209 = vmatpush1.bf16.msra.mxu0 %v1159
    %1210 = vmatprep.subr.bf16.mxu0 0
    %1211 = vmatpush1.bf16.msra.mxu0 %v1160
    %1212 = vmatprep.subr.bf16.mxu0 0
    %1213 = vmatpush1.bf16.msra.mxu0 %v1161
    %1214 = vmatprep.subr.bf16.mxu0 0
    %1215 = vmatpush1.bf16.msra.mxu0 %v1162
    %1216 = vmatprep.subr.bf16.mxu0 0
    %1217 = vmatpush1.bf16.msra.mxu0 %v1163
    %1218 = vmatprep.subr.bf16.mxu0 0
    %1219 = vmatpush1.bf16.msra.mxu0 %v1164
    %1220 = vmatprep.subr.bf16.mxu0 0
    %1221 = vmatpush1.bf16.msra.mxu0 %v1165
    %1222 = vmatprep.subr.bf16.mxu0 0
    %1223 = vmatpush1.bf16.msra.mxu0 %v1166
    %1224 = vmatprep.subr.bf16.mxu0 0
    %1225 = vmatpush1.bf16.msra.mxu0 %v1167
    %1226 = vmatprep.subr.bf16.mxu0 0
    %1227 = vmatpush1.bf16.msra.mxu0 %v1168
    %1228 = vmatprep.subr.bf16.mxu0 0
    %1229 = vmatpush1.bf16.msra.mxu0 %v1169
    %1230 = vmatprep.subr.bf16.mxu0 0
    %1231 = vmatpush1.bf16.msra.mxu0 %v1170
    %1232 = vmatprep.subr.bf16.mxu0 0
    %1233 = vmatpush1.bf16.msra.mxu0 %v1171
    %1234 = vmatprep.subr.bf16.mxu0 0
    %1235 = vmatpush1.bf16.msra.mxu0 %v1172
    %1236 = vmatprep.subr.bf16.mxu0 0
    %1237 = vmatpush1.bf16.msra.mxu0 %v1173
    %1238 = vmatprep.mubr.bf16.mxu0 %v1057
    %1239 = vmatmul.mubr.bf16.gmra.mrb[0].mxu0 %v1056
    %v1240 = vpop.f32.mrb[0].mxu0
    %v1241 = vadd.f32 %v1049, %v1240
    %v1242 = vpop.f32.mrb[0].mxu0
    %v1243 = vpop.f32.mrb[0].mxu0
    %v1244 = vpop.f32.mrb[0].mxu0
    %1245 = vdwg.mxu0
    %1246 = vmatprep.subr.bf16.mxu0 0
    %1247 = vmatpush1.bf16.msra.mxu0 %v1174
    %1248 = vmatprep.subr.bf16.mxu0 0
    %1249 = vmatpush1.bf16.msra.mxu0 %v1175
    %1250 = vmatprep.subr.bf16.mxu0 0
    %1251 = vmatpush1.bf16.msra.mxu0 %v1176
    %1252 = vmatprep.subr.bf16.mxu0 0
    %1253 = vmatpush1.bf16.msra.mxu0 %v1177
    %1254 = vmatprep.subr.bf16.mxu0 0
    %1255 = vmatpush1.bf16.msra.mxu0 %v1178
    %1256 = vmatprep.subr.bf16.mxu0 0
    %1257 = vmatpush1.bf16.msra.mxu0 %v1179
    %1258 = vmatprep.subr.bf16.mxu0 0
    %1259 = vmatpush1.bf16.msra.mxu0 %v1180
    %1260 = vmatprep.subr.bf16.mxu0 0
    %1261 = vmatpush1.bf16.msra.mxu0 %v1181
    %1262 = vmatprep.subr.bf16.mxu0 0
    %1263 = vmatpush1.bf16.msra.mxu0 0
    %1264 = vmatprep.subr.bf16.mxu0 0
    %1265 = vmatpush1.bf16.msra.mxu0 0
    %1266 = vmatprep.subr.bf16.mxu0 0
    %1267 = vmatpush1.bf16.msra.mxu0 0
    %1268 = vmatprep.subr.bf16.mxu0 0
    %1269 = vmatpush1.bf16.msra.mxu0 0
    %1270 = vmatprep.subr.bf16.mxu0 0
    %1271 = vmatpush1.bf16.msra.mxu0 0
    %1272 = vmatprep.subr.bf16.mxu0 0
    %1273 = vmatpush1.bf16.msra.mxu0 0
    %1274 = vmatprep.subr.bf16.mxu0 0
    %1275 = vmatpush1.bf16.msra.mxu0 0
    %1276 = vmatprep.subr.bf16.mxu0 0
    %1277 = vmatpush1.bf16.msra.mxu0 0
    %1278 = vmatprep.mubr.bf16.mxu0 0
    %1279 = vmatmul.mubr.bf16.gmra.mrb[0].mxu0 %v1058
    %v1280 = vpop.f32.mrb[0].mxu0
    %v1281 = vadd.f32 %v1241, %v1280
    %v1282 = vpop.f32.mrb[0].mxu0
    %v1283 = vpop.f32.mrb[0].mxu0
    %v1284 = vpop.f32.mrb[0].mxu0
    %1285 = vdwg.mxu0
    %v1286 = vsub.f32 0.0, %v1281
    %v1287 = vmul.f32 %v1286, 1.442695
    %v1288 = vpow.pop %v1287
    %v1289 = vadd.f32 %v1288, 1.0
    %v1290 = vrcp.pop %v1289
    %v1291 = vmul.f32 %v993, 0.5
    %v1292 = vmul.f32 %v1290, 0.5
    %v1293 = vadd.f32 %v1291, %v1292
    %1294 = vst [vmem:[#allocation14] sm:$0xff] %v1293
    // Predicated region
    $region66: #{tpu_custom_call.1} parent=1 // pred_check
      _
    $region67: #{tpu_custom_call.1} parent=1 // pred_check_branch
      %1296 = sbr.rel (0) target = $region69
    $region68: #{tpu_custom_call.1} parent=1 // pred_region
      %s1298 = ssub.s32 128, 128
      %1299 = vsyncadd [#allocation5], %s1298
      %s1301 = sshll.u32 [#allocation14], 4
      %s1302 = int_to_ptr.vmem [resolvable:$true] %s1301
      %1304 = dma.vmem_to_hbm [thread:$0]  %s1302, 128, %s10, [#allocation5]
    $region69: #{tpu_custom_call.1} parent=1 // pred_fallthru
      _
    // Predicated region
    $region70: #{tpu_custom_call.1} parent=1 // pred_check
      _
    $region71: #{tpu_custom_call.1} parent=1 // pred_check_branch
      %1306 = sbr.rel (0) target = $region73
    $region72: #{tpu_custom_call.1} parent=1 // pred_region
      %1307 = dma.done [#allocation5], 128
    $region73: #{tpu_custom_call.1} parent=1 // pred_fallthru
      _
    %1308 = vsyncpa [#allocation4], 1
    %1309 = vsyncpa [#allocation7], 1
    %1310 = vsyncpa [#allocation10], 1
    %1311 = vsyncpa [#allocation13], 1
    %1312 = vsyncpa [#allocation5], 1

</llo_original>
